<compile_context>
chip_gen: v7x
topology: tpu7x:2x2x1
jax: 0.10.0
libtpu: 0.0.40
codegen_flags: <defaults>
</compile_context>

<pallas_src>
import jax
import jax.numpy as jnp
from jax import lax
from jax.experimental import pallas as pl
from jax.experimental.pallas import tpu as pltpu

NEG_INF = -1e30


def _round_up(n, m):
    return ((n + m - 1) // m) * m


def _vmem_limit_bytes():
    """Raise the scoped-VMEM cap toward the physical budget, with headroom."""
    try:
        cap = pltpu.get_tpu_info().vmem_capacity_bytes
        return int(cap * 3 // 4)          # ~96 MiB on v5e/v6e, ~48 MiB on v7x
    except Exception:
        return 48 * 1024 * 1024           # conservative, still > default limit


# ----------------------------------------------------------------------------
# GRU time-block kernel (optionally fused with Linear + log_softmax).
#
# Per grid step (one tt-long time block, one batch block):
#   1. Input-side gates for the whole block: one (tt*bb, D) @ (D, 3H) MXU dot
#      (bf16 operands, f32 accumulate), staged into a VMEM scratch.
#   2. Unrolled fori_loop over the tt timesteps: (bb, H) @ (H, 3H) recurrent
#      dot + gate math in f32; hidden state carried as the loop value and
#      persisted across grid steps in a VMEM scratch.
#   3. Decoder variant: (bb, H) @ (H, V) projection + log_softmax per step,
#      fused so hidden states never round-trip HBM.
# ----------------------------------------------------------------------------
def _make_gru_kernel(*, tt, bb, Hp, t_real, t_padded, compute_dtype, project):
    H = Hp
    mask_time = (t_padded != t_real)   # static: padded trailing timesteps exist

    def kernel(*refs):
        if project:
            (x_ref, h0_ref, wi_ref, bi_ref, wh_ref, bh_ref, ow_ref, ob_ref,
             out_ref, gi_scr, h_scr) = refs
        else:
            (x_ref, h0_ref, wi_ref, bi_ref, wh_ref, bh_ref,
             out_ref, hlast_ref, gi_scr, h_scr) = refs

        ti = pl.program_id(1)                        # time-block index

        @pl.when(ti == 0)
        def _():
            h_scr[...] = h0_ref[...]

        # --- hoisted input-side gates for the whole time block ---------------
        D = x_ref.shape[-1]
        x2d = x_ref[...].reshape(tt * bb, D).astype(compute_dtype)
        gi = jnp.dot(x2d, wi_ref[...], preferred_element_type=jnp.float32)
        gi_scr[...] = (gi + bi_ref[...]).reshape(tt, bb, 3 * H)

        h_block0 = h_scr[...]

        # --- sequential recurrence over the block (unrolled fori_loop) -------
        def step(t, h):
            gh = (jnp.dot(h.astype(compute_dtype), wh_ref[...],
                          preferred_element_type=jnp.float32) + bh_ref[...])
            g = gi_scr[t]
            r = jax.nn.sigmoid(g[:, 0:H] + gh[:, 0:H])
            z = jax.nn.sigmoid(g[:, H:2 * H] + gh[:, H:2 * H])
            n = jnp.tanh(g[:, 2 * H:3 * H] + r * gh[:, 2 * H:3 * H])
            h_new = (1.0 - z) * n + z * h
            if mask_time:
                # Padded trailing timesteps must not advance the hidden state.
                keep = (ti * tt + t < t_real).astype(jnp.float32)
                h_new = keep * h_new + (1.0 - keep) * h
            if project:
                logits = (jnp.dot(h_new.astype(compute_dtype), ow_ref[...],
                                  preferred_element_type=jnp.float32)
                          + ob_ref[...])
                out_ref[t] = jax.nn.log_softmax(logits, axis=-1).astype(out_ref.dtype)
            else:
                out_ref[t] = h_new.astype(out_ref.dtype)
            return h_new

        h_final = lax.fori_loop(0, tt, step, h_block0, unroll=True)
        h_scr[...] = h_final

        if not project:
            # Final hidden state: stored only once, on the last time block.
            @pl.when(ti == pl.num_programs(1) - 1)
            def _():
                hlast_ref[...] = h_scr[...]

    return kernel


def _gru_pallas(x, h0, wi, bi, wh, bh, ow=None, ob=None, *,
                t_real, tt=8, compute_dtype=jnp.bfloat16, out_dtype=jnp.float32):
    """Run the (optionally projecting) GRU kernel over padded inputs.

    x : (Tp, Bp, D)   padded, time-major inputs (bf16 or f32)
    Returns (out, hlast) for the plain GRU, or out for the projecting GRU.
    """
    Tp, Bp, D = x.shape
    Hp = h0.shape[-1]
    G3 = wi.shape[-1]
    project = ow is not None
    Vout = ow.shape[-1] if project else Hp

    # Batch-block axis: lets megacore (v7x) split the recurrence across cores.
    bb = Bp // 2 if (Bp >= 16 and (Bp // 2) % 8 == 0) else Bp
    nb = Bp // bb
    nt = Tp // tt

    kernel = _make_gru_kernel(tt=tt, bb=bb, Hp=Hp, t_real=t_real, t_padded=Tp,
                              compute_dtype=compute_dtype, project=project)

    in_specs = [
        pl.BlockSpec((tt, bb, D), lambda b, i: (i, b, 0)),   # inputs
        pl.BlockSpec((bb, Hp), lambda b, i: (b, 0)),         # h0
        pl.BlockSpec((D, G3), lambda b, i: (0, 0)),          # W_in  (r|z|n)
        pl.BlockSpec((1, G3), lambda b, i: (0, 0)),          # b_in
        pl.BlockSpec((Hp, G3), lambda b, i: (0, 0)),         # W_h   (r|z|n)
        pl.BlockSpec((1, G3), lambda b, i: (0, 0)),          # b_h
    ]
    args = [x, h0, wi, bi, wh, bh]

    if project:
        in_specs += [pl.BlockSpec((Hp, Vout), lambda b, i: (0, 0)),   # out_w
                     pl.BlockSpec((1, Vout), lambda b, i: (0, 0))]    # out_b
        args += [ow, ob]
        out_shape = jax.ShapeDtypeStruct((Tp, Bp, Vout), out_dtype)
        out_specs = pl.BlockSpec((tt, bb, Vout), lambda b, i: (i, b, 0))
    else:
        out_shape = (jax.ShapeDtypeStruct((Tp, Bp, Hp), out_dtype),
                     jax.ShapeDtypeStruct((Bp, Hp), jnp.float32))
        out_specs = (pl.BlockSpec((tt, bb, Hp), lambda b, i: (i, b, 0)),
                     pl.BlockSpec((bb, Hp), lambda b, i: (b, 0)))

    scratch = [pltpu.VMEM((tt, bb, G3), jnp.float32),   # hoisted input gates
               pltpu.VMEM((bb, Hp), jnp.float32)]       # hidden-state carry

    return pl.pallas_call(
        kernel,
        out_shape=out_shape,
        grid_spec=pltpu.PrefetchScalarGridSpec(
            num_scalar_prefetch=0,
            grid=(nb, nt),
            in_specs=in_specs,
            out_specs=out_specs,
            scratch_shapes=scratch),
        compiler_params=pltpu.CompilerParams(
            dimension_semantics=("parallel", "arbitrary"),
            vmem_limit_bytes=_vmem_limit_bytes()),
    )(*args)


# ----------------------------------------------------------------------------
# Parameter padding / gate concatenation (pure JAX, once per forward)
# ----------------------------------------------------------------------------
def _cat_pad_gates(w3, b3, rows_p, cols_p):
    """w3: (3, R, C), b3: (3, 1, C) -> (rows_p, 3*cols_p), (1, 3*cols_p).

    Each gate is zero-padded independently so the kernel's per-gate slices
    line up in padded units, and padded rows are zero so padded hidden/input
    dims never contaminate valid gate columns.
    """
    R, C = w3.shape[1], w3.shape[2]
    ws = [jnp.pad(w3[g], ((0, rows_p - R), (0, cols_p - C))) for g in range(3)]
    bs = [jnp.pad(b3[g], ((0, 0), (0, cols_p - C))) for g in range(3)]
    return jnp.concatenate(ws, axis=-1), jnp.concatenate(bs, axis=-1)


# ----------------------------------------------------------------------------
# Seq2Seq forward
# ----------------------------------------------------------------------------
def seq2seq_forward(x, params, *, compute_dtype=jnp.bfloat16, out_dtype=None, tt=8):
    T, B, D = x.shape
    H = params["enc_wh"].shape[-1]
    V = params["out_w"].shape[-1]
    if out_dtype is None:
        out_dtype = compute_dtype

    Bp = _round_up(B, 8)
    Dp = _round_up(D, 128)
    Hp = _round_up(H, 128)
    Vp = _round_up(V, 128)
    Tp = _round_up(T, tt)          # keep tt fixed; mask the padded tail in-kernel

    cdt = compute_dtype
    xp = jnp.pad(x, ((0, Tp - T), (0, Bp - B), (0, Dp - D))).astype(cdt)

    # Concatenate + pad parameters; matmul weights cast to compute dtype once
    # (halves weight DMA in the bf16 path); biases stay f32 (added to f32 acc).
    enc_wi, enc_bi = _cat_pad_gates(params["enc_wi"], params["enc_bi"], Dp, Hp)
    enc_wh, enc_bh = _cat_pad_gates(params["enc_wh"], params["enc_bh"], Hp, Hp)
    dec_wi, dec_bi = _cat_pad_gates(params["dec_wi"], params["dec_bi"], Hp, Hp)
    dec_wh, dec_bh = _cat_pad_gates(params["dec_wh"], params["dec_bh"], Hp, Hp)
    enc_wi, enc_wh = enc_wi.astype(cdt), enc_wh.astype(cdt)
    dec_wi, dec_wh = dec_wi.astype(cdt), dec_wh.astype(cdt)
    ow = jnp.pad(params["out_w"], ((0, Hp - H), (0, Vp - V))).astype(cdt)
    ob = jnp.pad(params["out_b"], ((0, 0), (0, Vp - V)), constant_values=NEG_INF)

    h0 = jnp.zeros((Bp, Hp), jnp.float32)

    # 1) Encoder GRU (input gates fused in-kernel; emits all states in the
    #    compute dtype + final hidden in f32).
    enc_out, enc_hidden = _gru_pallas(
        xp, h0, enc_wi, enc_bi, enc_wh, enc_bh,
        t_real=T, tt=tt, compute_dtype=cdt, out_dtype=cdt)

    # 2) Decoder GRU fused with Linear(H, V) + log_softmax, fed with encoder
    #    outputs and initialized with the encoder's final hidden state.
    logp = _gru_pallas(
        enc_out, enc_hidden, dec_wi, dec_bi, dec_wh, dec_bh, ow, ob,
        t_real=T, tt=tt, compute_dtype=cdt, out_dtype=out_dtype)

    # Slice the padding off.
    return logp[:T, :B, :V]


# ----------------------------------------------------------------------------
# Pure-JAX reference (lax.scan GRU) for correctness check.
# ----------------------------------------------------------------------------
def gru_ref(x, h0, wi, wh, bi, bh):
    def step(h, xt):
        gi_r = xt @ wi[0] + bi[0]
        gi_z = xt @ wi[1] + bi[1]
        gi_n = xt @ wi[2] + bi[2]
        gh_r = h @ wh[0] + bh[0]
        gh_z = h @ wh[1] + bh[1]
        gh_n = h @ wh[2] + bh[2]
        r = jax.nn.sigmoid(gi_r + gh_r)
        z = jax.nn.sigmoid(gi_z + gh_z)
        n = jnp.tanh(gi_n + r * gh_n)
        hn = (1.0 - z) * n + z * h
        return hn, hn
    _, ys = jax.lax.scan(step, h0, x)
    return ys


def seq2seq_ref(x, params):
    T, B, _ = x.shape
    H = params["enc_wh"].shape[-1]
    h0 = jnp.zeros((B, H), jnp.float32)
    enc_out = gru_ref(x, h0, params["enc_wi"], params["enc_wh"],
                      params["enc_bi"], params["enc_bh"])
    dec_out = gru_ref(enc_out, enc_out[-1], params["dec_wi"], params["dec_wh"],
                      params["dec_bi"], params["dec_bh"])
    logits = dec_out.reshape(T * B, H) @ params["out_w"] + params["out_b"]
    return jax.nn.log_softmax(logits, axis=-1).reshape(T, B, -1)


# ----------------------------------------------------------------------------
# Deterministic parameter init (PyTorch-style uniform(-1/sqrt(H), 1/sqrt(H))).
# ----------------------------------------------------------------------------
def init_params(key, D, H, V):
    k = 1.0 / jnp.sqrt(jnp.float32(H))
    keys = jax.random.split(key, 10)

    def u(kk, shape):
        return jax.random.uniform(kk, shape, jnp.float32, -k, k)

    return {
        "enc_wi": u(keys[0], (3, D, H)),
        "enc_wh": u(keys[1], (3, H, H)),
        "enc_bi": u(keys[2], (3, 1, H)),
        "enc_bh": u(keys[3], (3, 1, H)),
        "dec_wi": u(keys[4], (3, H, H)),
        "dec_wh": u(keys[5], (3, H, H)),
        "dec_bi": u(keys[6], (3, 1, H)),
        "dec_bh": u(keys[7], (3, 1, H)),
        "out_w":  u(keys[8], (H, V)),
        "out_b":  u(keys[9], (1, V)),
    }


if __name__ == "__main__":
    # T=12 exercises both the cross-block hidden carry (T > tt) and the
    # padded-T masking path (12 % 8 != 0 -> Tp = 16).
    T, B, D, H, V = 12, 2, 16, 32, 16
    key = jax.random.PRNGKey(0)
    k_x, k_p = jax.random.split(key)

    x = jax.random.normal(k_x, (T, B, D), jnp.float32)   # (T, B, D) time-major
    params = init_params(k_p, D, H, V)

    ref = seq2seq_ref(x, params)

    # Exact-math path (f32 MXU operands) -- tight correctness gate.
    out_f32 = jax.block_until_ready(
        seq2seq_forward(x, params, compute_dtype=jnp.float32,
                        out_dtype=jnp.float32))
    assert out_f32.shape == (T, B, V)
    err32 = jnp.max(jnp.abs(out_f32 - ref))
    assert jnp.allclose(out_f32, ref, atol=1e-4, rtol=1e-4), \
        f"f32 path max abs err {err32}"

    # Production path: bf16 MXU operands, bf16 intermediate/output writeback.
    out_bf16 = jax.block_until_ready(
        seq2seq_forward(x, params, compute_dtype=jnp.bfloat16))
    assert out_bf16.shape == (T, B, V)
    err16 = jnp.max(jnp.abs(out_bf16.astype(jnp.float32) - ref))
    assert err16 < 1e-1, f"bf16 path max abs err {err16}"

    print("KERNEL_OK")
</pallas_src>

<mosaic_0001>
module attributes {stable_mosaic.version = 11 : i64} {
  func.func @kernel(%arg0: i32, %arg1: i32, %arg2: memref<8x8x128xf32, #tpu.memory_space<vmem>>, %arg3: memref<8x128xf32, #tpu.memory_space<vmem>>, %arg4: memref<128x384xf32, #tpu.memory_space<vmem>>, %arg5: memref<1x384xf32, #tpu.memory_space<vmem>>, %arg6: memref<128x384xf32, #tpu.memory_space<vmem>>, %arg7: memref<1x384xf32, #tpu.memory_space<vmem>>, %arg8: memref<8x8x128xf32, #tpu.memory_space<vmem>>, %arg9: memref<8x128xf32, #tpu.memory_space<vmem>>, %arg10: memref<8x8x384xf32, #tpu.memory_space<vmem>>, %arg11: memref<8x128xf32, #tpu.memory_space<vmem>>) attributes {dimension_semantics = [#tpu.dimension_semantics<parallel>, #tpu.dimension_semantics<arbitrary>], iteration_bounds = array<i64: 1, 2>, scalar_prefetch = 0 : i64, scratch_operands = 2 : i64, tpu.core_type = #tpu.core_type<tc>, window_params = [{transform_indices = @transform_0, window_bounds = array<i64: 8, 8, 128>}, {transform_indices = @transform_1, window_bounds = array<i64: 8, 128>}, {pipeline_mode = #tpu.pipeline_mode<synchronous>, transform_indices = @transform_2, window_bounds = array<i64: 128, 384>}, {pipeline_mode = #tpu.pipeline_mode<synchronous>, transform_indices = @transform_3, window_bounds = array<i64: 1, 384>}, {pipeline_mode = #tpu.pipeline_mode<synchronous>, transform_indices = @transform_4, window_bounds = array<i64: 128, 384>}, {pipeline_mode = #tpu.pipeline_mode<synchronous>, transform_indices = @transform_5, window_bounds = array<i64: 1, 384>}, {transform_indices = @transform_6, window_bounds = array<i64: 8, 8, 128>}, {transform_indices = @transform_7, window_bounds = array<i64: 8, 128>}]} {
    %c0_i32 = arith.constant 0 : i32
    %0 = arith.cmpi eq, %arg1, %c0_i32 : i32
    %1 = arith.extui %0 : i1 to i32
    %c0_i32_0 = arith.constant 0 : i32
    %2 = arith.cmpi ne, %1, %c0_i32_0 : i32
    scf.if %2 {
      %c0_136 = arith.constant 0 : index
      %c0_137 = arith.constant 0 : index
      %409 = vector.load %arg3[%c0_136, %c0_137] : memref<8x128xf32, #tpu.memory_space<vmem>>, vector<8x128xf32>
      %c0_138 = arith.constant 0 : index
      %c0_139 = arith.constant 0 : index
      %410 = vector.load %arg11[%c0_138, %c0_139] : memref<8x128xf32, #tpu.memory_space<vmem>>, vector<8x128xf32>
      tpu.vector_store %arg11[%c0_138, %c0_139], %409 {strides = array<i32>} : memref<8x128xf32, #tpu.memory_space<vmem>>, vector<8x128xf32>,
    } else {
    }
    %c0 = arith.constant 0 : index
    %c0_1 = arith.constant 0 : index
    %c0_2 = arith.constant 0 : index
    %3 = vector.load %arg2[%c0, %c0_1, %c0_2] : memref<8x8x128xf32, #tpu.memory_space<vmem>>, vector<8x8x128xf32>
    %4 = vector.shape_cast %3 : vector<8x8x128xf32> to vector<64x128xf32>
    %c0_3 = arith.constant 0 : index
    %c0_4 = arith.constant 0 : index
    %5 = vector.load %arg4[%c0_3, %c0_4] : memref<128x384xf32, #tpu.memory_space<vmem>>, vector<128x384xf32>
    %cst = arith.constant dense<0.000000e+00> : vector<64x384xf32>
    %6 = tpu.matmul %4, %5, %cst {dimension_numbers = #tpu.dot_dimension_numbers<[1], [0], [0], [1], [0, 0, 1, 1], [], []>} : vector<64x128xf32>, vector<128x384xf32>, vector<64x384xf32> -> vector<64x384xf32>
    %c0_5 = arith.constant 0 : index
    %c0_6 = arith.constant 0 : index
    %7 = vector.load %arg5[%c0_5, %c0_6] : memref<1x384xf32, #tpu.memory_space<vmem>>, vector<1x384xf32>
    %8 = vector.broadcast %7 : vector<1x384xf32> to vector<64x384xf32>
    %9 = arith.addf %6, %8 : vector<64x384xf32>
    %10 = vector.shape_cast %9 : vector<64x384xf32> to vector<8x8x384xf32>
    %c0_7 = arith.constant 0 : index
    %c0_8 = arith.constant 0 : index
    %c0_9 = arith.constant 0 : index
    %11 = vector.load %arg10[%c0_7, %c0_8, %c0_9] : memref<8x8x384xf32, #tpu.memory_space<vmem>>, vector<8x8x384xf32>
    tpu.vector_store %arg10[%c0_7, %c0_8, %c0_9], %10 {strides = array<i32>} : memref<8x8x384xf32, #tpu.memory_space<vmem>>, vector<8x8x384xf32>,
    %c0_10 = arith.constant 0 : index
    %c0_11 = arith.constant 0 : index
    %12 = vector.load %arg11[%c0_10, %c0_11] : memref<8x128xf32, #tpu.memory_space<vmem>>, vector<8x128xf32>
    %c0_i32_12 = arith.constant 0 : i32
    %c0_13 = arith.constant 0 : index
    %c0_14 = arith.constant 0 : index
    %13 = vector.load %arg6[%c0_13, %c0_14] : memref<128x384xf32, #tpu.memory_space<vmem>>, vector<128x384xf32>
    %cst_15 = arith.constant dense<0.000000e+00> : vector<8x384xf32>
    %14 = tpu.matmul %12, %13, %cst_15 {dimension_numbers = #tpu.dot_dimension_numbers<[1], [0], [0], [1], [0, 0, 1, 1], [], []>} : vector<8x128xf32>, vector<128x384xf32>, vector<8x384xf32> -> vector<8x384xf32>
    %c0_16 = arith.constant 0 : index
    %c0_17 = arith.constant 0 : index
    %15 = vector.load %arg7[%c0_16, %c0_17] : memref<1x384xf32, #tpu.memory_space<vmem>>, vector<1x384xf32>
    %16 = vector.broadcast %15 : vector<1x384xf32> to vector<8x384xf32>
    %17 = arith.addf %14, %16 : vector<8x384xf32>
    %18 = arith.index_cast %c0_i32_12 : i32 to index
    %c0_18 = arith.constant 0 : index
    %c0_19 = arith.constant 0 : index
    %19 = vector.load %arg10[%18, %c0_18, %c0_19] : memref<8x8x384xf32, #tpu.memory_space<vmem>>, vector<1x8x384xf32>
    %20 = vector.shape_cast %19 : vector<1x8x384xf32> to vector<8x384xf32>
    %21 = vector.extract_strided_slice %20 {offsets = [0, 0], sizes = [8, 128], strides = [1, 1]} : vector<8x384xf32> to vector<8x128xf32>
    %22 = vector.extract_strided_slice %17 {offsets = [0, 0], sizes = [8, 128], strides = [1, 1]} : vector<8x384xf32> to vector<8x128xf32>
    %23 = arith.addf %21, %22 : vector<8x128xf32>
    %24 = arith.negf %23 : vector<8x128xf32>
    %25 = math.exp %24 : vector<8x128xf32>
    %cst_20 = arith.constant 1.000000e+00 : f32
    %26 = vector.broadcast %cst_20 : f32 to vector<8x128xf32>
    %27 = arith.addf %26, %25 : vector<8x128xf32>
    %28 = arith.divf %26, %27 : vector<8x128xf32>
    %29 = vector.extract_strided_slice %20 {offsets = [0, 128], sizes = [8, 128], strides = [1, 1]} : vector<8x384xf32> to vector<8x128xf32>
    %30 = vector.extract_strided_slice %17 {offsets = [0, 128], sizes = [8, 128], strides = [1, 1]} : vector<8x384xf32> to vector<8x128xf32>
    %31 = arith.addf %29, %30 : vector<8x128xf32>
    %32 = arith.negf %31 : vector<8x128xf32>
    %33 = math.exp %32 : vector<8x128xf32>
    %cst_21 = arith.constant 1.000000e+00 : f32
    %34 = vector.broadcast %cst_21 : f32 to vector<8x128xf32>
    %35 = arith.addf %34, %33 : vector<8x128xf32>
    %36 = arith.divf %34, %35 : vector<8x128xf32>
    %37 = vector.extract_strided_slice %20 {offsets = [0, 256], sizes = [8, 128], strides = [1, 1]} : vector<8x384xf32> to vector<8x128xf32>
    %38 = vector.extract_strided_slice %17 {offsets = [0, 256], sizes = [8, 128], strides = [1, 1]} : vector<8x384xf32> to vector<8x128xf32>
    %39 = arith.mulf %28, %38 : vector<8x128xf32>
    %40 = arith.addf %37, %39 : vector<8x128xf32>
    %41 = math.tanh %40 : vector<8x128xf32>
    %cst_22 = arith.constant 1.000000e+00 : f32
    %42 = vector.broadcast %cst_22 : f32 to vector<8x128xf32>
    %43 = arith.subf %42, %36 : vector<8x128xf32>
    %44 = arith.mulf %43, %41 : vector<8x128xf32>
    %45 = arith.mulf %36, %12 : vector<8x128xf32>
    %46 = arith.addf %44, %45 : vector<8x128xf32>
    %c8_i32 = arith.constant 8 : i32
    %47 = arith.muli %arg1, %c8_i32 : i32
    %48 = arith.addi %47, %c0_i32_12 : i32
    %c12_i32 = arith.constant 12 : i32
    %49 = arith.cmpi slt, %48, %c12_i32 : i32
    %50 = arith.extui %49 : i1 to i32
    %51 = arith.sitofp %50 : i32 to f32
    %52 = vector.broadcast %51 : f32 to vector<8x128xf32>
    %53 = arith.mulf %52, %46 : vector<8x128xf32>
    %cst_23 = arith.constant 1.000000e+00 : f32
    %54 = arith.subf %cst_23, %51 : f32
    %55 = vector.broadcast %54 : f32 to vector<8x128xf32>
    %56 = arith.mulf %55, %12 : vector<8x128xf32>
    %57 = arith.addf %53, %56 : vector<8x128xf32>
    %58 = arith.index_cast %c0_i32_12 : i32 to index
    %c0_24 = arith.constant 0 : index
    %c0_25 = arith.constant 0 : index
    %59 = vector.load %arg8[%58, %c0_24, %c0_25] : memref<8x8x128xf32, #tpu.memory_space<vmem>>, vector<1x8x128xf32>
    %60 = vector.shape_cast %59 : vector<1x8x128xf32> to vector<8x128xf32>
    %61 = vector.shape_cast %57 : vector<8x128xf32> to vector<1x8x128xf32>
    tpu.vector_store %arg8[%58, %c0_24, %c0_25], %61 {strides = array<i32>} : memref<8x8x128xf32, #tpu.memory_space<vmem>>, vector<1x8x128xf32>,
    %c1_i32 = arith.constant 1 : i32
    %c0_26 = arith.constant 0 : index
    %c0_27 = arith.constant 0 : index
    %62 = vector.load %arg6[%c0_26, %c0_27] : memref<128x384xf32, #tpu.memory_space<vmem>>, vector<128x384xf32>
    %cst_28 = arith.constant dense<0.000000e+00> : vector<8x384xf32>
    %63 = tpu.matmul %57, %62, %cst_28 {dimension_numbers = #tpu.dot_dimension_numbers<[1], [0], [0], [1], [0, 0, 1, 1], [], []>} : vector<8x128xf32>, vector<128x384xf32>, vector<8x384xf32> -> vector<8x384xf32>
    %c0_29 = arith.constant 0 : index
    %c0_30 = arith.constant 0 : index
    %64 = vector.load %arg7[%c0_29, %c0_30] : memref<1x384xf32, #tpu.memory_space<vmem>>, vector<1x384xf32>
    %65 = vector.broadcast %64 : vector<1x384xf32> to vector<8x384xf32>
    %66 = arith.addf %63, %65 : vector<8x384xf32>
    %67 = arith.index_cast %c1_i32 : i32 to index
    %c0_31 = arith.constant 0 : index
    %c0_32 = arith.constant 0 : index
    %68 = vector.load %arg10[%67, %c0_31, %c0_32] : memref<8x8x384xf32, #tpu.memory_space<vmem>>, vector<1x8x384xf32>
    %69 = vector.shape_cast %68 : vector<1x8x384xf32> to vector<8x384xf32>
    %70 = vector.extract_strided_slice %69 {offsets = [0, 0], sizes = [8, 128], strides = [1, 1]} : vector<8x384xf32> to vector<8x128xf32>
    %71 = vector.extract_strided_slice %66 {offsets = [0, 0], sizes = [8, 128], strides = [1, 1]} : vector<8x384xf32> to vector<8x128xf32>
    %72 = arith.addf %70, %71 : vector<8x128xf32>
    %73 = arith.negf %72 : vector<8x128xf32>
    %74 = math.exp %73 : vector<8x128xf32>
    %cst_33 = arith.constant 1.000000e+00 : f32
    %75 = vector.broadcast %cst_33 : f32 to vector<8x128xf32>
    %76 = arith.addf %75, %74 : vector<8x128xf32>
    %77 = arith.divf %75, %76 : vector<8x128xf32>
    %78 = vector.extract_strided_slice %69 {offsets = [0, 128], sizes = [8, 128], strides = [1, 1]} : vector<8x384xf32> to vector<8x128xf32>
    %79 = vector.extract_strided_slice %66 {offsets = [0, 128], sizes = [8, 128], strides = [1, 1]} : vector<8x384xf32> to vector<8x128xf32>
    %80 = arith.addf %78, %79 : vector<8x128xf32>
    %81 = arith.negf %80 : vector<8x128xf32>
    %82 = math.exp %81 : vector<8x128xf32>
    %cst_34 = arith.constant 1.000000e+00 : f32
    %83 = vector.broadcast %cst_34 : f32 to vector<8x128xf32>
    %84 = arith.addf %83, %82 : vector<8x128xf32>
    %85 = arith.divf %83, %84 : vector<8x128xf32>
    %86 = vector.extract_strided_slice %69 {offsets = [0, 256], sizes = [8, 128], strides = [1, 1]} : vector<8x384xf32> to vector<8x128xf32>
    %87 = vector.extract_strided_slice %66 {offsets = [0, 256], sizes = [8, 128], strides = [1, 1]} : vector<8x384xf32> to vector<8x128xf32>
    %88 = arith.mulf %77, %87 : vector<8x128xf32>
    %89 = arith.addf %86, %88 : vector<8x128xf32>
    %90 = math.tanh %89 : vector<8x128xf32>
    %cst_35 = arith.constant 1.000000e+00 : f32
    %91 = vector.broadcast %cst_35 : f32 to vector<8x128xf32>
    %92 = arith.subf %91, %85 : vector<8x128xf32>
    %93 = arith.mulf %92, %90 : vector<8x128xf32>
    %94 = arith.mulf %85, %57 : vector<8x128xf32>
    %95 = arith.addf %93, %94 : vector<8x128xf32>
    %c8_i32_36 = arith.constant 8 : i32
    %96 = arith.muli %arg1, %c8_i32_36 : i32
    %97 = arith.addi %96, %c1_i32 : i32
    %c12_i32_37 = arith.constant 12 : i32
    %98 = arith.cmpi slt, %97, %c12_i32_37 : i32
    %99 = arith.extui %98 : i1 to i32
    %100 = arith.sitofp %99 : i32 to f32
    %101 = vector.broadcast %100 : f32 to vector<8x128xf32>
    %102 = arith.mulf %101, %95 : vector<8x128xf32>
    %cst_38 = arith.constant 1.000000e+00 : f32
    %103 = arith.subf %cst_38, %100 : f32
    %104 = vector.broadcast %103 : f32 to vector<8x128xf32>
    %105 = arith.mulf %104, %57 : vector<8x128xf32>
    %106 = arith.addf %102, %105 : vector<8x128xf32>
    %107 = arith.index_cast %c1_i32 : i32 to index
    %c0_39 = arith.constant 0 : index
    %c0_40 = arith.constant 0 : index
    %108 = vector.load %arg8[%107, %c0_39, %c0_40] : memref<8x8x128xf32, #tpu.memory_space<vmem>>, vector<1x8x128xf32>
    %109 = vector.shape_cast %108 : vector<1x8x128xf32> to vector<8x128xf32>
    %110 = vector.shape_cast %106 : vector<8x128xf32> to vector<1x8x128xf32>
    tpu.vector_store %arg8[%107, %c0_39, %c0_40], %110 {strides = array<i32>} : memref<8x8x128xf32, #tpu.memory_space<vmem>>, vector<1x8x128xf32>,
    %c2_i32 = arith.constant 2 : i32
    %c0_41 = arith.constant 0 : index
    %c0_42 = arith.constant 0 : index
    %111 = vector.load %arg6[%c0_41, %c0_42] : memref<128x384xf32, #tpu.memory_space<vmem>>, vector<128x384xf32>
    %cst_43 = arith.constant dense<0.000000e+00> : vector<8x384xf32>
    %112 = tpu.matmul %106, %111, %cst_43 {dimension_numbers = #tpu.dot_dimension_numbers<[1], [0], [0], [1], [0, 0, 1, 1], [], []>} : vector<8x128xf32>, vector<128x384xf32>, vector<8x384xf32> -> vector<8x384xf32>
    %c0_44 = arith.constant 0 : index
    %c0_45 = arith.constant 0 : index
    %113 = vector.load %arg7[%c0_44, %c0_45] : memref<1x384xf32, #tpu.memory_space<vmem>>, vector<1x384xf32>
    %114 = vector.broadcast %113 : vector<1x384xf32> to vector<8x384xf32>
    %115 = arith.addf %112, %114 : vector<8x384xf32>
    %116 = arith.index_cast %c2_i32 : i32 to index
    %c0_46 = arith.constant 0 : index
    %c0_47 = arith.constant 0 : index
    %117 = vector.load %arg10[%116, %c0_46, %c0_47] : memref<8x8x384xf32, #tpu.memory_space<vmem>>, vector<1x8x384xf32>
    %118 = vector.shape_cast %117 : vector<1x8x384xf32> to vector<8x384xf32>
    %119 = vector.extract_strided_slice %118 {offsets = [0, 0], sizes = [8, 128], strides = [1, 1]} : vector<8x384xf32> to vector<8x128xf32>
    %120 = vector.extract_strided_slice %115 {offsets = [0, 0], sizes = [8, 128], strides = [1, 1]} : vector<8x384xf32> to vector<8x128xf32>
    %121 = arith.addf %119, %120 : vector<8x128xf32>
    %122 = arith.negf %121 : vector<8x128xf32>
    %123 = math.exp %122 : vector<8x128xf32>
    %cst_48 = arith.constant 1.000000e+00 : f32
    %124 = vector.broadcast %cst_48 : f32 to vector<8x128xf32>
    %125 = arith.addf %124, %123 : vector<8x128xf32>
    %126 = arith.divf %124, %125 : vector<8x128xf32>
    %127 = vector.extract_strided_slice %118 {offsets = [0, 128], sizes = [8, 128], strides = [1, 1]} : vector<8x384xf32> to vector<8x128xf32>
    %128 = vector.extract_strided_slice %115 {offsets = [0, 128], sizes = [8, 128], strides = [1, 1]} : vector<8x384xf32> to vector<8x128xf32>
    %129 = arith.addf %127, %128 : vector<8x128xf32>
    %130 = arith.negf %129 : vector<8x128xf32>
    %131 = math.exp %130 : vector<8x128xf32>
    %cst_49 = arith.constant 1.000000e+00 : f32
    %132 = vector.broadcast %cst_49 : f32 to vector<8x128xf32>
    %133 = arith.addf %132, %131 : vector<8x128xf32>
    %134 = arith.divf %132, %133 : vector<8x128xf32>
    %135 = vector.extract_strided_slice %118 {offsets = [0, 256], sizes = [8, 128], strides = [1, 1]} : vector<8x384xf32> to vector<8x128xf32>
    %136 = vector.extract_strided_slice %115 {offsets = [0, 256], sizes = [8, 128], strides = [1, 1]} : vector<8x384xf32> to vector<8x128xf32>
    %137 = arith.mulf %126, %136 : vector<8x128xf32>
    %138 = arith.addf %135, %137 : vector<8x128xf32>
    %139 = math.tanh %138 : vector<8x128xf32>
    %cst_50 = arith.constant 1.000000e+00 : f32
    %140 = vector.broadcast %cst_50 : f32 to vector<8x128xf32>
    %141 = arith.subf %140, %134 : vector<8x128xf32>
    %142 = arith.mulf %141, %139 : vector<8x128xf32>
    %143 = arith.mulf %134, %106 : vector<8x128xf32>
    %144 = arith.addf %142, %143 : vector<8x128xf32>
    %c8_i32_51 = arith.constant 8 : i32
    %145 = arith.muli %arg1, %c8_i32_51 : i32
    %146 = arith.addi %145, %c2_i32 : i32
    %c12_i32_52 = arith.constant 12 : i32
    %147 = arith.cmpi slt, %146, %c12_i32_52 : i32
    %148 = arith.extui %147 : i1 to i32
    %149 = arith.sitofp %148 : i32 to f32
    %150 = vector.broadcast %149 : f32 to vector<8x128xf32>
    %151 = arith.mulf %150, %144 : vector<8x128xf32>
    %cst_53 = arith.constant 1.000000e+00 : f32
    %152 = arith.subf %cst_53, %149 : f32
    %153 = vector.broadcast %152 : f32 to vector<8x128xf32>
    %154 = arith.mulf %153, %106 : vector<8x128xf32>
    %155 = arith.addf %151, %154 : vector<8x128xf32>
    %156 = arith.index_cast %c2_i32 : i32 to index
    %c0_54 = arith.constant 0 : index
    %c0_55 = arith.constant 0 : index
    %157 = vector.load %arg8[%156, %c0_54, %c0_55] : memref<8x8x128xf32, #tpu.memory_space<vmem>>, vector<1x8x128xf32>
    %158 = vector.shape_cast %157 : vector<1x8x128xf32> to vector<8x128xf32>
    %159 = vector.shape_cast %155 : vector<8x128xf32> to vector<1x8x128xf32>
    tpu.vector_store %arg8[%156, %c0_54, %c0_55], %159 {strides = array<i32>} : memref<8x8x128xf32, #tpu.memory_space<vmem>>, vector<1x8x128xf32>,
    %c3_i32 = arith.constant 3 : i32
    %c0_56 = arith.constant 0 : index
    %c0_57 = arith.constant 0 : index
    %160 = vector.load %arg6[%c0_56, %c0_57] : memref<128x384xf32, #tpu.memory_space<vmem>>, vector<128x384xf32>
    %cst_58 = arith.constant dense<0.000000e+00> : vector<8x384xf32>
    %161 = tpu.matmul %155, %160, %cst_58 {dimension_numbers = #tpu.dot_dimension_numbers<[1], [0], [0], [1], [0, 0, 1, 1], [], []>} : vector<8x128xf32>, vector<128x384xf32>, vector<8x384xf32> -> vector<8x384xf32>
    %c0_59 = arith.constant 0 : index
    %c0_60 = arith.constant 0 : index
    %162 = vector.load %arg7[%c0_59, %c0_60] : memref<1x384xf32, #tpu.memory_space<vmem>>, vector<1x384xf32>
    %163 = vector.broadcast %162 : vector<1x384xf32> to vector<8x384xf32>
    %164 = arith.addf %161, %163 : vector<8x384xf32>
    %165 = arith.index_cast %c3_i32 : i32 to index
    %c0_61 = arith.constant 0 : index
    %c0_62 = arith.constant 0 : index
    %166 = vector.load %arg10[%165, %c0_61, %c0_62] : memref<8x8x384xf32, #tpu.memory_space<vmem>>, vector<1x8x384xf32>
    %167 = vector.shape_cast %166 : vector<1x8x384xf32> to vector<8x384xf32>
    %168 = vector.extract_strided_slice %167 {offsets = [0, 0], sizes = [8, 128], strides = [1, 1]} : vector<8x384xf32> to vector<8x128xf32>
    %169 = vector.extract_strided_slice %164 {offsets = [0, 0], sizes = [8, 128], strides = [1, 1]} : vector<8x384xf32> to vector<8x128xf32>
    %170 = arith.addf %168, %169 : vector<8x128xf32>
    %171 = arith.negf %170 : vector<8x128xf32>
    %172 = math.exp %171 : vector<8x128xf32>
    %cst_63 = arith.constant 1.000000e+00 : f32
    %173 = vector.broadcast %cst_63 : f32 to vector<8x128xf32>
    %174 = arith.addf %173, %172 : vector<8x128xf32>
    %175 = arith.divf %173, %174 : vector<8x128xf32>
    %176 = vector.extract_strided_slice %167 {offsets = [0, 128], sizes = [8, 128], strides = [1, 1]} : vector<8x384xf32> to vector<8x128xf32>
    %177 = vector.extract_strided_slice %164 {offsets = [0, 128], sizes = [8, 128], strides = [1, 1]} : vector<8x384xf32> to vector<8x128xf32>
    %178 = arith.addf %176, %177 : vector<8x128xf32>
    %179 = arith.negf %178 : vector<8x128xf32>
    %180 = math.exp %179 : vector<8x128xf32>
    %cst_64 = arith.constant 1.000000e+00 : f32
    %181 = vector.broadcast %cst_64 : f32 to vector<8x128xf32>
    %182 = arith.addf %181, %180 : vector<8x128xf32>
    %183 = arith.divf %181, %182 : vector<8x128xf32>
    %184 = vector.extract_strided_slice %167 {offsets = [0, 256], sizes = [8, 128], strides = [1, 1]} : vector<8x384xf32> to vector<8x128xf32>
    %185 = vector.extract_strided_slice %164 {offsets = [0, 256], sizes = [8, 128], strides = [1, 1]} : vector<8x384xf32> to vector<8x128xf32>
    %186 = arith.mulf %175, %185 : vector<8x128xf32>
    %187 = arith.addf %184, %186 : vector<8x128xf32>
    %188 = math.tanh %187 : vector<8x128xf32>
    %cst_65 = arith.constant 1.000000e+00 : f32
    %189 = vector.broadcast %cst_65 : f32 to vector<8x128xf32>
    %190 = arith.subf %189, %183 : vector<8x128xf32>
    %191 = arith.mulf %190, %188 : vector<8x128xf32>
    %192 = arith.mulf %183, %155 : vector<8x128xf32>
    %193 = arith.addf %191, %192 : vector<8x128xf32>
    %c8_i32_66 = arith.constant 8 : i32
    %194 = arith.muli %arg1, %c8_i32_66 : i32
    %195 = arith.addi %194, %c3_i32 : i32
    %c12_i32_67 = arith.constant 12 : i32
    %196 = arith.cmpi slt, %195, %c12_i32_67 : i32
    %197 = arith.extui %196 : i1 to i32
    %198 = arith.sitofp %197 : i32 to f32
    %199 = vector.broadcast %198 : f32 to vector<8x128xf32>
    %200 = arith.mulf %199, %193 : vector<8x128xf32>
    %cst_68 = arith.constant 1.000000e+00 : f32
    %201 = arith.subf %cst_68, %198 : f32
    %202 = vector.broadcast %201 : f32 to vector<8x128xf32>
    %203 = arith.mulf %202, %155 : vector<8x128xf32>
    %204 = arith.addf %200, %203 : vector<8x128xf32>
    %205 = arith.index_cast %c3_i32 : i32 to index
    %c0_69 = arith.constant 0 : index
    %c0_70 = arith.constant 0 : index
    %206 = vector.load %arg8[%205, %c0_69, %c0_70] : memref<8x8x128xf32, #tpu.memory_space<vmem>>, vector<1x8x128xf32>
    %207 = vector.shape_cast %206 : vector<1x8x128xf32> to vector<8x128xf32>
    %208 = vector.shape_cast %204 : vector<8x128xf32> to vector<1x8x128xf32>
    tpu.vector_store %arg8[%205, %c0_69, %c0_70], %208 {strides = array<i32>} : memref<8x8x128xf32, #tpu.memory_space<vmem>>, vector<1x8x128xf32>,
    %c4_i32 = arith.constant 4 : i32
    %c0_71 = arith.constant 0 : index
    %c0_72 = arith.constant 0 : index
    %209 = vector.load %arg6[%c0_71, %c0_72] : memref<128x384xf32, #tpu.memory_space<vmem>>, vector<128x384xf32>
    %cst_73 = arith.constant dense<0.000000e+00> : vector<8x384xf32>
    %210 = tpu.matmul %204, %209, %cst_73 {dimension_numbers = #tpu.dot_dimension_numbers<[1], [0], [0], [1], [0, 0, 1, 1], [], []>} : vector<8x128xf32>, vector<128x384xf32>, vector<8x384xf32> -> vector<8x384xf32>
    %c0_74 = arith.constant 0 : index
    %c0_75 = arith.constant 0 : index
    %211 = vector.load %arg7[%c0_74, %c0_75] : memref<1x384xf32, #tpu.memory_space<vmem>>, vector<1x384xf32>
    %212 = vector.broadcast %211 : vector<1x384xf32> to vector<8x384xf32>
    %213 = arith.addf %210, %212 : vector<8x384xf32>
    %214 = arith.index_cast %c4_i32 : i32 to index
    %c0_76 = arith.constant 0 : index
    %c0_77 = arith.constant 0 : index
    %215 = vector.load %arg10[%214, %c0_76, %c0_77] : memref<8x8x384xf32, #tpu.memory_space<vmem>>, vector<1x8x384xf32>
    %216 = vector.shape_cast %215 : vector<1x8x384xf32> to vector<8x384xf32>
    %217 = vector.extract_strided_slice %216 {offsets = [0, 0], sizes = [8, 128], strides = [1, 1]} : vector<8x384xf32> to vector<8x128xf32>
    %218 = vector.extract_strided_slice %213 {offsets = [0, 0], sizes = [8, 128], strides = [1, 1]} : vector<8x384xf32> to vector<8x128xf32>
    %219 = arith.addf %217, %218 : vector<8x128xf32>
    %220 = arith.negf %219 : vector<8x128xf32>
    %221 = math.exp %220 : vector<8x128xf32>
    %cst_78 = arith.constant 1.000000e+00 : f32
    %222 = vector.broadcast %cst_78 : f32 to vector<8x128xf32>
    %223 = arith.addf %222, %221 : vector<8x128xf32>
    %224 = arith.divf %222, %223 : vector<8x128xf32>
    %225 = vector.extract_strided_slice %216 {offsets = [0, 128], sizes = [8, 128], strides = [1, 1]} : vector<8x384xf32> to vector<8x128xf32>
    %226 = vector.extract_strided_slice %213 {offsets = [0, 128], sizes = [8, 128], strides = [1, 1]} : vector<8x384xf32> to vector<8x128xf32>
    %227 = arith.addf %225, %226 : vector<8x128xf32>
    %228 = arith.negf %227 : vector<8x128xf32>
    %229 = math.exp %228 : vector<8x128xf32>
    %cst_79 = arith.constant 1.000000e+00 : f32
    %230 = vector.broadcast %cst_79 : f32 to vector<8x128xf32>
    %231 = arith.addf %230, %229 : vector<8x128xf32>
    %232 = arith.divf %230, %231 : vector<8x128xf32>
    %233 = vector.extract_strided_slice %216 {offsets = [0, 256], sizes = [8, 128], strides = [1, 1]} : vector<8x384xf32> to vector<8x128xf32>
    %234 = vector.extract_strided_slice %213 {offsets = [0, 256], sizes = [8, 128], strides = [1, 1]} : vector<8x384xf32> to vector<8x128xf32>
    %235 = arith.mulf %224, %234 : vector<8x128xf32>
    %236 = arith.addf %233, %235 : vector<8x128xf32>
    %237 = math.tanh %236 : vector<8x128xf32>
    %cst_80 = arith.constant 1.000000e+00 : f32
    %238 = vector.broadcast %cst_80 : f32 to vector<8x128xf32>
    %239 = arith.subf %238, %232 : vector<8x128xf32>
    %240 = arith.mulf %239, %237 : vector<8x128xf32>
    %241 = arith.mulf %232, %204 : vector<8x128xf32>
    %242 = arith.addf %240, %241 : vector<8x128xf32>
    %c8_i32_81 = arith.constant 8 : i32
    %243 = arith.muli %arg1, %c8_i32_81 : i32
    %244 = arith.addi %243, %c4_i32 : i32
    %c12_i32_82 = arith.constant 12 : i32
    %245 = arith.cmpi slt, %244, %c12_i32_82 : i32
    %246 = arith.extui %245 : i1 to i32
    %247 = arith.sitofp %246 : i32 to f32
    %248 = vector.broadcast %247 : f32 to vector<8x128xf32>
    %249 = arith.mulf %248, %242 : vector<8x128xf32>
    %cst_83 = arith.constant 1.000000e+00 : f32
    %250 = arith.subf %cst_83, %247 : f32
    %251 = vector.broadcast %250 : f32 to vector<8x128xf32>
    %252 = arith.mulf %251, %204 : vector<8x128xf32>
    %253 = arith.addf %249, %252 : vector<8x128xf32>
    %254 = arith.index_cast %c4_i32 : i32 to index
    %c0_84 = arith.constant 0 : index
    %c0_85 = arith.constant 0 : index
    %255 = vector.load %arg8[%254, %c0_84, %c0_85] : memref<8x8x128xf32, #tpu.memory_space<vmem>>, vector<1x8x128xf32>
    %256 = vector.shape_cast %255 : vector<1x8x128xf32> to vector<8x128xf32>
    %257 = vector.shape_cast %253 : vector<8x128xf32> to vector<1x8x128xf32>
    tpu.vector_store %arg8[%254, %c0_84, %c0_85], %257 {strides = array<i32>} : memref<8x8x128xf32, #tpu.memory_space<vmem>>, vector<1x8x128xf32>,
    %c5_i32 = arith.constant 5 : i32
    %c0_86 = arith.constant 0 : index
    %c0_87 = arith.constant 0 : index
    %258 = vector.load %arg6[%c0_86, %c0_87] : memref<128x384xf32, #tpu.memory_space<vmem>>, vector<128x384xf32>
    %cst_88 = arith.constant dense<0.000000e+00> : vector<8x384xf32>
    %259 = tpu.matmul %253, %258, %cst_88 {dimension_numbers = #tpu.dot_dimension_numbers<[1], [0], [0], [1], [0, 0, 1, 1], [], []>} : vector<8x128xf32>, vector<128x384xf32>, vector<8x384xf32> -> vector<8x384xf32>
    %c0_89 = arith.constant 0 : index
    %c0_90 = arith.constant 0 : index
    %260 = vector.load %arg7[%c0_89, %c0_90] : memref<1x384xf32, #tpu.memory_space<vmem>>, vector<1x384xf32>
    %261 = vector.broadcast %260 : vector<1x384xf32> to vector<8x384xf32>
    %262 = arith.addf %259, %261 : vector<8x384xf32>
    %263 = arith.index_cast %c5_i32 : i32 to index
    %c0_91 = arith.constant 0 : index
    %c0_92 = arith.constant 0 : index
    %264 = vector.load %arg10[%263, %c0_91, %c0_92] : memref<8x8x384xf32, #tpu.memory_space<vmem>>, vector<1x8x384xf32>
    %265 = vector.shape_cast %264 : vector<1x8x384xf32> to vector<8x384xf32>
    %266 = vector.extract_strided_slice %265 {offsets = [0, 0], sizes = [8, 128], strides = [1, 1]} : vector<8x384xf32> to vector<8x128xf32>
    %267 = vector.extract_strided_slice %262 {offsets = [0, 0], sizes = [8, 128], strides = [1, 1]} : vector<8x384xf32> to vector<8x128xf32>
    %268 = arith.addf %266, %267 : vector<8x128xf32>
    %269 = arith.negf %268 : vector<8x128xf32>
    %270 = math.exp %269 : vector<8x128xf32>
    %cst_93 = arith.constant 1.000000e+00 : f32
    %271 = vector.broadcast %cst_93 : f32 to vector<8x128xf32>
    %272 = arith.addf %271, %270 : vector<8x128xf32>
    %273 = arith.divf %271, %272 : vector<8x128xf32>
    %274 = vector.extract_strided_slice %265 {offsets = [0, 128], sizes = [8, 128], strides = [1, 1]} : vector<8x384xf32> to vector<8x128xf32>
    %275 = vector.extract_strided_slice %262 {offsets = [0, 128], sizes = [8, 128], strides = [1, 1]} : vector<8x384xf32> to vector<8x128xf32>
    %276 = arith.addf %274, %275 : vector<8x128xf32>
    %277 = arith.negf %276 : vector<8x128xf32>
    %278 = math.exp %277 : vector<8x128xf32>
    %cst_94 = arith.constant 1.000000e+00 : f32
    %279 = vector.broadcast %cst_94 : f32 to vector<8x128xf32>
    %280 = arith.addf %279, %278 : vector<8x128xf32>
    %281 = arith.divf %279, %280 : vector<8x128xf32>
    %282 = vector.extract_strided_slice %265 {offsets = [0, 256], sizes = [8, 128], strides = [1, 1]} : vector<8x384xf32> to vector<8x128xf32>
    %283 = vector.extract_strided_slice %262 {offsets = [0, 256], sizes = [8, 128], strides = [1, 1]} : vector<8x384xf32> to vector<8x128xf32>
    %284 = arith.mulf %273, %283 : vector<8x128xf32>
    %285 = arith.addf %282, %284 : vector<8x128xf32>
    %286 = math.tanh %285 : vector<8x128xf32>
    %cst_95 = arith.constant 1.000000e+00 : f32
    %287 = vector.broadcast %cst_95 : f32 to vector<8x128xf32>
    %288 = arith.subf %287, %281 : vector<8x128xf32>
    %289 = arith.mulf %288, %286 : vector<8x128xf32>
    %290 = arith.mulf %281, %253 : vector<8x128xf32>
    %291 = arith.addf %289, %290 : vector<8x128xf32>
    %c8_i32_96 = arith.constant 8 : i32
    %292 = arith.muli %arg1, %c8_i32_96 : i32
    %293 = arith.addi %292, %c5_i32 : i32
    %c12_i32_97 = arith.constant 12 : i32
    %294 = arith.cmpi slt, %293, %c12_i32_97 : i32
    %295 = arith.extui %294 : i1 to i32
    %296 = arith.sitofp %295 : i32 to f32
    %297 = vector.broadcast %296 : f32 to vector<8x128xf32>
    %298 = arith.mulf %297, %291 : vector<8x128xf32>
    %cst_98 = arith.constant 1.000000e+00 : f32
    %299 = arith.subf %cst_98, %296 : f32
    %300 = vector.broadcast %299 : f32 to vector<8x128xf32>
    %301 = arith.mulf %300, %253 : vector<8x128xf32>
    %302 = arith.addf %298, %301 : vector<8x128xf32>
    %303 = arith.index_cast %c5_i32 : i32 to index
    %c0_99 = arith.constant 0 : index
    %c0_100 = arith.constant 0 : index
    %304 = vector.load %arg8[%303, %c0_99, %c0_100] : memref<8x8x128xf32, #tpu.memory_space<vmem>>, vector<1x8x128xf32>
    %305 = vector.shape_cast %304 : vector<1x8x128xf32> to vector<8x128xf32>
    %306 = vector.shape_cast %302 : vector<8x128xf32> to vector<1x8x128xf32>
    tpu.vector_store %arg8[%303, %c0_99, %c0_100], %306 {strides = array<i32>} : memref<8x8x128xf32, #tpu.memory_space<vmem>>, vector<1x8x128xf32>,
    %c6_i32 = arith.constant 6 : i32
    %c0_101 = arith.constant 0 : index
    %c0_102 = arith.constant 0 : index
    %307 = vector.load %arg6[%c0_101, %c0_102] : memref<128x384xf32, #tpu.memory_space<vmem>>, vector<128x384xf32>
    %cst_103 = arith.constant dense<0.000000e+00> : vector<8x384xf32>
    %308 = tpu.matmul %302, %307, %cst_103 {dimension_numbers = #tpu.dot_dimension_numbers<[1], [0], [0], [1], [0, 0, 1, 1], [], []>} : vector<8x128xf32>, vector<128x384xf32>, vector<8x384xf32> -> vector<8x384xf32>
    %c0_104 = arith.constant 0 : index
    %c0_105 = arith.constant 0 : index
    %309 = vector.load %arg7[%c0_104, %c0_105] : memref<1x384xf32, #tpu.memory_space<vmem>>, vector<1x384xf32>
    %310 = vector.broadcast %309 : vector<1x384xf32> to vector<8x384xf32>
    %311 = arith.addf %308, %310 : vector<8x384xf32>
    %312 = arith.index_cast %c6_i32 : i32 to index
    %c0_106 = arith.constant 0 : index
    %c0_107 = arith.constant 0 : index
    %313 = vector.load %arg10[%312, %c0_106, %c0_107] : memref<8x8x384xf32, #tpu.memory_space<vmem>>, vector<1x8x384xf32>
    %314 = vector.shape_cast %313 : vector<1x8x384xf32> to vector<8x384xf32>
    %315 = vector.extract_strided_slice %314 {offsets = [0, 0], sizes = [8, 128], strides = [1, 1]} : vector<8x384xf32> to vector<8x128xf32>
    %316 = vector.extract_strided_slice %311 {offsets = [0, 0], sizes = [8, 128], strides = [1, 1]} : vector<8x384xf32> to vector<8x128xf32>
    %317 = arith.addf %315, %316 : vector<8x128xf32>
    %318 = arith.negf %317 : vector<8x128xf32>
    %319 = math.exp %318 : vector<8x128xf32>
    %cst_108 = arith.constant 1.000000e+00 : f32
    %320 = vector.broadcast %cst_108 : f32 to vector<8x128xf32>
    %321 = arith.addf %320, %319 : vector<8x128xf32>
    %322 = arith.divf %320, %321 : vector<8x128xf32>
    %323 = vector.extract_strided_slice %314 {offsets = [0, 128], sizes = [8, 128], strides = [1, 1]} : vector<8x384xf32> to vector<8x128xf32>
    %324 = vector.extract_strided_slice %311 {offsets = [0, 128], sizes = [8, 128], strides = [1, 1]} : vector<8x384xf32> to vector<8x128xf32>
    %325 = arith.addf %323, %324 : vector<8x128xf32>
    %326 = arith.negf %325 : vector<8x128xf32>
    %327 = math.exp %326 : vector<8x128xf32>
    %cst_109 = arith.constant 1.000000e+00 : f32
    %328 = vector.broadcast %cst_109 : f32 to vector<8x128xf32>
    %329 = arith.addf %328, %327 : vector<8x128xf32>
    %330 = arith.divf %328, %329 : vector<8x128xf32>
    %331 = vector.extract_strided_slice %314 {offsets = [0, 256], sizes = [8, 128], strides = [1, 1]} : vector<8x384xf32> to vector<8x128xf32>
    %332 = vector.extract_strided_slice %311 {offsets = [0, 256], sizes = [8, 128], strides = [1, 1]} : vector<8x384xf32> to vector<8x128xf32>
    %333 = arith.mulf %322, %332 : vector<8x128xf32>
    %334 = arith.addf %331, %333 : vector<8x128xf32>
    %335 = math.tanh %334 : vector<8x128xf32>
    %cst_110 = arith.constant 1.000000e+00 : f32
    %336 = vector.broadcast %cst_110 : f32 to vector<8x128xf32>
    %337 = arith.subf %336, %330 : vector<8x128xf32>
    %338 = arith.mulf %337, %335 : vector<8x128xf32>
    %339 = arith.mulf %330, %302 : vector<8x128xf32>
    %340 = arith.addf %338, %339 : vector<8x128xf32>
    %c8_i32_111 = arith.constant 8 : i32
    %341 = arith.muli %arg1, %c8_i32_111 : i32
    %342 = arith.addi %341, %c6_i32 : i32
    %c12_i32_112 = arith.constant 12 : i32
    %343 = arith.cmpi slt, %342, %c12_i32_112 : i32
    %344 = arith.extui %343 : i1 to i32
    %345 = arith.sitofp %344 : i32 to f32
    %346 = vector.broadcast %345 : f32 to vector<8x128xf32>
    %347 = arith.mulf %346, %340 : vector<8x128xf32>
    %cst_113 = arith.constant 1.000000e+00 : f32
    %348 = arith.subf %cst_113, %345 : f32
    %349 = vector.broadcast %348 : f32 to vector<8x128xf32>
    %350 = arith.mulf %349, %302 : vector<8x128xf32>
    %351 = arith.addf %347, %350 : vector<8x128xf32>
    %352 = arith.index_cast %c6_i32 : i32 to index
    %c0_114 = arith.constant 0 : index
    %c0_115 = arith.constant 0 : index
    %353 = vector.load %arg8[%352, %c0_114, %c0_115] : memref<8x8x128xf32, #tpu.memory_space<vmem>>, vector<1x8x128xf32>
    %354 = vector.shape_cast %353 : vector<1x8x128xf32> to vector<8x128xf32>
    %355 = vector.shape_cast %351 : vector<8x128xf32> to vector<1x8x128xf32>
    tpu.vector_store %arg8[%352, %c0_114, %c0_115], %355 {strides = array<i32>} : memref<8x8x128xf32, #tpu.memory_space<vmem>>, vector<1x8x128xf32>,
    %c7_i32 = arith.constant 7 : i32
    %c0_116 = arith.constant 0 : index
    %c0_117 = arith.constant 0 : index
    %356 = vector.load %arg6[%c0_116, %c0_117] : memref<128x384xf32, #tpu.memory_space<vmem>>, vector<128x384xf32>
    %cst_118 = arith.constant dense<0.000000e+00> : vector<8x384xf32>
    %357 = tpu.matmul %351, %356, %cst_118 {dimension_numbers = #tpu.dot_dimension_numbers<[1], [0], [0], [1], [0, 0, 1, 1], [], []>} : vector<8x128xf32>, vector<128x384xf32>, vector<8x384xf32> -> vector<8x384xf32>
    %c0_119 = arith.constant 0 : index
    %c0_120 = arith.constant 0 : index
    %358 = vector.load %arg7[%c0_119, %c0_120] : memref<1x384xf32, #tpu.memory_space<vmem>>, vector<1x384xf32>
    %359 = vector.broadcast %358 : vector<1x384xf32> to vector<8x384xf32>
    %360 = arith.addf %357, %359 : vector<8x384xf32>
    %361 = arith.index_cast %c7_i32 : i32 to index
    %c0_121 = arith.constant 0 : index
    %c0_122 = arith.constant 0 : index
    %362 = vector.load %arg10[%361, %c0_121, %c0_122] : memref<8x8x384xf32, #tpu.memory_space<vmem>>, vector<1x8x384xf32>
    %363 = vector.shape_cast %362 : vector<1x8x384xf32> to vector<8x384xf32>
    %364 = vector.extract_strided_slice %363 {offsets = [0, 0], sizes = [8, 128], strides = [1, 1]} : vector<8x384xf32> to vector<8x128xf32>
    %365 = vector.extract_strided_slice %360 {offsets = [0, 0], sizes = [8, 128], strides = [1, 1]} : vector<8x384xf32> to vector<8x128xf32>
    %366 = arith.addf %364, %365 : vector<8x128xf32>
    %367 = arith.negf %366 : vector<8x128xf32>
    %368 = math.exp %367 : vector<8x128xf32>
    %cst_123 = arith.constant 1.000000e+00 : f32
    %369 = vector.broadcast %cst_123 : f32 to vector<8x128xf32>
    %370 = arith.addf %369, %368 : vector<8x128xf32>
    %371 = arith.divf %369, %370 : vector<8x128xf32>
    %372 = vector.extract_strided_slice %363 {offsets = [0, 128], sizes = [8, 128], strides = [1, 1]} : vector<8x384xf32> to vector<8x128xf32>
    %373 = vector.extract_strided_slice %360 {offsets = [0, 128], sizes = [8, 128], strides = [1, 1]} : vector<8x384xf32> to vector<8x128xf32>
    %374 = arith.addf %372, %373 : vector<8x128xf32>
    %375 = arith.negf %374 : vector<8x128xf32>
    %376 = math.exp %375 : vector<8x128xf32>
    %cst_124 = arith.constant 1.000000e+00 : f32
    %377 = vector.broadcast %cst_124 : f32 to vector<8x128xf32>
    %378 = arith.addf %377, %376 : vector<8x128xf32>
    %379 = arith.divf %377, %378 : vector<8x128xf32>
    %380 = vector.extract_strided_slice %363 {offsets = [0, 256], sizes = [8, 128], strides = [1, 1]} : vector<8x384xf32> to vector<8x128xf32>
    %381 = vector.extract_strided_slice %360 {offsets = [0, 256], sizes = [8, 128], strides = [1, 1]} : vector<8x384xf32> to vector<8x128xf32>
    %382 = arith.mulf %371, %381 : vector<8x128xf32>
    %383 = arith.addf %380, %382 : vector<8x128xf32>
    %384 = math.tanh %383 : vector<8x128xf32>
    %cst_125 = arith.constant 1.000000e+00 : f32
    %385 = vector.broadcast %cst_125 : f32 to vector<8x128xf32>
    %386 = arith.subf %385, %379 : vector<8x128xf32>
    %387 = arith.mulf %386, %384 : vector<8x128xf32>
    %388 = arith.mulf %379, %351 : vector<8x128xf32>
    %389 = arith.addf %387, %388 : vector<8x128xf32>
    %c8_i32_126 = arith.constant 8 : i32
    %390 = arith.muli %arg1, %c8_i32_126 : i32
    %391 = arith.addi %390, %c7_i32 : i32
    %c12_i32_127 = arith.constant 12 : i32
    %392 = arith.cmpi slt, %391, %c12_i32_127 : i32
    %393 = arith.extui %392 : i1 to i32
    %394 = arith.sitofp %393 : i32 to f32
    %395 = vector.broadcast %394 : f32 to vector<8x128xf32>
    %396 = arith.mulf %395, %389 : vector<8x128xf32>
    %cst_128 = arith.constant 1.000000e+00 : f32
    %397 = arith.subf %cst_128, %394 : f32
    %398 = vector.broadcast %397 : f32 to vector<8x128xf32>
    %399 = arith.mulf %398, %351 : vector<8x128xf32>
    %400 = arith.addf %396, %399 : vector<8x128xf32>
    %401 = arith.index_cast %c7_i32 : i32 to index
    %c0_129 = arith.constant 0 : index
    %c0_130 = arith.constant 0 : index
    %402 = vector.load %arg8[%401, %c0_129, %c0_130] : memref<8x8x128xf32, #tpu.memory_space<vmem>>, vector<1x8x128xf32>
    %403 = vector.shape_cast %402 : vector<1x8x128xf32> to vector<8x128xf32>
    %404 = vector.shape_cast %400 : vector<8x128xf32> to vector<1x8x128xf32>
    tpu.vector_store %arg8[%401, %c0_129, %c0_130], %404 {strides = array<i32>} : memref<8x8x128xf32, #tpu.memory_space<vmem>>, vector<1x8x128xf32>,
    %c8_i32_131 = arith.constant 8 : i32
    %c0_132 = arith.constant 0 : index
    %c0_133 = arith.constant 0 : index
    %405 = vector.load %arg11[%c0_132, %c0_133] : memref<8x128xf32, #tpu.memory_space<vmem>>, vector<8x128xf32>
    tpu.vector_store %arg11[%c0_132, %c0_133], %400 {strides = array<i32>} : memref<8x128xf32, #tpu.memory_space<vmem>>, vector<8x128xf32>,
    %c1_i32_134 = arith.constant 1 : i32
    %406 = arith.cmpi eq, %arg1, %c1_i32_134 : i32
    %407 = arith.extui %406 : i1 to i32
    %c0_i32_135 = arith.constant 0 : i32
    %408 = arith.cmpi ne, %407, %c0_i32_135 : i32
    scf.if %408 {
      %c0_136 = arith.constant 0 : index
      %c0_137 = arith.constant 0 : index
      %409 = vector.load %arg11[%c0_136, %c0_137] : memref<8x128xf32, #tpu.memory_space<vmem>>, vector<8x128xf32>
      %c0_138 = arith.constant 0 : index
      %c0_139 = arith.constant 0 : index
      %410 = vector.load %arg9[%c0_138, %c0_139] : memref<8x128xf32, #tpu.memory_space<vmem>>, vector<8x128xf32>
      tpu.vector_store %arg9[%c0_138, %c0_139], %409 {strides = array<i32>} : memref<8x128xf32, #tpu.memory_space<vmem>>, vector<8x128xf32>,
    } else {
    }
    return
  }
  func.func @transform_0(%arg0: i32, %arg1: i32) -> (i32, i32, i32) {
    %c0_i32 = arith.constant 0 : i32
    %c0_i32_0 = arith.constant 0 : i32
    return %arg1, %arg0, %c0_i32 : i32, i32, i32
  }
  func.func @transform_1(%arg0: i32, %arg1: i32) -> (i32, i32) {
    %c0_i32 = arith.constant 0 : i32
    %c0_i32_0 = arith.constant 0 : i32
    return %arg0, %c0_i32 : i32, i32
  }
  func.func @transform_2(%arg0: i32, %arg1: i32) -> (i32, i32) {
    %c0_i32 = arith.constant 0 : i32
    %c0_i32_0 = arith.constant 0 : i32
    %c0_i32_1 = arith.constant 0 : i32
    return %c0_i32, %c0_i32_0 : i32, i32
  }
  func.func @transform_3(%arg0: i32, %arg1: i32) -> (i32, i32) {
    %c0_i32 = arith.constant 0 : i32
    %c0_i32_0 = arith.constant 0 : i32
    %c0_i32_1 = arith.constant 0 : i32
    return %c0_i32, %c0_i32_0 : i32, i32
  }
  func.func @transform_4(%arg0: i32, %arg1: i32) -> (i32, i32) {
    %c0_i32 = arith.constant 0 : i32
    %c0_i32_0 = arith.constant 0 : i32
    %c0_i32_1 = arith.constant 0 : i32
    return %c0_i32, %c0_i32_0 : i32, i32
  }
  func.func @transform_5(%arg0: i32, %arg1: i32) -> (i32, i32) {
    %c0_i32 = arith.constant 0 : i32
    %c0_i32_0 = arith.constant 0 : i32
    %c0_i32_1 = arith.constant 0 : i32
    return %c0_i32, %c0_i32_0 : i32, i32
  }
  func.func @transform_6(%arg0: i32, %arg1: i32) -> (i32, i32, i32) {
    %c0_i32 = arith.constant 0 : i32
    %c0_i32_0 = arith.constant 0 : i32
    return %arg1, %arg0, %c0_i32 : i32, i32, i32
  }
  func.func @transform_7(%arg0: i32, %arg1: i32) -> (i32, i32) {
    %c0_i32 = arith.constant 0 : i32
    %c0_i32_0 = arith.constant 0 : i32
    return %arg0, %c0_i32 : i32, i32
  }
}

</mosaic_0001>

<llo_original>
// kernel: tpu_custom_call.1
$region0: #{tpu_custom_call.1}
  #allocation0 [shape = 'u32[]', space=smem, size = 0x4, offset = 0x4, fixed_abs, tag = 'smem constant byte address 0x4 - core index']
  #allocation1 [shape = 'u32[144,128]{1,0:T(1,128)}', space=vmem, size = 0x12000, scoped, tag = 'internal scratch']
  #allocation2 [shape = 'f32[8,8,384]{2,1,0:T(8,128)}', space=vmem, size = 0x18000, scoped, tag = 'scratch operand']
  #allocation3 [shape = 'f32[8,128]{1,0:T(8,128)}', space=vmem, size = 0x1000, scoped, tag = 'scratch operand']
  %s0 = inlined_call_operand.hbm [shape: f32[16,8,128], index: 0, kind: input, shape index: {}]
  %s1 = inlined_call_operand.hbm [shape: f32[8,128], index: 1, kind: input, shape index: {}]
  %s2 = inlined_call_operand.hbm [shape: f32[128,384], index: 2, kind: input, shape index: {}]
  %s3 = inlined_call_operand.vmem [shape: f32[1,384], index: 3, kind: input, shape index: {}]
  %s4 = inlined_call_operand.hbm [shape: f32[128,384], index: 4, kind: input, shape index: {}]
  %s5 = inlined_call_operand.vmem [shape: f32[1,384], index: 5, kind: input, shape index: {}]
  %s6 = inlined_call_operand.hbm [shape: f32[16,8,128], index: 6, kind: output, shape index: {0}]
  %s7 = inlined_call_operand.hbm [shape: f32[8,128], index: 7, kind: output, shape index: {1}]
  %8 = xla_tuple %s6, %s7
  %s9 = sld [smem:[#allocation0]]
  $region89: #{tpu_custom_call.1} parent=0
    _
  %s11 = ssub.s32 1, %s9
  %s12 = scalar_select 0, %s11, %s9
  $region1: #{tpu_custom_call.1} parent=0
    #allocation4 [shape = 'u8[65536]{0}', space=vmem, size = 0x10000, scoped, tag = 'input window, operand 0']
    #allocation5 [shape = 's32[2]{0}', space=sflag, size = 0x8, scoped, tag = 'scoped memory for tpu_custom_call.1']
    #allocation6 [shape = 's32[2]{0}', space=sflag, size = 0x8, scoped, tag = 'scoped memory for tpu_custom_call.1']
    #allocation7 [shape = 'u8[4096]{0}', space=vmem, size = 0x1000, scoped, tag = 'input window, operand 1, single buffered']
    #allocation8 [shape = 's32[1]{0}', space=sflag, size = 0x4, scoped, tag = 'scoped memory for tpu_custom_call.1']
    #allocation9 [shape = 'u8[196608]{0}', space=vmem, size = 0x30000, scoped, tag = 'input window, operand 2, single buffered']
    #allocation10 [shape = 'u8[196608]{0}', space=vmem, size = 0x30000, scoped, tag = 'input window, operand 4, single buffered']
    #allocation11 [shape = 's32[1]{0}', space=sflag, size = 0x4, scoped, tag = 'scoped memory for tpu_custom_call.1']
    #allocation12 [shape = 'u8[65536]{0}', space=vmem, size = 0x10000, scoped, tag = 'output window, operand 0']
    #allocation13 [shape = 'u8[4096]{0}', space=vmem, size = 0x1000, scoped, tag = 'output window, operand 1, single buffered']
    #allocation14 [shape = 's32[1]{0}', space=sflag, size = 0x4, scoped, tag = 'scoped memory for tpu_custom_call.1']
    %13 = vsyncpa [#allocation5], 0
    %s14 = scalar_lea.sflag [#allocation5], 1
    %15 = vsyncpa %s14, 0
    %16 = vsyncpa [#allocation8], 0
    %17 = vsyncpa [#allocation11], 0
    %18 = vsyncpa [#allocation6], 0
    %s19 = scalar_lea.sflag [#allocation6], 1
    %20 = vsyncpa %s19, 0
    %21 = vsyncpa [#allocation14], 0
    loop: start=0, step=1, limit=4
    $region2: #{tpu_custom_call.1} parent=1 // loop_pre_header
      _
    $region3: #{tpu_custom_call.1} parent=1 // loop_header
      %s23 = sphi 0, %s27
      %p24 = scmp.ge.s32.totalorder %s23, 4
      %s30 = sphi 0, %s42
      %s31 = sphi 0, %s38
      %s32 = sphi 0, %s30
      %s33 = sphi 0, %s31
      %s34 = sphi 0, %s32
      %s35 = sphi 0, %s33
      %s47 = sphi 0, %s49
      %s50 = sphi 0, %s47
      %s51 = sphi 0, %s50
      %s67 = sphi 0, %s51
      %s73 = sphi 0, %s75
      %s76 = sphi 0, %s73
      %s77 = sphi 0, %s76
      %s93 = sphi 0, %s77
      %s97 = sphi 0, %s97
      %s99 = sphi 0, %s97
      %s100 = sphi 0, %s99
      %s114 = sphi 0, %s100
      %s118 = sphi 0, %s118
      %s120 = sphi 0, %s118
      %s121 = sphi 0, %s120
      %s135 = sphi 0, %s121
      %s139 = sphi 0, %s139
      %s141 = sphi 0, %s139
      %s142 = sphi 0, %s141
      %s156 = sphi 0, %s142
      %s160 = sphi 0, %s160
      %s162 = sphi 0, %s160
      %s163 = sphi 0, %s162
      %s177 = sphi 0, %s163
      %s185 = sphi 0, %s187
      %s188 = sphi 0, %s185
      %s189 = sphi 0, %s188
      %s205 = sphi 0, %s189
      %s211 = sphi 0, %s213
      %s214 = sphi 0, %s211
      %s215 = sphi 0, %s214
      %s231 = sphi 0, %s215
    $region4: #{tpu_custom_call.1} parent=1 // loop_header_branch
      %26 = sbr.rel (%p24) target = $region8
    $region5: #{tpu_custom_call.1} parent=1 // loop_body
      %s28 = ssub.s32 %s23, 1
      %s29 = ssub.s32 %s23, 2
      %s36 = sadd.s32 1, %s31
      %p37 = scmp.ge.s32.totalorder %s36, 2
      %s38 = scalar_select %p37, 0, %s36
      %s39 = sadd.s32 1, %s30
      %s40 = scalar_select %p37, %s39, %s30
      %p41 = scmp.ge.s32.totalorder %s40, 1
      %s42 = scalar_select %p41, 0, %s40
      %s43 = ssub.s32 %s31, %s38
      %s44 = ssub.s32 %s30, %s42
      %s45 = sor.u32 %s43, %s44
      %p46 = scmp.eq.s32.totalorder %s45, 0
      %s48 = sadd.s32 %s47, 1
      %s49 = scalar_select %p46, %s47, %s48
      %p52 = pneg %p46
      %p53 = scmp.eq.s32.totalorder %s23, 1
      %p54 = por %p52, %p53
      %p55 = scmp.ne.s32.totalorder %s47, %s50
      %p56 = scmp.eq.s32.totalorder %s23, 0
      %p57 = por %p55, %p56
      %p58 = scmp.ne.s32.totalorder %s47, %s50
      %p59 = scmp.eq.s32.totalorder %s28, 1
      %p60 = por %p58, %p59
      %p61 = scmp.ne.s32.totalorder %s50, %s51
      %p62 = scmp.eq.s32.totalorder %s28, 0
      %p63 = por %p61, %p62
      %p64 = scmp.ne.s32.totalorder %s50, %s51
      %p65 = scmp.eq.s32.totalorder %s29, 1
      %p66 = por %p64, %p65
      %p68 = scmp.ne.s32.totalorder %s51, %s67
      %p69 = scmp.eq.s32.totalorder %s29, 0
      %p70 = por %p68, %p69
      %s71 = ssub.s32 %s30, %s42
      %p72 = scmp.eq.s32.totalorder %s71, 0
      %s74 = sadd.s32 %s73, 1
      %s75 = scalar_select %p72, %s73, %s74
      %p78 = pneg %p72
      %p79 = scmp.eq.s32.totalorder %s23, 1
      %p80 = por %p78, %p79
      %p81 = scmp.ne.s32.totalorder %s73, %s76
      %p82 = scmp.eq.s32.totalorder %s23, 0
      %p83 = por %p81, %p82
      %p84 = scmp.ne.s32.totalorder %s73, %s76
      %p85 = scmp.eq.s32.totalorder %s28, 1
      %p86 = por %p84, %p85
      %p87 = scmp.ne.s32.totalorder %s76, %s77
      %p88 = scmp.eq.s32.totalorder %s28, 0
      %p89 = por %p87, %p88
      %p90 = scmp.ne.s32.totalorder %s76, %s77
      %p91 = scmp.eq.s32.totalorder %s29, 1
      %p92 = por %p90, %p91
      %p94 = scmp.ne.s32.totalorder %s77, %s93
      %p95 = scmp.eq.s32.totalorder %s29, 0
      %p96 = por %p94, %p95
      %s98 = sadd.s32 %s97, 1
      %p101 = scmp.eq.s32.totalorder %s23, 1
      %p102 = scmp.ne.s32.totalorder %s97, %s99
      %p103 = scmp.eq.s32.totalorder %s23, 0
      %p104 = por %p102, %p103
      %p105 = scmp.ne.s32.totalorder %s97, %s99
      %p106 = scmp.eq.s32.totalorder %s28, 1
      %p107 = por %p105, %p106
      %p108 = scmp.ne.s32.totalorder %s99, %s100
      %p109 = scmp.eq.s32.totalorder %s28, 0
      %p110 = por %p108, %p109
      %p111 = scmp.ne.s32.totalorder %s99, %s100
      %p112 = scmp.eq.s32.totalorder %s29, 1
      %p113 = por %p111, %p112
      %p115 = scmp.ne.s32.totalorder %s100, %s114
      %p116 = scmp.eq.s32.totalorder %s29, 0
      %p117 = por %p115, %p116
      %s119 = sadd.s32 %s118, 1
      %p122 = scmp.eq.s32.totalorder %s23, 1
      %p123 = scmp.ne.s32.totalorder %s118, %s120
      %p124 = scmp.eq.s32.totalorder %s23, 0
      %p125 = por %p123, %p124
      %p126 = scmp.ne.s32.totalorder %s118, %s120
      %p127 = scmp.eq.s32.totalorder %s28, 1
      %p128 = por %p126, %p127
      %p129 = scmp.ne.s32.totalorder %s120, %s121
      %p130 = scmp.eq.s32.totalorder %s28, 0
      %p131 = por %p129, %p130
      %p132 = scmp.ne.s32.totalorder %s120, %s121
      %p133 = scmp.eq.s32.totalorder %s29, 1
      %p134 = por %p132, %p133
      %p136 = scmp.ne.s32.totalorder %s121, %s135
      %p137 = scmp.eq.s32.totalorder %s29, 0
      %p138 = por %p136, %p137
      %s140 = sadd.s32 %s139, 1
      %p143 = scmp.eq.s32.totalorder %s23, 1
      %p144 = scmp.ne.s32.totalorder %s139, %s141
      %p145 = scmp.eq.s32.totalorder %s23, 0
      %p146 = por %p144, %p145
      %p147 = scmp.ne.s32.totalorder %s139, %s141
      %p148 = scmp.eq.s32.totalorder %s28, 1
      %p149 = por %p147, %p148
      %p150 = scmp.ne.s32.totalorder %s141, %s142
      %p151 = scmp.eq.s32.totalorder %s28, 0
      %p152 = por %p150, %p151
      %p153 = scmp.ne.s32.totalorder %s141, %s142
      %p154 = scmp.eq.s32.totalorder %s29, 1
      %p155 = por %p153, %p154
      %p157 = scmp.ne.s32.totalorder %s142, %s156
      %p158 = scmp.eq.s32.totalorder %s29, 0
      %p159 = por %p157, %p158
      %s161 = sadd.s32 %s160, 1
      %p164 = scmp.eq.s32.totalorder %s23, 1
      %p165 = scmp.ne.s32.totalorder %s160, %s162
      %p166 = scmp.eq.s32.totalorder %s23, 0
      %p167 = por %p165, %p166
      %p168 = scmp.ne.s32.totalorder %s160, %s162
      %p169 = scmp.eq.s32.totalorder %s28, 1
      %p170 = por %p168, %p169
      %p171 = scmp.ne.s32.totalorder %s162, %s163
      %p172 = scmp.eq.s32.totalorder %s28, 0
      %p173 = por %p171, %p172
      %p174 = scmp.ne.s32.totalorder %s162, %s163
      %p175 = scmp.eq.s32.totalorder %s29, 1
      %p176 = por %p174, %p175
      %p178 = scmp.ne.s32.totalorder %s163, %s177
      %p179 = scmp.eq.s32.totalorder %s29, 0
      %p180 = por %p178, %p179
      %s181 = ssub.s32 %s31, %s38
      %s182 = ssub.s32 %s30, %s42
      %s183 = sor.u32 %s181, %s182
      %p184 = scmp.eq.s32.totalorder %s183, 0
      %s186 = sadd.s32 %s185, 1
      %s187 = scalar_select %p184, %s185, %s186
      %p190 = pneg %p184
      %p191 = scmp.eq.s32.totalorder %s23, 1
      %p192 = por %p190, %p191
      %p193 = scmp.ne.s32.totalorder %s185, %s188
      %p194 = scmp.eq.s32.totalorder %s23, 0
      %p195 = por %p193, %p194
      %p196 = scmp.ne.s32.totalorder %s185, %s188
      %p197 = scmp.eq.s32.totalorder %s28, 1
      %p198 = por %p196, %p197
      %p199 = scmp.ne.s32.totalorder %s188, %s189
      %p200 = scmp.eq.s32.totalorder %s28, 0
      %p201 = por %p199, %p200
      %p202 = scmp.ne.s32.totalorder %s188, %s189
      %p203 = scmp.eq.s32.totalorder %s29, 1
      %p204 = por %p202, %p203
      %p206 = scmp.ne.s32.totalorder %s189, %s205
      %p207 = scmp.eq.s32.totalorder %s29, 0
      %p208 = por %p206, %p207
      %s209 = ssub.s32 %s30, %s42
      %p210 = scmp.eq.s32.totalorder %s209, 0
      %s212 = sadd.s32 %s211, 1
      %s213 = scalar_select %p210, %s211, %s212
      %p216 = pneg %p210
      %p217 = scmp.eq.s32.totalorder %s23, 1
      %p218 = por %p216, %p217
      %p219 = scmp.ne.s32.totalorder %s211, %s214
      %p220 = scmp.eq.s32.totalorder %s23, 0
      %p221 = por %p219, %p220
      %p222 = scmp.ne.s32.totalorder %s211, %s214
      %p223 = scmp.eq.s32.totalorder %s28, 1
      %p224 = por %p222, %p223
      %p225 = scmp.ne.s32.totalorder %s214, %s215
      %p226 = scmp.eq.s32.totalorder %s28, 0
      %p227 = por %p225, %p226
      %p228 = scmp.ne.s32.totalorder %s214, %s215
      %p229 = scmp.eq.s32.totalorder %s29, 1
      %p230 = por %p228, %p229
      %p232 = scmp.ne.s32.totalorder %s215, %s231
      %p233 = scmp.eq.s32.totalorder %s29, 0
      %p234 = por %p232, %p233
      %p235 = scmp.le.s32.totalorder 1, %s23
      %p236 = scmp.lt.s32.totalorder %s23, 3
      %p237 = pnand %p235, %p236
      %p238 = pneg %p237
      // Predicated region
      $region9: #{tpu_custom_call.1} parent=5 // pred_check
        _
      $region10: #{tpu_custom_call.1} parent=5 // pred_check_branch
        %240 = sbr.rel (%p237) target = $region12
      $region11: #{tpu_custom_call.1} parent=5 // pred_region
        %s241 = ssub.s32 %s23, 1
        // Predicated region
        $region13: #{tpu_custom_call.1} parent=11 // pred_check
          %p242 = pneg %p89
        $region14: #{tpu_custom_call.1} parent=11 // pred_check_branch
          %244 = sbr.rel (%p242) target = $region16
        $region15: #{tpu_custom_call.1} parent=11 // pred_region
          %s246 = ssub.s32 128, 128
          %247 = vsyncadd [#allocation8], %s246
          %s248 = smul.addr %s32, 128
          %s249 = scalar_lea.hbm %s1, %s248
          %s251 = sshll.u32 [#allocation7], 4
          %s252 = int_to_ptr.vmem [resolvable:$true] %s251
          %254 = dma.hbm_to_vmem [thread:$0]  %s249, 128, %s252, [#allocation8]
        $region16: #{tpu_custom_call.1} parent=11 // pred_fallthru
          _
        // Predicated region
        $region17: #{tpu_custom_call.1} parent=11 // pred_check
          %p255 = pneg %p110
        $region18: #{tpu_custom_call.1} parent=11 // pred_check_branch
          %257 = sbr.rel (%p255) target = $region20
        $region19: #{tpu_custom_call.1} parent=11 // pred_region
          %s259 = ssub.s32 6144, 6144
          %260 = vsyncadd [#allocation8], %s259
          %s261 = sshll.u32 [#allocation9], 4
          %s262 = int_to_ptr.vmem [resolvable:$true] %s261
          %267 = dma.hbm_to_vmem [thread:$0]  %s2, 6144, %s262, [#allocation8], 384, 384, 24
        $region20: #{tpu_custom_call.1} parent=11 // pred_fallthru
          _
        // Predicated region
        $region21: #{tpu_custom_call.1} parent=11 // pred_check
          %p268 = pneg %p131
        $region22: #{tpu_custom_call.1} parent=11 // pred_check_branch
          %270 = sbr.rel (%p268) target = $region24
        $region23: #{tpu_custom_call.1} parent=11 // pred_region
          _
        $region24: #{tpu_custom_call.1} parent=11 // pred_fallthru
          _
        // Predicated region
        $region25: #{tpu_custom_call.1} parent=11 // pred_check
          %p271 = pneg %p152
        $region26: #{tpu_custom_call.1} parent=11 // pred_check_branch
          %273 = sbr.rel (%p271) target = $region28
        $region27: #{tpu_custom_call.1} parent=11 // pred_region
          %s275 = ssub.s32 6144, 6144
          %276 = vsyncadd [#allocation11], %s275
          %s277 = sshll.u32 [#allocation10], 4
          %s278 = int_to_ptr.vmem [resolvable:$true] %s277
          %283 = dma.hbm_to_vmem [thread:$0]  %s4, 6144, %s278, [#allocation11], 384, 384, 24
        $region28: #{tpu_custom_call.1} parent=11 // pred_fallthru
          _
        // Predicated region
        $region29: #{tpu_custom_call.1} parent=11 // pred_check
          %p284 = pneg %p173
        $region30: #{tpu_custom_call.1} parent=11 // pred_check_branch
          %286 = sbr.rel (%p284) target = $region32
        $region31: #{tpu_custom_call.1} parent=11 // pred_region
          _
        $region32: #{tpu_custom_call.1} parent=11 // pred_fallthru
          _
      $region12: #{tpu_custom_call.1} parent=5 // pred_fallthru
        _
      %p287 = scmp.lt.s32.totalorder %s23, 2
      // Predicated region
      $region33: #{tpu_custom_call.1} parent=5 // pred_check
        %p288 = pneg %p287
      $region34: #{tpu_custom_call.1} parent=5 // pred_check_branch
        %290 = sbr.rel (%p288) target = $region36
      $region35: #{tpu_custom_call.1} parent=5 // pred_region
        // Predicated region
        $region37: #{tpu_custom_call.1} parent=35 // pred_check
          %p291 = pneg %p57
        $region38: #{tpu_custom_call.1} parent=35 // pred_check_branch
          %293 = sbr.rel (%p291) target = $region40
        $region39: #{tpu_custom_call.1} parent=35 // pred_region
          %s294 = sand.u32 %s47, 1
          %s295 = scalar_lea.sflag [#allocation5], %s294
          %s296 = sand.u32 %s47, 1
          %s297 = smul.addr %s296, 64
          %s298 = scalar_lea.vmem [#allocation4], %s297
          %s299 = smul.u32 8, %s31
          %s301 = ssub.s32 1024, 1024
          %302 = vsyncadd %s295, %s301
          %s303 = sadd.s32 %s30, %s299
          %s304 = smul.addr %s303, 128
          %s305 = scalar_lea.hbm %s0, %s304
          %s306 = sshll.u32 %s298, 4
          %s307 = int_to_ptr.vmem [resolvable:$true] %s306
          %312 = dma.hbm_to_vmem [thread:$0]  %s305, 1024, %s307, %s295, 128, 128, 8
        $region40: #{tpu_custom_call.1} parent=35 // pred_fallthru
          _
      $region36: #{tpu_custom_call.1} parent=5 // pred_fallthru
        _
      %p313 = scmp.le.s32.totalorder 1, %s23
      %p314 = scmp.lt.s32.totalorder %s23, 3
      %p315 = pnand %p313, %p314
      %p316 = pneg %p315
      // Predicated region
      $region41: #{tpu_custom_call.1} parent=5 // pred_check
        _
      $region42: #{tpu_custom_call.1} parent=5 // pred_check_branch
        %318 = sbr.rel (%p315) target = $region44
      $region43: #{tpu_custom_call.1} parent=5 // pred_region
        %s319 = ssub.s32 %s23, 1
        %s320 = sand.u32 %s50, 1
        %s321 = scalar_lea.sflag [#allocation5], %s320
        %s322 = sand.u32 %s50, 1
        %s323 = smul.addr %s322, 64
        %s324 = scalar_lea.vmem [#allocation4], %s323
        // Predicated region
        $region45: #{tpu_custom_call.1} parent=43 // pred_check
          %p325 = pneg %p63
        $region46: #{tpu_custom_call.1} parent=43 // pred_check_branch
          %327 = sbr.rel (%p325) target = $region48
        $region47: #{tpu_custom_call.1} parent=43 // pred_region
          %328 = dma.done %s321, 1024
        $region48: #{tpu_custom_call.1} parent=43 // pred_fallthru
          _
        // Predicated region
        $region49: #{tpu_custom_call.1} parent=43 // pred_check
          %p329 = pneg %p89
        $region50: #{tpu_custom_call.1} parent=43 // pred_check_branch
          %331 = sbr.rel (%p329) target = $region52
        $region51: #{tpu_custom_call.1} parent=43 // pred_region
          %332 = dma.done [#allocation8], 128
        $region52: #{tpu_custom_call.1} parent=43 // pred_fallthru
          _
        // Predicated region
        $region53: #{tpu_custom_call.1} parent=43 // pred_check
          %p333 = pneg %p110
        $region54: #{tpu_custom_call.1} parent=43 // pred_check_branch
          %335 = sbr.rel (%p333) target = $region56
        $region55: #{tpu_custom_call.1} parent=43 // pred_region
          %336 = dma.done [#allocation8], 6144
        $region56: #{tpu_custom_call.1} parent=43 // pred_fallthru
          _
        // Predicated region
        $region57: #{tpu_custom_call.1} parent=43 // pred_check
          %p337 = pneg %p152
        $region58: #{tpu_custom_call.1} parent=43 // pred_check_branch
          %339 = sbr.rel (%p337) target = $region60
        $region59: #{tpu_custom_call.1} parent=43 // pred_region
          %340 = dma.done [#allocation11], 6144
        $region60: #{tpu_custom_call.1} parent=43 // pred_fallthru
          _
        %s341 = sand.u32 %s50, 1
        %s342 = scalar_lea.sflag [#allocation5], %s341
        %s343 = sand.u32 %s50, 1
        %s344 = smul.addr %s343, 64
        %s345 = scalar_lea.vmem [#allocation4], %s344
        %p346 = pneg %p63
        %p347 = pneg %p60
        %p348 = pneg %p89
        %p349 = pneg %p86
        %p350 = pneg %p110
        %p351 = pneg %p107
        %p352 = pneg %p131
        %p353 = pneg %p128
        %p354 = pneg %p152
        %p355 = pneg %p149
        %p356 = pneg %p173
        %p357 = pneg %p170
        %p358 = pneg %p201
        %p359 = pneg %p198
        %s360 = sand.u32 %s188, 1
        %s361 = scalar_lea.sflag [#allocation6], %s360
        %s362 = sand.u32 %s188, 1
        %s363 = smul.addr %s362, 64
        %s364 = scalar_lea.vmem [#allocation12], %s363
        %p365 = pneg %p227
        %p366 = pneg %p224
        %s367 = smul.u32 8, %s33
        %s368 = smul.u32 8, %s33
        %p369 = scmp.eq.s32.totalorder %s33, 0
        // Predicated region
        $region61: #{tpu_custom_call.1} parent=43 // pred_check
          %p370 = pneg %p369
        $region62: #{tpu_custom_call.1} parent=43 // pred_check_branch
          %372 = sbr.rel (%p370) target = $region64
        $region63: #{tpu_custom_call.1} parent=43 // pred_region
          %v373 = vld [vmem:[#allocation7] sm:$0xff]
          %374 = vst [vmem:[#allocation3] sm:$0xff] %v373
        $region64: #{tpu_custom_call.1} parent=43 // pred_fallthru
          _
        %v375 = vld [vmem:[%s324] sm:$0xff]
        %v376 = vld [vmem:[%s324 + $0x8] sm:$0xff]
        %v377 = vld [vmem:[%s324 + $0x10] sm:$0xff]
        %v378 = vld [vmem:[%s324 + $0x18] sm:$0xff]
        %v379 = vld [vmem:[%s324 + $0x20] sm:$0xff]
        %v380 = vld [vmem:[%s324 + $0x28] sm:$0xff]
        %v381 = vld [vmem:[%s324 + $0x30] sm:$0xff]
        %v382 = vld [vmem:[%s324 + $0x38] sm:$0xff]
        %v383 = vld [vmem:[#allocation9] sm:$0xff]
        %v384 = vld [vmem:[#allocation9 + $0x8] sm:$0xff]
        %v385 = vld [vmem:[#allocation9 + $0x10] sm:$0xff]
        %v386 = vld [vmem:[#allocation9 + $0x18] sm:$0xff]
        %v387 = vld [vmem:[#allocation9 + $0x20] sm:$0xff]
        %v388 = vld [vmem:[#allocation9 + $0x28] sm:$0xff]
        %v389 = vld [vmem:[#allocation9 + $0x30] sm:$0xff]
        %v390 = vld [vmem:[#allocation9 + $0x38] sm:$0xff]
        %v391 = vld [vmem:[#allocation9 + $0x40] sm:$0xff]
        %v392 = vld [vmem:[#allocation9 + $0x48] sm:$0xff]
        %v393 = vld [vmem:[#allocation9 + $0x50] sm:$0xff]
        %v394 = vld [vmem:[#allocation9 + $0x58] sm:$0xff]
        %v395 = vld [vmem:[#allocation9 + $0x60] sm:$0xff]
        %v396 = vld [vmem:[#allocation9 + $0x68] sm:$0xff]
        %v397 = vld [vmem:[#allocation9 + $0x70] sm:$0xff]
        %v398 = vld [vmem:[#allocation9 + $0x78] sm:$0xff]
        %v399 = vld [vmem:[#allocation9 + $0x80] sm:$0xff]
        %v400 = vld [vmem:[#allocation9 + $0x88] sm:$0xff]
        %v401 = vld [vmem:[#allocation9 + $0x90] sm:$0xff]
        %v402 = vld [vmem:[#allocation9 + $0x98] sm:$0xff]
        %v403 = vld [vmem:[#allocation9 + $0xa0] sm:$0xff]
        %v404 = vld [vmem:[#allocation9 + $0xa8] sm:$0xff]
        %v405 = vld [vmem:[#allocation9 + $0xb0] sm:$0xff]
        %v406 = vld [vmem:[#allocation9 + $0xb8] sm:$0xff]
        %v407 = vld [vmem:[#allocation9 + $0xc0] sm:$0xff]
        %v408 = vld [vmem:[#allocation9 + $0xc8] sm:$0xff]
        %v409 = vld [vmem:[#allocation9 + $0xd0] sm:$0xff]
        %v410 = vld [vmem:[#allocation9 + $0xd8] sm:$0xff]
        %v411 = vld [vmem:[#allocation9 + $0xe0] sm:$0xff]
        %v412 = vld [vmem:[#allocation9 + $0xe8] sm:$0xff]
        %v413 = vld [vmem:[#allocation9 + $0xf0] sm:$0xff]
        %v414 = vld [vmem:[#allocation9 + $0xf8] sm:$0xff]
        %v415 = vld [vmem:[#allocation9 + $0x100] sm:$0xff]
        %v416 = vld [vmem:[#allocation9 + $0x108] sm:$0xff]
        %v417 = vld [vmem:[#allocation9 + $0x110] sm:$0xff]
        %v418 = vld [vmem:[#allocation9 + $0x118] sm:$0xff]
        %v419 = vld [vmem:[#allocation9 + $0x120] sm:$0xff]
        %v420 = vld [vmem:[#allocation9 + $0x128] sm:$0xff]
        %v421 = vld [vmem:[#allocation9 + $0x130] sm:$0xff]
        %v422 = vld [vmem:[#allocation9 + $0x138] sm:$0xff]
        %v423 = vld [vmem:[#allocation9 + $0x140] sm:$0xff]
        %v424 = vld [vmem:[#allocation9 + $0x148] sm:$0xff]
        %v425 = vld [vmem:[#allocation9 + $0x150] sm:$0xff]
        %v426 = vld [vmem:[#allocation9 + $0x158] sm:$0xff]
        %v427 = vld [vmem:[#allocation9 + $0x160] sm:$0xff]
        %v428 = vld [vmem:[#allocation9 + $0x168] sm:$0xff]
        %v429 = vld [vmem:[#allocation9 + $0x170] sm:$0xff]
        %v430 = vld [vmem:[#allocation9 + $0x178] sm:$0xff]
        %v431 = vld [vmem:[%s3] sm:$0x7]
        %v433 = vlaneseq
        %v434 = vshrl.u32 %v433, 7
        %v435 = vsub.s32 0, %v434
        %v436 = vrot.slane %v431, %v435
        %v437 = vlaneseq
        %v438 = vshrl.u32 %v437, 7
        %v439 = vsub.s32 1, %v438
        %v440 = vrot.slane %v431, %v439
        %v441 = vlaneseq
        %v442 = vshrl.u32 %v441, 7
        %v443 = vsub.s32 2, %v442
        %v444 = vrot.slane %v431, %v443
        %448 = vmatprep.subr.mxu0 %v384
        %449 = vmatpush1.msra.mxu0 %v383
        %450 = vmatprep.subr.mxu0 %v387
        %451 = vmatpush1.msra.mxu0 %v386
        %452 = vmatprep.subr.mxu0 %v390
        %453 = vmatpush1.msra.mxu0 %v389
        %454 = vmatprep.subr.mxu0 %v393
        %455 = vmatpush1.msra.mxu0 %v392
        %456 = vmatprep.subr.mxu0 %v396
        %457 = vmatpush1.msra.mxu0 %v395
        %458 = vmatprep.subr.mxu0 %v399
        %459 = vmatpush1.msra.mxu0 %v398
        %460 = vmatprep.subr.mxu0 %v402
        %461 = vmatpush1.msra.mxu0 %v401
        %462 = vmatprep.subr.mxu0 %v405
        %463 = vmatpush1.msra.mxu0 %v404
        %464 = vmatprep.subr.mxu0 %v408
        %465 = vmatpush1.msra.mxu0 %v407
        %466 = vmatprep.subr.mxu0 %v411
        %467 = vmatpush1.msra.mxu0 %v410
        %468 = vmatprep.subr.mxu0 %v414
        %469 = vmatpush1.msra.mxu0 %v413
        %470 = vmatprep.subr.mxu0 %v417
        %471 = vmatpush1.msra.mxu0 %v416
        %472 = vmatprep.subr.mxu0 %v420
        %473 = vmatpush1.msra.mxu0 %v419
        %474 = vmatprep.subr.mxu0 %v423
        %475 = vmatpush1.msra.mxu0 %v422
        %476 = vmatprep.subr.mxu0 %v426
        %477 = vmatpush1.msra.mxu0 %v425
        %478 = vmatprep.subr.mxu0 %v429
        %479 = vmatpush1.msra.mxu0 %v428
        %480 = vmatprep.subr.mxu0 0.0
        %481 = vmatpush1.msra.mxu0 0.0
        %482 = vmatprep.subr.mxu0 0.0
        %483 = vmatpush1.msra.mxu0 0.0
        %484 = vmatprep.subr.mxu0 0.0
        %485 = vmatpush1.msra.mxu0 0.0
        %486 = vmatprep.subr.mxu0 0.0
        %487 = vmatpush1.msra.mxu0 0.0
        %488 = vmatprep.subr.mxu0 0.0
        %489 = vmatpush1.msra.mxu0 0.0
        %490 = vmatprep.subr.mxu0 0.0
        %491 = vmatpush1.msra.mxu0 0.0
        %492 = vmatprep.subr.mxu0 0.0
        %493 = vmatpush1.msra.mxu0 0.0
        %494 = vmatprep.subr.mxu0 0.0
        %495 = vmatpush1.msra.mxu0 0.0
        %496 = vmatprep.subr.mxu0 0.0
        %497 = vmatpush1.msra.mxu0 0.0
        %498 = vmatprep.subr.mxu0 0.0
        %499 = vmatpush1.msra.mxu0 0.0
        %500 = vmatprep.subr.mxu0 0.0
        %501 = vmatpush1.msra.mxu0 0.0
        %502 = vmatprep.subr.mxu0 0.0
        %503 = vmatpush1.msra.mxu0 0.0
        %504 = vmatprep.subr.mxu0 0.0
        %505 = vmatpush1.msra.mxu0 0.0
        %506 = vmatprep.subr.mxu0 0.0
        %507 = vmatpush1.msra.mxu0 0.0
        %508 = vmatprep.subr.mxu0 0.0
        %509 = vmatpush1.msra.mxu0 0.0
        %510 = vmatprep.subr.mxu0 0.0
        %511 = vmatpush1.msra.mxu0 0.0
        %512 = vmatprep.mubr.f32.mxu0 0.0
        %513 = vmatmul.mubr.f32.gmra.mrb[0].mxu0 %v375
        %v514 = vpop.f32.mrb[0].mxu0
        %v515 = vadd.f32 %v436, %v514
        %v516 = vpop.f32.mrb[0].mxu0
        %v517 = vadd.f32 %v440, %v516
        %518 = vmatprep.mubr.f32.mxu0 0.0
        %519 = vmatmul.mubr.f32.gmra.mrb[0].mxu0 %v376
        %v520 = vpop.f32.mrb[0].mxu0
        %v521 = vadd.f32 %v436, %v520
        %v522 = vpop.f32.mrb[0].mxu0
        %v523 = vadd.f32 %v440, %v522
        %524 = vmatprep.mubr.f32.mxu0 0.0
        %525 = vmatmul.mubr.f32.gmra.mrb[0].mxu0 %v377
        %v526 = vpop.f32.mrb[0].mxu0
        %v527 = vadd.f32 %v436, %v526
        %v528 = vpop.f32.mrb[0].mxu0
        %v529 = vadd.f32 %v440, %v528
        %530 = vmatprep.mubr.f32.mxu0 0.0
        %531 = vmatmul.mubr.f32.gmra.mrb[0].mxu0 %v378
        %v532 = vpop.f32.mrb[0].mxu0
        %v533 = vadd.f32 %v436, %v532
        %v534 = vpop.f32.mrb[0].mxu0
        %v535 = vadd.f32 %v440, %v534
        %536 = vmatprep.mubr.f32.mxu0 0.0
        %537 = vmatmul.mubr.f32.gmra.mrb[0].mxu0 %v379
        %v538 = vpop.f32.mrb[0].mxu0
        %v539 = vadd.f32 %v436, %v538
        %v540 = vpop.f32.mrb[0].mxu0
        %v541 = vadd.f32 %v440, %v540
        %542 = vmatprep.mubr.f32.mxu0 0.0
        %543 = vmatmul.mubr.f32.gmra.mrb[0].mxu0 %v380
        %v544 = vpop.f32.mrb[0].mxu0
        %v545 = vadd.f32 %v436, %v544
        %v546 = vpop.f32.mrb[0].mxu0
        %v547 = vadd.f32 %v440, %v546
        %548 = vmatprep.mubr.f32.mxu0 0.0
        %549 = vmatmul.mubr.f32.gmra.mrb[0].mxu0 %v381
        %v550 = vpop.f32.mrb[0].mxu0
        %v551 = vadd.f32 %v436, %v550
        %v552 = vpop.f32.mrb[0].mxu0
        %v553 = vadd.f32 %v440, %v552
        %554 = vmatprep.mubr.f32.mxu0 0.0
        %555 = vmatmul.mubr.f32.gmra.mrb[0].mxu0 %v382
        %v556 = vpop.f32.mrb[0].mxu0
        %v557 = vadd.f32 %v436, %v556
        %v558 = vpop.f32.mrb[0].mxu0
        %v559 = vadd.f32 %v440, %v558
        %560 = vdwg.mxu0
        %561 = vmatprep.subr.mxu0 0.0
        %562 = vmatpush1.msra.mxu0 %v385
        %563 = vmatprep.subr.mxu0 0.0
        %564 = vmatpush1.msra.mxu0 %v388
        %565 = vmatprep.subr.mxu0 0.0
        %566 = vmatpush1.msra.mxu0 %v391
        %567 = vmatprep.subr.mxu0 0.0
        %568 = vmatpush1.msra.mxu0 %v394
        %569 = vmatprep.subr.mxu0 0.0
        %570 = vmatpush1.msra.mxu0 %v397
        %571 = vmatprep.subr.mxu0 0.0
        %572 = vmatpush1.msra.mxu0 %v400
        %573 = vmatprep.subr.mxu0 0.0
        %574 = vmatpush1.msra.mxu0 %v403
        %575 = vmatprep.subr.mxu0 0.0
        %576 = vmatpush1.msra.mxu0 %v406
        %577 = vmatprep.subr.mxu0 0.0
        %578 = vmatpush1.msra.mxu0 %v409
        %579 = vmatprep.subr.mxu0 0.0
        %580 = vmatpush1.msra.mxu0 %v412
        %581 = vmatprep.subr.mxu0 0.0
        %582 = vmatpush1.msra.mxu0 %v415
        %583 = vmatprep.subr.mxu0 0.0
        %584 = vmatpush1.msra.mxu0 %v418
        %585 = vmatprep.subr.mxu0 0.0
        %586 = vmatpush1.msra.mxu0 %v421
        %587 = vmatprep.subr.mxu0 0.0
        %588 = vmatpush1.msra.mxu0 %v424
        %589 = vmatprep.subr.mxu0 0.0
        %590 = vmatpush1.msra.mxu0 %v427
        %591 = vmatprep.subr.mxu0 0.0
        %592 = vmatpush1.msra.mxu0 %v430
        %593 = vmatprep.subr.mxu0 0.0
        %594 = vmatpush1.msra.mxu0 0.0
        %595 = vmatprep.subr.mxu0 0.0
        %596 = vmatpush1.msra.mxu0 0.0
        %597 = vmatprep.subr.mxu0 0.0
        %598 = vmatpush1.msra.mxu0 0.0
        %599 = vmatprep.subr.mxu0 0.0
        %600 = vmatpush1.msra.mxu0 0.0
        %601 = vmatprep.subr.mxu0 0.0
        %602 = vmatpush1.msra.mxu0 0.0
        %603 = vmatprep.subr.mxu0 0.0
        %604 = vmatpush1.msra.mxu0 0.0
        %605 = vmatprep.subr.mxu0 0.0
        %606 = vmatpush1.msra.mxu0 0.0
        %607 = vmatprep.subr.mxu0 0.0
        %608 = vmatpush1.msra.mxu0 0.0
        %609 = vmatprep.subr.mxu0 0.0
        %610 = vmatpush1.msra.mxu0 0.0
        %611 = vmatprep.subr.mxu0 0.0
        %612 = vmatpush1.msra.mxu0 0.0
        %613 = vmatprep.subr.mxu0 0.0
        %614 = vmatpush1.msra.mxu0 0.0
        %615 = vmatprep.subr.mxu0 0.0
        %616 = vmatpush1.msra.mxu0 0.0
        %617 = vmatprep.subr.mxu0 0.0
        %618 = vmatpush1.msra.mxu0 0.0
        %619 = vmatprep.subr.mxu0 0.0
        %620 = vmatpush1.msra.mxu0 0.0
        %621 = vmatprep.subr.mxu0 0.0
        %622 = vmatpush1.msra.mxu0 0.0
        %623 = vmatprep.subr.mxu0 0.0
        %624 = vmatpush1.msra.mxu0 0.0
        %625 = vmatprep.mubr.f32.mxu0 0.0
        %626 = vmatmul.mubr.f32.gmra.mrb[0].mxu0 %v375
        %v627 = vpop.f32.mrb[0].mxu0
        %v628 = vadd.f32 %v444, %v627
        %v629 = vpop.f32.mrb[0].mxu0
        %630 = vmatprep.mubr.f32.mxu0 0.0
        %631 = vmatmul.mubr.f32.gmra.mrb[0].mxu0 %v376
        %v632 = vpop.f32.mrb[0].mxu0
        %v633 = vadd.f32 %v444, %v632
        %v634 = vpop.f32.mrb[0].mxu0
        %635 = vmatprep.mubr.f32.mxu0 0.0
        %636 = vmatmul.mubr.f32.gmra.mrb[0].mxu0 %v377
        %v637 = vpop.f32.mrb[0].mxu0
        %v638 = vadd.f32 %v444, %v637
        %v639 = vpop.f32.mrb[0].mxu0
        %640 = vmatprep.mubr.f32.mxu0 0.0
        %641 = vmatmul.mubr.f32.gmra.mrb[0].mxu0 %v378
        %v642 = vpop.f32.mrb[0].mxu0
        %v643 = vadd.f32 %v444, %v642
        %v644 = vpop.f32.mrb[0].mxu0
        %645 = vmatprep.mubr.f32.mxu0 0.0
        %646 = vmatmul.mubr.f32.gmra.mrb[0].mxu0 %v379
        %v647 = vpop.f32.mrb[0].mxu0
        %v648 = vadd.f32 %v444, %v647
        %v649 = vpop.f32.mrb[0].mxu0
        %650 = vmatprep.mubr.f32.mxu0 0.0
        %651 = vmatmul.mubr.f32.gmra.mrb[0].mxu0 %v380
        %v652 = vpop.f32.mrb[0].mxu0
        %v653 = vadd.f32 %v444, %v652
        %v654 = vpop.f32.mrb[0].mxu0
        %655 = vmatprep.mubr.f32.mxu0 0.0
        %656 = vmatmul.mubr.f32.gmra.mrb[0].mxu0 %v381
        %v657 = vpop.f32.mrb[0].mxu0
        %v658 = vadd.f32 %v444, %v657
        %v659 = vpop.f32.mrb[0].mxu0
        %660 = vmatprep.mubr.f32.mxu0 0.0
        %661 = vmatmul.mubr.f32.gmra.mrb[0].mxu0 %v382
        %v662 = vpop.f32.mrb[0].mxu0
        %v663 = vadd.f32 %v444, %v662
        %v664 = vpop.f32.mrb[0].mxu0
        %665 = vdwg.mxu0
        %666 = vst [vmem:[#allocation2] sm:$0xff] %v515
        %667 = vst [vmem:[#allocation2 + $0x8] sm:$0xff] %v517
        %668 = vst [vmem:[#allocation2 + $0x10] sm:$0xff] %v628
        %669 = vst [vmem:[#allocation2 + $0x18] sm:$0xff] %v521
        %670 = vst [vmem:[#allocation2 + $0x20] sm:$0xff] %v523
        %671 = vst [vmem:[#allocation2 + $0x28] sm:$0xff] %v633
        %672 = vst [vmem:[#allocation2 + $0x30] sm:$0xff] %v527
        %673 = vst [vmem:[#allocation2 + $0x38] sm:$0xff] %v529
        %674 = vst [vmem:[#allocation2 + $0x40] sm:$0xff] %v638
        %675 = vst [vmem:[#allocation2 + $0x48] sm:$0xff] %v533
        %676 = vst [vmem:[#allocation2 + $0x50] sm:$0xff] %v535
        %677 = vst [vmem:[#allocation2 + $0x58] sm:$0xff] %v643
        %678 = vst [vmem:[#allocation2 + $0x60] sm:$0xff] %v539
        %679 = vst [vmem:[#allocation2 + $0x68] sm:$0xff] %v541
        %680 = vst [vmem:[#allocation2 + $0x70] sm:$0xff] %v648
        %681 = vst [vmem:[#allocation2 + $0x78] sm:$0xff] %v545
        %682 = vst [vmem:[#allocation2 + $0x80] sm:$0xff] %v547
        %683 = vst [vmem:[#allocation2 + $0x88] sm:$0xff] %v653
        %684 = vst [vmem:[#allocation2 + $0x90] sm:$0xff] %v551
        %685 = vst [vmem:[#allocation2 + $0x98] sm:$0xff] %v553
        %686 = vst [vmem:[#allocation2 + $0xa0] sm:$0xff] %v658
        %687 = vst [vmem:[#allocation2 + $0xa8] sm:$0xff] %v557
        %688 = vst [vmem:[#allocation2 + $0xb0] sm:$0xff] %v559
        %689 = vst [vmem:[#allocation2 + $0xb8] sm:$0xff] %v663
        %v690 = vld [vmem:[#allocation3] sm:$0xff]
        %v691 = vld [vmem:[#allocation10] sm:$0xff]
        %v692 = vld [vmem:[#allocation10 + $0x8] sm:$0xff]
        %v693 = vld [vmem:[#allocation10 + $0x10] sm:$0xff]
        %v694 = vld [vmem:[#allocation10 + $0x18] sm:$0xff]
        %v695 = vld [vmem:[#allocation10 + $0x20] sm:$0xff]
        %v696 = vld [vmem:[#allocation10 + $0x28] sm:$0xff]
        %v697 = vld [vmem:[#allocation10 + $0x30] sm:$0xff]
        %v698 = vld [vmem:[#allocation10 + $0x38] sm:$0xff]
        %v699 = vld [vmem:[#allocation10 + $0x40] sm:$0xff]
        %v700 = vld [vmem:[#allocation10 + $0x48] sm:$0xff]
        %v701 = vld [vmem:[#allocation10 + $0x50] sm:$0xff]
        %v702 = vld [vmem:[#allocation10 + $0x58] sm:$0xff]
        %v703 = vld [vmem:[#allocation10 + $0x60] sm:$0xff]
        %v704 = vld [vmem:[#allocation10 + $0x68] sm:$0xff]
        %v705 = vld [vmem:[#allocation10 + $0x70] sm:$0xff]
        %v706 = vld [vmem:[#allocation10 + $0x78] sm:$0xff]
        %v707 = vld [vmem:[#allocation10 + $0x80] sm:$0xff]
        %v708 = vld [vmem:[#allocation10 + $0x88] sm:$0xff]
        %v709 = vld [vmem:[#allocation10 + $0x90] sm:$0xff]
        %v710 = vld [vmem:[#allocation10 + $0x98] sm:$0xff]
        %v711 = vld [vmem:[#allocation10 + $0xa0] sm:$0xff]
        %v712 = vld [vmem:[#allocation10 + $0xa8] sm:$0xff]
        %v713 = vld [vmem:[#allocation10 + $0xb0] sm:$0xff]
        %v714 = vld [vmem:[#allocation10 + $0xb8] sm:$0xff]
        %v715 = vld [vmem:[#allocation10 + $0xc0] sm:$0xff]
        %v716 = vld [vmem:[#allocation10 + $0xc8] sm:$0xff]
        %v717 = vld [vmem:[#allocation10 + $0xd0] sm:$0xff]
        %v718 = vld [vmem:[#allocation10 + $0xd8] sm:$0xff]
        %v719 = vld [vmem:[#allocation10 + $0xe0] sm:$0xff]
        %v720 = vld [vmem:[#allocation10 + $0xe8] sm:$0xff]
        %v721 = vld [vmem:[#allocation10 + $0xf0] sm:$0xff]
        %v722 = vld [vmem:[#allocation10 + $0xf8] sm:$0xff]
        %v723 = vld [vmem:[#allocation10 + $0x100] sm:$0xff]
        %v724 = vld [vmem:[#allocation10 + $0x108] sm:$0xff]
        %v725 = vld [vmem:[#allocation10 + $0x110] sm:$0xff]
        %v726 = vld [vmem:[#allocation10 + $0x118] sm:$0xff]
        %v727 = vld [vmem:[#allocation10 + $0x120] sm:$0xff]
        %v728 = vld [vmem:[#allocation10 + $0x128] sm:$0xff]
        %v729 = vld [vmem:[#allocation10 + $0x130] sm:$0xff]
        %v730 = vld [vmem:[#allocation10 + $0x138] sm:$0xff]
        %v731 = vld [vmem:[#allocation10 + $0x140] sm:$0xff]
        %v732 = vld [vmem:[#allocation10 + $0x148] sm:$0xff]
        %v733 = vld [vmem:[#allocation10 + $0x150] sm:$0xff]
        %v734 = vld [vmem:[#allocation10 + $0x158] sm:$0xff]
        %v735 = vld [vmem:[#allocation10 + $0x160] sm:$0xff]
        %v736 = vld [vmem:[#allocation10 + $0x168] sm:$0xff]
        %v737 = vld [vmem:[#allocation10 + $0x170] sm:$0xff]
        %v738 = vld [vmem:[#allocation10 + $0x178] sm:$0xff]
        %v739 = vld [vmem:[%s5] sm:$0x7]
        %v741 = vlaneseq
        %v742 = vshrl.u32 %v741, 7
        %v743 = vsub.s32 0, %v742
        %v744 = vrot.slane %v739, %v743
        %v745 = vlaneseq
        %v746 = vshrl.u32 %v745, 7
        %v747 = vsub.s32 1, %v746
        %v748 = vrot.slane %v739, %v747
        %v749 = vlaneseq
        %v750 = vshrl.u32 %v749, 7
        %v751 = vsub.s32 2, %v750
        %v752 = vrot.slane %v739, %v751
        %756 = vmatprep.subr.mxu0 %v692
        %757 = vmatpush1.msra.mxu0 %v691
        %758 = vmatprep.subr.mxu0 %v695
        %759 = vmatpush1.msra.mxu0 %v694
        %760 = vmatprep.subr.mxu0 %v698
        %761 = vmatpush1.msra.mxu0 %v697
        %762 = vmatprep.subr.mxu0 %v701
        %763 = vmatpush1.msra.mxu0 %v700
        %764 = vmatprep.subr.mxu0 %v704
        %765 = vmatpush1.msra.mxu0 %v703
        %766 = vmatprep.subr.mxu0 %v707
        %767 = vmatpush1.msra.mxu0 %v706
        %768 = vmatprep.subr.mxu0 %v710
        %769 = vmatpush1.msra.mxu0 %v709
        %770 = vmatprep.subr.mxu0 %v713
        %771 = vmatpush1.msra.mxu0 %v712
        %772 = vmatprep.subr.mxu0 %v716
        %773 = vmatpush1.msra.mxu0 %v715
        %774 = vmatprep.subr.mxu0 %v719
        %775 = vmatpush1.msra.mxu0 %v718
        %776 = vmatprep.subr.mxu0 %v722
        %777 = vmatpush1.msra.mxu0 %v721
        %778 = vmatprep.subr.mxu0 %v725
        %779 = vmatpush1.msra.mxu0 %v724
        %780 = vmatprep.subr.mxu0 %v728
        %781 = vmatpush1.msra.mxu0 %v727
        %782 = vmatprep.subr.mxu0 %v731
        %783 = vmatpush1.msra.mxu0 %v730
        %784 = vmatprep.subr.mxu0 %v734
        %785 = vmatpush1.msra.mxu0 %v733
        %786 = vmatprep.subr.mxu0 %v737
        %787 = vmatpush1.msra.mxu0 %v736
        %788 = vmatprep.subr.mxu0 0.0
        %789 = vmatpush1.msra.mxu0 0.0
        %790 = vmatprep.subr.mxu0 0.0
        %791 = vmatpush1.msra.mxu0 0.0
        %792 = vmatprep.subr.mxu0 0.0
        %793 = vmatpush1.msra.mxu0 0.0
        %794 = vmatprep.subr.mxu0 0.0
        %795 = vmatpush1.msra.mxu0 0.0
        %796 = vmatprep.subr.mxu0 0.0
        %797 = vmatpush1.msra.mxu0 0.0
        %798 = vmatprep.subr.mxu0 0.0
        %799 = vmatpush1.msra.mxu0 0.0
        %800 = vmatprep.subr.mxu0 0.0
        %801 = vmatpush1.msra.mxu0 0.0
        %802 = vmatprep.subr.mxu0 0.0
        %803 = vmatpush1.msra.mxu0 0.0
        %804 = vmatprep.subr.mxu0 0.0
        %805 = vmatpush1.msra.mxu0 0.0
        %806 = vmatprep.subr.mxu0 0.0
        %807 = vmatpush1.msra.mxu0 0.0
        %808 = vmatprep.subr.mxu0 0.0
        %809 = vmatpush1.msra.mxu0 0.0
        %810 = vmatprep.subr.mxu0 0.0
        %811 = vmatpush1.msra.mxu0 0.0
        %812 = vmatprep.subr.mxu0 0.0
        %813 = vmatpush1.msra.mxu0 0.0
        %814 = vmatprep.subr.mxu0 0.0
        %815 = vmatpush1.msra.mxu0 0.0
        %816 = vmatprep.subr.mxu0 0.0
        %817 = vmatpush1.msra.mxu0 0.0
        %818 = vmatprep.subr.mxu0 0.0
        %819 = vmatpush1.msra.mxu0 0.0
        %820 = vmatprep.mubr.f32.mxu0 0.0
        %821 = vmatmul.mubr.f32.gmra.mrb[0].mxu0 %v690
        %v822 = vpop.f32.mrb[0].mxu0
        %v823 = vadd.f32 %v744, %v822
        %v824 = vpop.f32.mrb[0].mxu0
        %v825 = vadd.f32 %v748, %v824
        %826 = vdwg.mxu0
        %827 = vmatprep.subr.mxu0 0.0
        %828 = vmatpush1.msra.mxu0 %v693
        %829 = vmatprep.subr.mxu0 0.0
        %830 = vmatpush1.msra.mxu0 %v696
        %831 = vmatprep.subr.mxu0 0.0
        %832 = vmatpush1.msra.mxu0 %v699
        %833 = vmatprep.subr.mxu0 0.0
        %834 = vmatpush1.msra.mxu0 %v702
        %835 = vmatprep.subr.mxu0 0.0
        %836 = vmatpush1.msra.mxu0 %v705
        %837 = vmatprep.subr.mxu0 0.0
        %838 = vmatpush1.msra.mxu0 %v708
        %839 = vmatprep.subr.mxu0 0.0
        %840 = vmatpush1.msra.mxu0 %v711
        %841 = vmatprep.subr.mxu0 0.0
        %842 = vmatpush1.msra.mxu0 %v714
        %843 = vmatprep.subr.mxu0 0.0
        %844 = vmatpush1.msra.mxu0 %v717
        %845 = vmatprep.subr.mxu0 0.0
        %846 = vmatpush1.msra.mxu0 %v720
        %847 = vmatprep.subr.mxu0 0.0
        %848 = vmatpush1.msra.mxu0 %v723
        %849 = vmatprep.subr.mxu0 0.0
        %850 = vmatpush1.msra.mxu0 %v726
        %851 = vmatprep.subr.mxu0 0.0
        %852 = vmatpush1.msra.mxu0 %v729
        %853 = vmatprep.subr.mxu0 0.0
        %854 = vmatpush1.msra.mxu0 %v732
        %855 = vmatprep.subr.mxu0 0.0
        %856 = vmatpush1.msra.mxu0 %v735
        %857 = vmatprep.subr.mxu0 0.0
        %858 = vmatpush1.msra.mxu0 %v738
        %859 = vmatprep.subr.mxu0 0.0
        %860 = vmatpush1.msra.mxu0 0.0
        %861 = vmatprep.subr.mxu0 0.0
        %862 = vmatpush1.msra.mxu0 0.0
        %863 = vmatprep.subr.mxu0 0.0
        %864 = vmatpush1.msra.mxu0 0.0
        %865 = vmatprep.subr.mxu0 0.0
        %866 = vmatpush1.msra.mxu0 0.0
        %867 = vmatprep.subr.mxu0 0.0
        %868 = vmatpush1.msra.mxu0 0.0
        %869 = vmatprep.subr.mxu0 0.0
        %870 = vmatpush1.msra.mxu0 0.0
        %871 = vmatprep.subr.mxu0 0.0
        %872 = vmatpush1.msra.mxu0 0.0
        %873 = vmatprep.subr.mxu0 0.0
        %874 = vmatpush1.msra.mxu0 0.0
        %875 = vmatprep.subr.mxu0 0.0
        %876 = vmatpush1.msra.mxu0 0.0
        %877 = vmatprep.subr.mxu0 0.0
        %878 = vmatpush1.msra.mxu0 0.0
        %879 = vmatprep.subr.mxu0 0.0
        %880 = vmatpush1.msra.mxu0 0.0
        %881 = vmatprep.subr.mxu0 0.0
        %882 = vmatpush1.msra.mxu0 0.0
        %883 = vmatprep.subr.mxu0 0.0
        %884 = vmatpush1.msra.mxu0 0.0
        %885 = vmatprep.subr.mxu0 0.0
        %886 = vmatpush1.msra.mxu0 0.0
        %887 = vmatprep.subr.mxu0 0.0
        %888 = vmatpush1.msra.mxu0 0.0
        %889 = vmatprep.subr.mxu0 0.0
        %890 = vmatpush1.msra.mxu0 0.0
        %891 = vmatprep.mubr.f32.mxu0 0.0
        %892 = vmatmul.mubr.f32.gmra.mrb[0].mxu0 %v690
        %v893 = vpop.f32.mrb[0].mxu0
        %v894 = vadd.f32 %v752, %v893
        %v895 = vpop.f32.mrb[0].mxu0
        %896 = vdwg.mxu0
        %v897 = vld [vmem:[#allocation2] sm:$0xff]
        %v898 = vld [vmem:[#allocation2 + $0x8] sm:$0xff]
        %v899 = vld [vmem:[#allocation2 + $0x10] sm:$0xff]
        %v900 = vadd.f32 %v897, %v823
        %v901 = vxor.u32 %v900, 2147483648
        %v902 = vmul.f32 %v901, 1.442695
        %v903 = vpow.pop %v902
        %v904 = vadd.f32 %v903, 1.0
        %v905 = vrcp.pop %v904
        %v906 = vmul.f32 1.0, %v905
        %v907 = vadd.f32 %v898, %v825
        %v908 = vxor.u32 %v907, 2147483648
        %v909 = vmul.f32 %v908, 1.442695
        %v910 = vpow.pop %v909
        %v911 = vadd.f32 %v910, 1.0
        %v912 = vrcp.pop %v911
        %v913 = vmul.f32 1.0, %v912
        %v914 = vmul.f32 %v906, %v894
        %v915 = vadd.f32 %v899, %v914
        %v916 = vtanh.pop %v915
        %v917 = vsub.f32 1.0, %v913
        %v918 = vmul.f32 %v917, %v916
        %v919 = vmul.f32 %v913, %v690
        %v920 = vadd.f32 %v918, %v919
        %s921 = smul.u32 %s33, 8
        %p922 = scmp.lt.s32.totalorder %s921, 12
        %s923 = scalar_select %p922, 1, 0
        %s924 = scvt.s32.f32 %s923
        %v925 = vstv %s924
        %v926 = vmul.f32 %v925, %v920
        %s927 = ssub.f32 1.0, %s924
        %v928 = vstv %s927
        %v929 = vmul.f32 %v928, %v690
        %v930 = vadd.f32 %v926, %v929
        %931 = vst [vmem:[%s364] sm:$0xff] %v930
        %v932 = vld [vmem:[#allocation10] sm:$0xff]
        %v933 = vld [vmem:[#allocation10 + $0x8] sm:$0xff]
        %v934 = vld [vmem:[#allocation10 + $0x10] sm:$0xff]
        %v935 = vld [vmem:[#allocation10 + $0x18] sm:$0xff]
        %v936 = vld [vmem:[#allocation10 + $0x20] sm:$0xff]
        %v937 = vld [vmem:[#allocation10 + $0x28] sm:$0xff]
        %v938 = vld [vmem:[#allocation10 + $0x30] sm:$0xff]
        %v939 = vld [vmem:[#allocation10 + $0x38] sm:$0xff]
        %v940 = vld [vmem:[#allocation10 + $0x40] sm:$0xff]
        %v941 = vld [vmem:[#allocation10 + $0x48] sm:$0xff]
        %v942 = vld [vmem:[#allocation10 + $0x50] sm:$0xff]
        %v943 = vld [vmem:[#allocation10 + $0x58] sm:$0xff]
        %v944 = vld [vmem:[#allocation10 + $0x60] sm:$0xff]
        %v945 = vld [vmem:[#allocation10 + $0x68] sm:$0xff]
        %v946 = vld [vmem:[#allocation10 + $0x70] sm:$0xff]
        %v947 = vld [vmem:[#allocation10 + $0x78] sm:$0xff]
        %v948 = vld [vmem:[#allocation10 + $0x80] sm:$0xff]
        %v949 = vld [vmem:[#allocation10 + $0x88] sm:$0xff]
        %v950 = vld [vmem:[#allocation10 + $0x90] sm:$0xff]
        %v951 = vld [vmem:[#allocation10 + $0x98] sm:$0xff]
        %v952 = vld [vmem:[#allocation10 + $0xa0] sm:$0xff]
        %v953 = vld [vmem:[#allocation10 + $0xa8] sm:$0xff]
        %v954 = vld [vmem:[#allocation10 + $0xb0] sm:$0xff]
        %v955 = vld [vmem:[#allocation10 + $0xb8] sm:$0xff]
        %v956 = vld [vmem:[#allocation10 + $0xc0] sm:$0xff]
        %v957 = vld [vmem:[#allocation10 + $0xc8] sm:$0xff]
        %v958 = vld [vmem:[#allocation10 + $0xd0] sm:$0xff]
        %v959 = vld [vmem:[#allocation10 + $0xd8] sm:$0xff]
        %v960 = vld [vmem:[#allocation10 + $0xe0] sm:$0xff]
        %v961 = vld [vmem:[#allocation10 + $0xe8] sm:$0xff]
        %v962 = vld [vmem:[#allocation10 + $0xf0] sm:$0xff]
        %v963 = vld [vmem:[#allocation10 + $0xf8] sm:$0xff]
        %v964 = vld [vmem:[#allocation10 + $0x100] sm:$0xff]
        %v965 = vld [vmem:[#allocation10 + $0x108] sm:$0xff]
        %v966 = vld [vmem:[#allocation10 + $0x110] sm:$0xff]
        %v967 = vld [vmem:[#allocation10 + $0x118] sm:$0xff]
        %v968 = vld [vmem:[#allocation10 + $0x120] sm:$0xff]
        %v969 = vld [vmem:[#allocation10 + $0x128] sm:$0xff]
        %v970 = vld [vmem:[#allocation10 + $0x130] sm:$0xff]
        %v971 = vld [vmem:[#allocation10 + $0x138] sm:$0xff]
        %v972 = vld [vmem:[#allocation10 + $0x140] sm:$0xff]
        %v973 = vld [vmem:[#allocation10 + $0x148] sm:$0xff]
        %v974 = vld [vmem:[#allocation10 + $0x150] sm:$0xff]
        %v975 = vld [vmem:[#allocation10 + $0x158] sm:$0xff]
        %v976 = vld [vmem:[#allocation10 + $0x160] sm:$0xff]
        %v977 = vld [vmem:[#allocation10 + $0x168] sm:$0xff]
        %v978 = vld [vmem:[#allocation10 + $0x170] sm:$0xff]
        %v979 = vld [vmem:[#allocation10 + $0x178] sm:$0xff]
        %v980 = vld [vmem:[%s5] sm:$0x7]
        %v982 = vlaneseq
        %v983 = vshrl.u32 %v982, 7
        %v984 = vsub.s32 0, %v983
        %v985 = vrot.slane %v980, %v984
        %v986 = vlaneseq
        %v987 = vshrl.u32 %v986, 7
        %v988 = vsub.s32 1, %v987
        %v989 = vrot.slane %v980, %v988
        %v990 = vlaneseq
        %v991 = vshrl.u32 %v990, 7
        %v992 = vsub.s32 2, %v991
        %v993 = vrot.slane %v980, %v992
        %997 = vmatprep.subr.mxu0 %v933
        %998 = vmatpush1.msra.mxu0 %v932
        %999 = vmatprep.subr.mxu0 %v936
        %1000 = vmatpush1.msra.mxu0 %v935
        %1001 = vmatprep.subr.mxu0 %v939
        %1002 = vmatpush1.msra.mxu0 %v938
        %1003 = vmatprep.subr.mxu0 %v942
        %1004 = vmatpush1.msra.mxu0 %v941
        %1005 = vmatprep.subr.mxu0 %v945
        %1006 = vmatpush1.msra.mxu0 %v944
        %1007 = vmatprep.subr.mxu0 %v948
        %1008 = vmatpush1.msra.mxu0 %v947
        %1009 = vmatprep.subr.mxu0 %v951
        %1010 = vmatpush1.msra.mxu0 %v950
        %1011 = vmatprep.subr.mxu0 %v954
        %1012 = vmatpush1.msra.mxu0 %v953
        %1013 = vmatprep.subr.mxu0 %v957
        %1014 = vmatpush1.msra.mxu0 %v956
        %1015 = vmatprep.subr.mxu0 %v960
        %1016 = vmatpush1.msra.mxu0 %v959
        %1017 = vmatprep.subr.mxu0 %v963
        %1018 = vmatpush1.msra.mxu0 %v962
        %1019 = vmatprep.subr.mxu0 %v966
        %1020 = vmatpush1.msra.mxu0 %v965
        %1021 = vmatprep.subr.mxu0 %v969
        %1022 = vmatpush1.msra.mxu0 %v968
        %1023 = vmatprep.subr.mxu0 %v972
        %1024 = vmatpush1.msra.mxu0 %v971
        %1025 = vmatprep.subr.mxu0 %v975
        %1026 = vmatpush1.msra.mxu0 %v974
        %1027 = vmatprep.subr.mxu0 %v978
        %1028 = vmatpush1.msra.mxu0 %v977
        %1029 = vmatprep.subr.mxu0 0.0
        %1030 = vmatpush1.msra.mxu0 0.0
        %1031 = vmatprep.subr.mxu0 0.0
        %1032 = vmatpush1.msra.mxu0 0.0
        %1033 = vmatprep.subr.mxu0 0.0
        %1034 = vmatpush1.msra.mxu0 0.0
        %1035 = vmatprep.subr.mxu0 0.0
        %1036 = vmatpush1.msra.mxu0 0.0
        %1037 = vmatprep.subr.mxu0 0.0
        %1038 = vmatpush1.msra.mxu0 0.0
        %1039 = vmatprep.subr.mxu0 0.0
        %1040 = vmatpush1.msra.mxu0 0.0
        %1041 = vmatprep.subr.mxu0 0.0
        %1042 = vmatpush1.msra.mxu0 0.0
        %1043 = vmatprep.subr.mxu0 0.0
        %1044 = vmatpush1.msra.mxu0 0.0
        %1045 = vmatprep.subr.mxu0 0.0
        %1046 = vmatpush1.msra.mxu0 0.0
        %1047 = vmatprep.subr.mxu0 0.0
        %1048 = vmatpush1.msra.mxu0 0.0
        %1049 = vmatprep.subr.mxu0 0.0
        %1050 = vmatpush1.msra.mxu0 0.0
        %1051 = vmatprep.subr.mxu0 0.0
        %1052 = vmatpush1.msra.mxu0 0.0
        %1053 = vmatprep.subr.mxu0 0.0
        %1054 = vmatpush1.msra.mxu0 0.0
        %1055 = vmatprep.subr.mxu0 0.0
        %1056 = vmatpush1.msra.mxu0 0.0
        %1057 = vmatprep.subr.mxu0 0.0
        %1058 = vmatpush1.msra.mxu0 0.0
        %1059 = vmatprep.subr.mxu0 0.0
        %1060 = vmatpush1.msra.mxu0 0.0
        %1061 = vmatprep.mubr.f32.mxu0 0.0
        %1062 = vmatmul.mubr.f32.gmra.mrb[0].mxu0 %v930
        %v1063 = vpop.f32.mrb[0].mxu0
        %v1064 = vadd.f32 %v985, %v1063
        %v1065 = vpop.f32.mrb[0].mxu0
        %v1066 = vadd.f32 %v989, %v1065
        %1067 = vdwg.mxu0
        %1068 = vmatprep.subr.mxu0 0.0
        %1069 = vmatpush1.msra.mxu0 %v934
        %1070 = vmatprep.subr.mxu0 0.0
        %1071 = vmatpush1.msra.mxu0 %v937
        %1072 = vmatprep.subr.mxu0 0.0
        %1073 = vmatpush1.msra.mxu0 %v940
        %1074 = vmatprep.subr.mxu0 0.0
        %1075 = vmatpush1.msra.mxu0 %v943
        %1076 = vmatprep.subr.mxu0 0.0
        %1077 = vmatpush1.msra.mxu0 %v946
        %1078 = vmatprep.subr.mxu0 0.0
        %1079 = vmatpush1.msra.mxu0 %v949
        %1080 = vmatprep.subr.mxu0 0.0
        %1081 = vmatpush1.msra.mxu0 %v952
        %1082 = vmatprep.subr.mxu0 0.0
        %1083 = vmatpush1.msra.mxu0 %v955
        %1084 = vmatprep.subr.mxu0 0.0
        %1085 = vmatpush1.msra.mxu0 %v958
        %1086 = vmatprep.subr.mxu0 0.0
        %1087 = vmatpush1.msra.mxu0 %v961
        %1088 = vmatprep.subr.mxu0 0.0
        %1089 = vmatpush1.msra.mxu0 %v964
        %1090 = vmatprep.subr.mxu0 0.0
        %1091 = vmatpush1.msra.mxu0 %v967
        %1092 = vmatprep.subr.mxu0 0.0
        %1093 = vmatpush1.msra.mxu0 %v970
        %1094 = vmatprep.subr.mxu0 0.0
        %1095 = vmatpush1.msra.mxu0 %v973
        %1096 = vmatprep.subr.mxu0 0.0
        %1097 = vmatpush1.msra.mxu0 %v976
        %1098 = vmatprep.subr.mxu0 0.0
        %1099 = vmatpush1.msra.mxu0 %v979
        %1100 = vmatprep.subr.mxu0 0.0
        %1101 = vmatpush1.msra.mxu0 0.0
        %1102 = vmatprep.subr.mxu0 0.0
        %1103 = vmatpush1.msra.mxu0 0.0
        %1104 = vmatprep.subr.mxu0 0.0
        %1105 = vmatpush1.msra.mxu0 0.0
        %1106 = vmatprep.subr.mxu0 0.0
        %1107 = vmatpush1.msra.mxu0 0.0
        %1108 = vmatprep.subr.mxu0 0.0
        %1109 = vmatpush1.msra.mxu0 0.0
        %1110 = vmatprep.subr.mxu0 0.0
        %1111 = vmatpush1.msra.mxu0 0.0
        %1112 = vmatprep.subr.mxu0 0.0
        %1113 = vmatpush1.msra.mxu0 0.0
        %1114 = vmatprep.subr.mxu0 0.0
        %1115 = vmatpush1.msra.mxu0 0.0
        %1116 = vmatprep.subr.mxu0 0.0
        %1117 = vmatpush1.msra.mxu0 0.0
        %1118 = vmatprep.subr.mxu0 0.0
        %1119 = vmatpush1.msra.mxu0 0.0
        %1120 = vmatprep.subr.mxu0 0.0
        %1121 = vmatpush1.msra.mxu0 0.0
        %1122 = vmatprep.subr.mxu0 0.0
        %1123 = vmatpush1.msra.mxu0 0.0
        %1124 = vmatprep.subr.mxu0 0.0
        %1125 = vmatpush1.msra.mxu0 0.0
        %1126 = vmatprep.subr.mxu0 0.0
        %1127 = vmatpush1.msra.mxu0 0.0
        %1128 = vmatprep.subr.mxu0 0.0
        %1129 = vmatpush1.msra.mxu0 0.0
        %1130 = vmatprep.subr.mxu0 0.0
        %1131 = vmatpush1.msra.mxu0 0.0
        %1132 = vmatprep.mubr.f32.mxu0 0.0
        %1133 = vmatmul.mubr.f32.gmra.mrb[0].mxu0 %v930
        %v1134 = vpop.f32.mrb[0].mxu0
        %v1135 = vadd.f32 %v993, %v1134
        %v1136 = vpop.f32.mrb[0].mxu0
        %1137 = vdwg.mxu0
        %s1138 = scalar_lea.vmem [#allocation2], 24
        %v1139 = vld [vmem:[%s1138] sm:$0xff]
        %v1140 = vld [vmem:[%s1138 + $0x8] sm:$0xff]
        %v1141 = vld [vmem:[%s1138 + $0x10] sm:$0xff]
        %v1142 = vadd.f32 %v1139, %v1064
        %v1143 = vxor.u32 %v1142, 2147483648
        %v1144 = vmul.f32 %v1143, 1.442695
        %v1145 = vpow.pop %v1144
        %v1146 = vadd.f32 %v1145, 1.0
        %v1147 = vrcp.pop %v1146
        %v1148 = vmul.f32 1.0, %v1147
        %v1149 = vadd.f32 %v1140, %v1066
        %v1150 = vxor.u32 %v1149, 2147483648
        %v1151 = vmul.f32 %v1150, 1.442695
        %v1152 = vpow.pop %v1151
        %v1153 = vadd.f32 %v1152, 1.0
        %v1154 = vrcp.pop %v1153
        %v1155 = vmul.f32 1.0, %v1154
        %v1156 = vmul.f32 %v1148, %v1135
        %v1157 = vadd.f32 %v1141, %v1156
        %v1158 = vtanh.pop %v1157
        %v1159 = vsub.f32 1.0, %v1155
        %v1160 = vmul.f32 %v1159, %v1158
        %v1161 = vmul.f32 %v1155, %v930
        %v1162 = vadd.f32 %v1160, %v1161
        %s1163 = sadd.s32 %s921, 1
        %p1164 = scmp.lt.s32.totalorder %s1163, 12
        %s1165 = scalar_select %p1164, 1, 0
        %s1166 = scvt.s32.f32 %s1165
        %v1167 = vstv %s1166
        %v1168 = vmul.f32 %v1167, %v1162
        %s1169 = ssub.f32 1.0, %s1166
        %v1170 = vstv %s1169
        %v1171 = vmul.f32 %v1170, %v930
        %v1172 = vadd.f32 %v1168, %v1171
        %s1173 = scalar_lea.vmem %s364, 8 [#allocation12]
        %1174 = vst [vmem:[%s1173] sm:$0xff] %v1172
        %v1175 = vld [vmem:[#allocation10] sm:$0xff]
        %v1176 = vld [vmem:[#allocation10 + $0x8] sm:$0xff]
        %v1177 = vld [vmem:[#allocation10 + $0x10] sm:$0xff]
        %v1178 = vld [vmem:[#allocation10 + $0x18] sm:$0xff]
        %v1179 = vld [vmem:[#allocation10 + $0x20] sm:$0xff]
        %v1180 = vld [vmem:[#allocation10 + $0x28] sm:$0xff]
        %v1181 = vld [vmem:[#allocation10 + $0x30] sm:$0xff]
        %v1182 = vld [vmem:[#allocation10 + $0x38] sm:$0xff]
        %v1183 = vld [vmem:[#allocation10 + $0x40] sm:$0xff]
        %v1184 = vld [vmem:[#allocation10 + $0x48] sm:$0xff]
        %v1185 = vld [vmem:[#allocation10 + $0x50] sm:$0xff]
        %v1186 = vld [vmem:[#allocation10 + $0x58] sm:$0xff]
        %v1187 = vld [vmem:[#allocation10 + $0x60] sm:$0xff]
        %v1188 = vld [vmem:[#allocation10 + $0x68] sm:$0xff]
        %v1189 = vld [vmem:[#allocation10 + $0x70] sm:$0xff]
        %v1190 = vld [vmem:[#allocation10 + $0x78] sm:$0xff]
        %v1191 = vld [vmem:[#allocation10 + $0x80] sm:$0xff]
        %v1192 = vld [vmem:[#allocation10 + $0x88] sm:$0xff]
        %v1193 = vld [vmem:[#allocation10 + $0x90] sm:$0xff]
        %v1194 = vld [vmem:[#allocation10 + $0x98] sm:$0xff]
        %v1195 = vld [vmem:[#allocation10 + $0xa0] sm:$0xff]
        %v1196 = vld [vmem:[#allocation10 + $0xa8] sm:$0xff]
        %v1197 = vld [vmem:[#allocation10 + $0xb0] sm:$0xff]
        %v1198 = vld [vmem:[#allocation10 + $0xb8] sm:$0xff]
        %v1199 = vld [vmem:[#allocation10 + $0xc0] sm:$0xff]
        %v1200 = vld [vmem:[#allocation10 + $0xc8] sm:$0xff]
        %v1201 = vld [vmem:[#allocation10 + $0xd0] sm:$0xff]
        %v1202 = vld [vmem:[#allocation10 + $0xd8] sm:$0xff]
        %v1203 = vld [vmem:[#allocation10 + $0xe0] sm:$0xff]
        %v1204 = vld [vmem:[#allocation10 + $0xe8] sm:$0xff]
        %v1205 = vld [vmem:[#allocation10 + $0xf0] sm:$0xff]
        %v1206 = vld [vmem:[#allocation10 + $0xf8] sm:$0xff]
        %v1207 = vld [vmem:[#allocation10 + $0x100] sm:$0xff]
        %v1208 = vld [vmem:[#allocation10 + $0x108] sm:$0xff]
        %v1209 = vld [vmem:[#allocation10 + $0x110] sm:$0xff]
        %v1210 = vld [vmem:[#allocation10 + $0x118] sm:$0xff]
        %v1211 = vld [vmem:[#allocation10 + $0x120] sm:$0xff]
        %v1212 = vld [vmem:[#allocation10 + $0x128] sm:$0xff]
        %v1213 = vld [vmem:[#allocation10 + $0x130] sm:$0xff]
        %v1214 = vld [vmem:[#allocation10 + $0x138] sm:$0xff]
        %v1215 = vld [vmem:[#allocation10 + $0x140] sm:$0xff]
        %v1216 = vld [vmem:[#allocation10 + $0x148] sm:$0xff]
        %v1217 = vld [vmem:[#allocation10 + $0x150] sm:$0xff]
        %v1218 = vld [vmem:[#allocation10 + $0x158] sm:$0xff]
        %v1219 = vld [vmem:[#allocation10 + $0x160] sm:$0xff]
        %v1220 = vld [vmem:[#allocation10 + $0x168] sm:$0xff]
        %v1221 = vld [vmem:[#allocation10 + $0x170] sm:$0xff]
        %v1222 = vld [vmem:[#allocation10 + $0x178] sm:$0xff]
        %v1223 = vld [vmem:[%s5] sm:$0x7]
        %v1225 = vlaneseq
        %v1226 = vshrl.u32 %v1225, 7
        %v1227 = vsub.s32 0, %v1226
        %v1228 = vrot.slane %v1223, %v1227
        %v1229 = vlaneseq
        %v1230 = vshrl.u32 %v1229, 7
        %v1231 = vsub.s32 1, %v1230
        %v1232 = vrot.slane %v1223, %v1231
        %v1233 = vlaneseq
        %v1234 = vshrl.u32 %v1233, 7
        %v1235 = vsub.s32 2, %v1234
        %v1236 = vrot.slane %v1223, %v1235
        %1240 = vmatprep.subr.mxu0 %v1176
        %1241 = vmatpush1.msra.mxu0 %v1175
        %1242 = vmatprep.subr.mxu0 %v1179
        %1243 = vmatpush1.msra.mxu0 %v1178
        %1244 = vmatprep.subr.mxu0 %v1182
        %1245 = vmatpush1.msra.mxu0 %v1181
        %1246 = vmatprep.subr.mxu0 %v1185
        %1247 = vmatpush1.msra.mxu0 %v1184
        %1248 = vmatprep.subr.mxu0 %v1188
        %1249 = vmatpush1.msra.mxu0 %v1187
        %1250 = vmatprep.subr.mxu0 %v1191
        %1251 = vmatpush1.msra.mxu0 %v1190
        %1252 = vmatprep.subr.mxu0 %v1194
        %1253 = vmatpush1.msra.mxu0 %v1193
        %1254 = vmatprep.subr.mxu0 %v1197
        %1255 = vmatpush1.msra.mxu0 %v1196
        %1256 = vmatprep.subr.mxu0 %v1200
        %1257 = vmatpush1.msra.mxu0 %v1199
        %1258 = vmatprep.subr.mxu0 %v1203
        %1259 = vmatpush1.msra.mxu0 %v1202
        %1260 = vmatprep.subr.mxu0 %v1206
        %1261 = vmatpush1.msra.mxu0 %v1205
        %1262 = vmatprep.subr.mxu0 %v1209
        %1263 = vmatpush1.msra.mxu0 %v1208
        %1264 = vmatprep.subr.mxu0 %v1212
        %1265 = vmatpush1.msra.mxu0 %v1211
        %1266 = vmatprep.subr.mxu0 %v1215
        %1267 = vmatpush1.msra.mxu0 %v1214
        %1268 = vmatprep.subr.mxu0 %v1218
        %1269 = vmatpush1.msra.mxu0 %v1217
        %1270 = vmatprep.subr.mxu0 %v1221
        %1271 = vmatpush1.msra.mxu0 %v1220
        %1272 = vmatprep.subr.mxu0 0.0
        %1273 = vmatpush1.msra.mxu0 0.0
        %1274 = vmatprep.subr.mxu0 0.0
        %1275 = vmatpush1.msra.mxu0 0.0
        %1276 = vmatprep.subr.mxu0 0.0
        %1277 = vmatpush1.msra.mxu0 0.0
        %1278 = vmatprep.subr.mxu0 0.0
        %1279 = vmatpush1.msra.mxu0 0.0
        %1280 = vmatprep.subr.mxu0 0.0
        %1281 = vmatpush1.msra.mxu0 0.0
        %1282 = vmatprep.subr.mxu0 0.0
        %1283 = vmatpush1.msra.mxu0 0.0
        %1284 = vmatprep.subr.mxu0 0.0
        %1285 = vmatpush1.msra.mxu0 0.0
        %1286 = vmatprep.subr.mxu0 0.0
        %1287 = vmatpush1.msra.mxu0 0.0
        %1288 = vmatprep.subr.mxu0 0.0
        %1289 = vmatpush1.msra.mxu0 0.0
        %1290 = vmatprep.subr.mxu0 0.0
        %1291 = vmatpush1.msra.mxu0 0.0
        %1292 = vmatprep.subr.mxu0 0.0
        %1293 = vmatpush1.msra.mxu0 0.0
        %1294 = vmatprep.subr.mxu0 0.0
        %1295 = vmatpush1.msra.mxu0 0.0
        %1296 = vmatprep.subr.mxu0 0.0
        %1297 = vmatpush1.msra.mxu0 0.0
        %1298 = vmatprep.subr.mxu0 0.0
        %1299 = vmatpush1.msra.mxu0 0.0
        %1300 = vmatprep.subr.mxu0 0.0
        %1301 = vmatpush1.msra.mxu0 0.0
        %1302 = vmatprep.subr.mxu0 0.0
        %1303 = vmatpush1.msra.mxu0 0.0
        %1304 = vmatprep.mubr.f32.mxu0 0.0
        %1305 = vmatmul.mubr.f32.gmra.mrb[0].mxu0 %v1172
        %v1306 = vpop.f32.mrb[0].mxu0
        %v1307 = vadd.f32 %v1228, %v1306
        %v1308 = vpop.f32.mrb[0].mxu0
        %v1309 = vadd.f32 %v1232, %v1308
        %1310 = vdwg.mxu0
        %1311 = vmatprep.subr.mxu0 0.0
        %1312 = vmatpush1.msra.mxu0 %v1177
        %1313 = vmatprep.subr.mxu0 0.0
        %1314 = vmatpush1.msra.mxu0 %v1180
        %1315 = vmatprep.subr.mxu0 0.0
        %1316 = vmatpush1.msra.mxu0 %v1183
        %1317 = vmatprep.subr.mxu0 0.0
        %1318 = vmatpush1.msra.mxu0 %v1186
        %1319 = vmatprep.subr.mxu0 0.0
        %1320 = vmatpush1.msra.mxu0 %v1189
        %1321 = vmatprep.subr.mxu0 0.0
        %1322 = vmatpush1.msra.mxu0 %v1192
        %1323 = vmatprep.subr.mxu0 0.0
        %1324 = vmatpush1.msra.mxu0 %v1195
        %1325 = vmatprep.subr.mxu0 0.0
        %1326 = vmatpush1.msra.mxu0 %v1198
        %1327 = vmatprep.subr.mxu0 0.0
        %1328 = vmatpush1.msra.mxu0 %v1201
        %1329 = vmatprep.subr.mxu0 0.0
        %1330 = vmatpush1.msra.mxu0 %v1204
        %1331 = vmatprep.subr.mxu0 0.0
        %1332 = vmatpush1.msra.mxu0 %v1207
        %1333 = vmatprep.subr.mxu0 0.0
        %1334 = vmatpush1.msra.mxu0 %v1210
        %1335 = vmatprep.subr.mxu0 0.0
        %1336 = vmatpush1.msra.mxu0 %v1213
        %1337 = vmatprep.subr.mxu0 0.0
        %1338 = vmatpush1.msra.mxu0 %v1216
        %1339 = vmatprep.subr.mxu0 0.0
        %1340 = vmatpush1.msra.mxu0 %v1219
        %1341 = vmatprep.subr.mxu0 0.0
        %1342 = vmatpush1.msra.mxu0 %v1222
        %1343 = vmatprep.subr.mxu0 0.0
        %1344 = vmatpush1.msra.mxu0 0.0
        %1345 = vmatprep.subr.mxu0 0.0
        %1346 = vmatpush1.msra.mxu0 0.0
        %1347 = vmatprep.subr.mxu0 0.0
        %1348 = vmatpush1.msra.mxu0 0.0
        %1349 = vmatprep.subr.mxu0 0.0
        %1350 = vmatpush1.msra.mxu0 0.0
        %1351 = vmatprep.subr.mxu0 0.0
        %1352 = vmatpush1.msra.mxu0 0.0
        %1353 = vmatprep.subr.mxu0 0.0
        %1354 = vmatpush1.msra.mxu0 0.0
        %1355 = vmatprep.subr.mxu0 0.0
        %1356 = vmatpush1.msra.mxu0 0.0
        %1357 = vmatprep.subr.mxu0 0.0
        %1358 = vmatpush1.msra.mxu0 0.0
        %1359 = vmatprep.subr.mxu0 0.0
        %1360 = vmatpush1.msra.mxu0 0.0
        %1361 = vmatprep.subr.mxu0 0.0
        %1362 = vmatpush1.msra.mxu0 0.0
        %1363 = vmatprep.subr.mxu0 0.0
        %1364 = vmatpush1.msra.mxu0 0.0
        %1365 = vmatprep.subr.mxu0 0.0
        %1366 = vmatpush1.msra.mxu0 0.0
        %1367 = vmatprep.subr.mxu0 0.0
        %1368 = vmatpush1.msra.mxu0 0.0
        %1369 = vmatprep.subr.mxu0 0.0
        %1370 = vmatpush1.msra.mxu0 0.0
        %1371 = vmatprep.subr.mxu0 0.0
        %1372 = vmatpush1.msra.mxu0 0.0
        %1373 = vmatprep.subr.mxu0 0.0
        %1374 = vmatpush1.msra.mxu0 0.0
        %1375 = vmatprep.mubr.f32.mxu0 0.0
        %1376 = vmatmul.mubr.f32.gmra.mrb[0].mxu0 %v1172
        %v1377 = vpop.f32.mrb[0].mxu0
        %v1378 = vadd.f32 %v1236, %v1377
        %v1379 = vpop.f32.mrb[0].mxu0
        %1380 = vdwg.mxu0
        %s1381 = scalar_lea.vmem [#allocation2], 48
        %v1382 = vld [vmem:[%s1381] sm:$0xff]
        %v1383 = vld [vmem:[%s1381 + $0x8] sm:$0xff]
        %v1384 = vld [vmem:[%s1381 + $0x10] sm:$0xff]
        %v1385 = vadd.f32 %v1382, %v1307
        %v1386 = vxor.u32 %v1385, 2147483648
        %v1387 = vmul.f32 %v1386, 1.442695
        %v1388 = vpow.pop %v1387
        %v1389 = vadd.f32 %v1388, 1.0
        %v1390 = vrcp.pop %v1389
        %v1391 = vmul.f32 1.0, %v1390
        %v1392 = vadd.f32 %v1383, %v1309
        %v1393 = vxor.u32 %v1392, 2147483648
        %v1394 = vmul.f32 %v1393, 1.442695
        %v1395 = vpow.pop %v1394
        %v1396 = vadd.f32 %v1395, 1.0
        %v1397 = vrcp.pop %v1396
        %v1398 = vmul.f32 1.0, %v1397
        %v1399 = vmul.f32 %v1391, %v1378
        %v1400 = vadd.f32 %v1384, %v1399
        %v1401 = vtanh.pop %v1400
        %v1402 = vsub.f32 1.0, %v1398
        %v1403 = vmul.f32 %v1402, %v1401
        %v1404 = vmul.f32 %v1398, %v1172
        %v1405 = vadd.f32 %v1403, %v1404
        %s1406 = sadd.s32 %s921, 2
        %p1407 = scmp.lt.s32.totalorder %s1406, 12
        %s1408 = scalar_select %p1407, 1, 0
        %s1409 = scvt.s32.f32 %s1408
        %v1410 = vstv %s1409
        %v1411 = vmul.f32 %v1410, %v1405
        %s1412 = ssub.f32 1.0, %s1409
        %v1413 = vstv %s1412
        %v1414 = vmul.f32 %v1413, %v1172
        %v1415 = vadd.f32 %v1411, %v1414
        %s1416 = scalar_lea.vmem %s364, 16 [#allocation12]
        %1417 = vst [vmem:[%s1416] sm:$0xff] %v1415
        %v1418 = vld [vmem:[#allocation10] sm:$0xff]
        %v1419 = vld [vmem:[#allocation10 + $0x8] sm:$0xff]
        %v1420 = vld [vmem:[#allocation10 + $0x10] sm:$0xff]
        %v1421 = vld [vmem:[#allocation10 + $0x18] sm:$0xff]
        %v1422 = vld [vmem:[#allocation10 + $0x20] sm:$0xff]
        %v1423 = vld [vmem:[#allocation10 + $0x28] sm:$0xff]
        %v1424 = vld [vmem:[#allocation10 + $0x30] sm:$0xff]
        %v1425 = vld [vmem:[#allocation10 + $0x38] sm:$0xff]
        %v1426 = vld [vmem:[#allocation10 + $0x40] sm:$0xff]
        %v1427 = vld [vmem:[#allocation10 + $0x48] sm:$0xff]
        %v1428 = vld [vmem:[#allocation10 + $0x50] sm:$0xff]
        %v1429 = vld [vmem:[#allocation10 + $0x58] sm:$0xff]
        %v1430 = vld [vmem:[#allocation10 + $0x60] sm:$0xff]
        %v1431 = vld [vmem:[#allocation10 + $0x68] sm:$0xff]
        %v1432 = vld [vmem:[#allocation10 + $0x70] sm:$0xff]
        %v1433 = vld [vmem:[#allocation10 + $0x78] sm:$0xff]
        %v1434 = vld [vmem:[#allocation10 + $0x80] sm:$0xff]
        %v1435 = vld [vmem:[#allocation10 + $0x88] sm:$0xff]
        %v1436 = vld [vmem:[#allocation10 + $0x90] sm:$0xff]
        %v1437 = vld [vmem:[#allocation10 + $0x98] sm:$0xff]
        %v1438 = vld [vmem:[#allocation10 + $0xa0] sm:$0xff]
        %v1439 = vld [vmem:[#allocation10 + $0xa8] sm:$0xff]
        %v1440 = vld [vmem:[#allocation10 + $0xb0] sm:$0xff]
        %v1441 = vld [vmem:[#allocation10 + $0xb8] sm:$0xff]
        %v1442 = vld [vmem:[#allocation10 + $0xc0] sm:$0xff]
        %v1443 = vld [vmem:[#allocation10 + $0xc8] sm:$0xff]
        %v1444 = vld [vmem:[#allocation10 + $0xd0] sm:$0xff]
        %v1445 = vld [vmem:[#allocation10 + $0xd8] sm:$0xff]
        %v1446 = vld [vmem:[#allocation10 + $0xe0] sm:$0xff]
        %v1447 = vld [vmem:[#allocation10 + $0xe8] sm:$0xff]
        %v1448 = vld [vmem:[#allocation10 + $0xf0] sm:$0xff]
        %v1449 = vld [vmem:[#allocation10 + $0xf8] sm:$0xff]
        %v1450 = vld [vmem:[#allocation10 + $0x100] sm:$0xff]
        %v1451 = vld [vmem:[#allocation10 + $0x108] sm:$0xff]
        %v1452 = vld [vmem:[#allocation10 + $0x110] sm:$0xff]
        %v1453 = vld [vmem:[#allocation10 + $0x118] sm:$0xff]
        %v1454 = vld [vmem:[#allocation10 + $0x120] sm:$0xff]
        %v1455 = vld [vmem:[#allocation10 + $0x128] sm:$0xff]
        %v1456 = vld [vmem:[#allocation10 + $0x130] sm:$0xff]
        %v1457 = vld [vmem:[#allocation10 + $0x138] sm:$0xff]
        %v1458 = vld [vmem:[#allocation10 + $0x140] sm:$0xff]
        %v1459 = vld [vmem:[#allocation10 + $0x148] sm:$0xff]
        %v1460 = vld [vmem:[#allocation10 + $0x150] sm:$0xff]
        %v1461 = vld [vmem:[#allocation10 + $0x158] sm:$0xff]
        %v1462 = vld [vmem:[#allocation10 + $0x160] sm:$0xff]
        %v1463 = vld [vmem:[#allocation10 + $0x168] sm:$0xff]
        %v1464 = vld [vmem:[#allocation10 + $0x170] sm:$0xff]
        %v1465 = vld [vmem:[#allocation10 + $0x178] sm:$0xff]
        %v1466 = vld [vmem:[%s5] sm:$0x7]
        %v1468 = vlaneseq
        %v1469 = vshrl.u32 %v1468, 7
        %v1470 = vsub.s32 0, %v1469
        %v1471 = vrot.slane %v1466, %v1470
        %v1472 = vlaneseq
        %v1473 = vshrl.u32 %v1472, 7
        %v1474 = vsub.s32 1, %v1473
        %v1475 = vrot.slane %v1466, %v1474
        %v1476 = vlaneseq
        %v1477 = vshrl.u32 %v1476, 7
        %v1478 = vsub.s32 2, %v1477
        %v1479 = vrot.slane %v1466, %v1478
        %1483 = vmatprep.subr.mxu0 %v1419
        %1484 = vmatpush1.msra.mxu0 %v1418
        %1485 = vmatprep.subr.mxu0 %v1422
        %1486 = vmatpush1.msra.mxu0 %v1421
        %1487 = vmatprep.subr.mxu0 %v1425
        %1488 = vmatpush1.msra.mxu0 %v1424
        %1489 = vmatprep.subr.mxu0 %v1428
        %1490 = vmatpush1.msra.mxu0 %v1427
        %1491 = vmatprep.subr.mxu0 %v1431
        %1492 = vmatpush1.msra.mxu0 %v1430
        %1493 = vmatprep.subr.mxu0 %v1434
        %1494 = vmatpush1.msra.mxu0 %v1433
        %1495 = vmatprep.subr.mxu0 %v1437
        %1496 = vmatpush1.msra.mxu0 %v1436
        %1497 = vmatprep.subr.mxu0 %v1440
        %1498 = vmatpush1.msra.mxu0 %v1439
        %1499 = vmatprep.subr.mxu0 %v1443
        %1500 = vmatpush1.msra.mxu0 %v1442
        %1501 = vmatprep.subr.mxu0 %v1446
        %1502 = vmatpush1.msra.mxu0 %v1445
        %1503 = vmatprep.subr.mxu0 %v1449
        %1504 = vmatpush1.msra.mxu0 %v1448
        %1505 = vmatprep.subr.mxu0 %v1452
        %1506 = vmatpush1.msra.mxu0 %v1451
        %1507 = vmatprep.subr.mxu0 %v1455
        %1508 = vmatpush1.msra.mxu0 %v1454
        %1509 = vmatprep.subr.mxu0 %v1458
        %1510 = vmatpush1.msra.mxu0 %v1457
        %1511 = vmatprep.subr.mxu0 %v1461
        %1512 = vmatpush1.msra.mxu0 %v1460
        %1513 = vmatprep.subr.mxu0 %v1464
        %1514 = vmatpush1.msra.mxu0 %v1463
        %1515 = vmatprep.subr.mxu0 0.0
        %1516 = vmatpush1.msra.mxu0 0.0
        %1517 = vmatprep.subr.mxu0 0.0
        %1518 = vmatpush1.msra.mxu0 0.0
        %1519 = vmatprep.subr.mxu0 0.0
        %1520 = vmatpush1.msra.mxu0 0.0
        %1521 = vmatprep.subr.mxu0 0.0
        %1522 = vmatpush1.msra.mxu0 0.0
        %1523 = vmatprep.subr.mxu0 0.0
        %1524 = vmatpush1.msra.mxu0 0.0
        %1525 = vmatprep.subr.mxu0 0.0
        %1526 = vmatpush1.msra.mxu0 0.0
        %1527 = vmatprep.subr.mxu0 0.0
        %1528 = vmatpush1.msra.mxu0 0.0
        %1529 = vmatprep.subr.mxu0 0.0
        %1530 = vmatpush1.msra.mxu0 0.0
        %1531 = vmatprep.subr.mxu0 0.0
        %1532 = vmatpush1.msra.mxu0 0.0
        %1533 = vmatprep.subr.mxu0 0.0
        %1534 = vmatpush1.msra.mxu0 0.0
        %1535 = vmatprep.subr.mxu0 0.0
        %1536 = vmatpush1.msra.mxu0 0.0
        %1537 = vmatprep.subr.mxu0 0.0
        %1538 = vmatpush1.msra.mxu0 0.0
        %1539 = vmatprep.subr.mxu0 0.0
        %1540 = vmatpush1.msra.mxu0 0.0
        %1541 = vmatprep.subr.mxu0 0.0
        %1542 = vmatpush1.msra.mxu0 0.0
        %1543 = vmatprep.subr.mxu0 0.0
        %1544 = vmatpush1.msra.mxu0 0.0
        %1545 = vmatprep.subr.mxu0 0.0
        %1546 = vmatpush1.msra.mxu0 0.0
        %1547 = vmatprep.mubr.f32.mxu0 0.0
        %1548 = vmatmul.mubr.f32.gmra.mrb[0].mxu0 %v1415
        %v1549 = vpop.f32.mrb[0].mxu0
        %v1550 = vadd.f32 %v1471, %v1549
        %v1551 = vpop.f32.mrb[0].mxu0
        %v1552 = vadd.f32 %v1475, %v1551
        %1553 = vdwg.mxu0
        %1554 = vmatprep.subr.mxu0 0.0
        %1555 = vmatpush1.msra.mxu0 %v1420
        %1556 = vmatprep.subr.mxu0 0.0
        %1557 = vmatpush1.msra.mxu0 %v1423
        %1558 = vmatprep.subr.mxu0 0.0
        %1559 = vmatpush1.msra.mxu0 %v1426
        %1560 = vmatprep.subr.mxu0 0.0
        %1561 = vmatpush1.msra.mxu0 %v1429
        %1562 = vmatprep.subr.mxu0 0.0
        %1563 = vmatpush1.msra.mxu0 %v1432
        %1564 = vmatprep.subr.mxu0 0.0
        %1565 = vmatpush1.msra.mxu0 %v1435
        %1566 = vmatprep.subr.mxu0 0.0
        %1567 = vmatpush1.msra.mxu0 %v1438
        %1568 = vmatprep.subr.mxu0 0.0
        %1569 = vmatpush1.msra.mxu0 %v1441
        %1570 = vmatprep.subr.mxu0 0.0
        %1571 = vmatpush1.msra.mxu0 %v1444
        %1572 = vmatprep.subr.mxu0 0.0
        %1573 = vmatpush1.msra.mxu0 %v1447
        %1574 = vmatprep.subr.mxu0 0.0
        %1575 = vmatpush1.msra.mxu0 %v1450
        %1576 = vmatprep.subr.mxu0 0.0
        %1577 = vmatpush1.msra.mxu0 %v1453
        %1578 = vmatprep.subr.mxu0 0.0
        %1579 = vmatpush1.msra.mxu0 %v1456
        %1580 = vmatprep.subr.mxu0 0.0
        %1581 = vmatpush1.msra.mxu0 %v1459
        %1582 = vmatprep.subr.mxu0 0.0
        %1583 = vmatpush1.msra.mxu0 %v1462
        %1584 = vmatprep.subr.mxu0 0.0
        %1585 = vmatpush1.msra.mxu0 %v1465
        %1586 = vmatprep.subr.mxu0 0.0
        %1587 = vmatpush1.msra.mxu0 0.0
        %1588 = vmatprep.subr.mxu0 0.0
        %1589 = vmatpush1.msra.mxu0 0.0
        %1590 = vmatprep.subr.mxu0 0.0
        %1591 = vmatpush1.msra.mxu0 0.0
        %1592 = vmatprep.subr.mxu0 0.0
        %1593 = vmatpush1.msra.mxu0 0.0
        %1594 = vmatprep.subr.mxu0 0.0
        %1595 = vmatpush1.msra.mxu0 0.0
        %1596 = vmatprep.subr.mxu0 0.0
        %1597 = vmatpush1.msra.mxu0 0.0
        %1598 = vmatprep.subr.mxu0 0.0
        %1599 = vmatpush1.msra.mxu0 0.0
        %1600 = vmatprep.subr.mxu0 0.0
        %1601 = vmatpush1.msra.mxu0 0.0
        %1602 = vmatprep.subr.mxu0 0.0
        %1603 = vmatpush1.msra.mxu0 0.0
        %1604 = vmatprep.subr.mxu0 0.0
        %1605 = vmatpush1.msra.mxu0 0.0
        %1606 = vmatprep.subr.mxu0 0.0
        %1607 = vmatpush1.msra.mxu0 0.0
        %1608 = vmatprep.subr.mxu0 0.0
        %1609 = vmatpush1.msra.mxu0 0.0
        %1610 = vmatprep.subr.mxu0 0.0
        %1611 = vmatpush1.msra.mxu0 0.0
        %1612 = vmatprep.subr.mxu0 0.0
        %1613 = vmatpush1.msra.mxu0 0.0
        %1614 = vmatprep.subr.mxu0 0.0
        %1615 = vmatpush1.msra.mxu0 0.0
        %1616 = vmatprep.subr.mxu0 0.0
        %1617 = vmatpush1.msra.mxu0 0.0
        %1618 = vmatprep.mubr.f32.mxu0 0.0
        %1619 = vmatmul.mubr.f32.gmra.mrb[0].mxu0 %v1415
        %v1620 = vpop.f32.mrb[0].mxu0
        %v1621 = vadd.f32 %v1479, %v1620
        %v1622 = vpop.f32.mrb[0].mxu0
        %1623 = vdwg.mxu0
        %s1624 = scalar_lea.vmem [#allocation2], 72
        %v1625 = vld [vmem:[%s1624] sm:$0xff]
        %v1626 = vld [vmem:[%s1624 + $0x8] sm:$0xff]
        %v1627 = vld [vmem:[%s1624 + $0x10] sm:$0xff]
        %v1628 = vadd.f32 %v1625, %v1550
        %v1629 = vxor.u32 %v1628, 2147483648
        %v1630 = vmul.f32 %v1629, 1.442695
        %v1631 = vpow.pop %v1630
        %v1632 = vadd.f32 %v1631, 1.0
        %v1633 = vrcp.pop %v1632
        %v1634 = vmul.f32 1.0, %v1633
        %v1635 = vadd.f32 %v1626, %v1552
        %v1636 = vxor.u32 %v1635, 2147483648
        %v1637 = vmul.f32 %v1636, 1.442695
        %v1638 = vpow.pop %v1637
        %v1639 = vadd.f32 %v1638, 1.0
        %v1640 = vrcp.pop %v1639
        %v1641 = vmul.f32 1.0, %v1640
        %v1642 = vmul.f32 %v1634, %v1621
        %v1643 = vadd.f32 %v1627, %v1642
        %v1644 = vtanh.pop %v1643
        %v1645 = vsub.f32 1.0, %v1641
        %v1646 = vmul.f32 %v1645, %v1644
        %v1647 = vmul.f32 %v1641, %v1415
        %v1648 = vadd.f32 %v1646, %v1647
        %s1649 = sadd.s32 %s921, 3
        %p1650 = scmp.lt.s32.totalorder %s1649, 12
        %s1651 = scalar_select %p1650, 1, 0
        %s1652 = scvt.s32.f32 %s1651
        %v1653 = vstv %s1652
        %v1654 = vmul.f32 %v1653, %v1648
        %s1655 = ssub.f32 1.0, %s1652
        %v1656 = vstv %s1655
        %v1657 = vmul.f32 %v1656, %v1415
        %v1658 = vadd.f32 %v1654, %v1657
        %s1659 = scalar_lea.vmem %s364, 24 [#allocation12]
        %1660 = vst [vmem:[%s1659] sm:$0xff] %v1658
        %v1661 = vld [vmem:[#allocation10] sm:$0xff]
        %v1662 = vld [vmem:[#allocation10 + $0x8] sm:$0xff]
        %v1663 = vld [vmem:[#allocation10 + $0x10] sm:$0xff]
        %v1664 = vld [vmem:[#allocation10 + $0x18] sm:$0xff]
        %v1665 = vld [vmem:[#allocation10 + $0x20] sm:$0xff]
        %v1666 = vld [vmem:[#allocation10 + $0x28] sm:$0xff]
        %v1667 = vld [vmem:[#allocation10 + $0x30] sm:$0xff]
        %v1668 = vld [vmem:[#allocation10 + $0x38] sm:$0xff]
        %v1669 = vld [vmem:[#allocation10 + $0x40] sm:$0xff]
        %v1670 = vld [vmem:[#allocation10 + $0x48] sm:$0xff]
        %v1671 = vld [vmem:[#allocation10 + $0x50] sm:$0xff]
        %v1672 = vld [vmem:[#allocation10 + $0x58] sm:$0xff]
        %v1673 = vld [vmem:[#allocation10 + $0x60] sm:$0xff]
        %v1674 = vld [vmem:[#allocation10 + $0x68] sm:$0xff]
        %v1675 = vld [vmem:[#allocation10 + $0x70] sm:$0xff]
        %v1676 = vld [vmem:[#allocation10 + $0x78] sm:$0xff]
        %v1677 = vld [vmem:[#allocation10 + $0x80] sm:$0xff]
        %v1678 = vld [vmem:[#allocation10 + $0x88] sm:$0xff]
        %v1679 = vld [vmem:[#allocation10 + $0x90] sm:$0xff]
        %v1680 = vld [vmem:[#allocation10 + $0x98] sm:$0xff]
        %v1681 = vld [vmem:[#allocation10 + $0xa0] sm:$0xff]
        %v1682 = vld [vmem:[#allocation10 + $0xa8] sm:$0xff]
        %v1683 = vld [vmem:[#allocation10 + $0xb0] sm:$0xff]
        %v1684 = vld [vmem:[#allocation10 + $0xb8] sm:$0xff]
        %v1685 = vld [vmem:[#allocation10 + $0xc0] sm:$0xff]
        %v1686 = vld [vmem:[#allocation10 + $0xc8] sm:$0xff]
        %v1687 = vld [vmem:[#allocation10 + $0xd0] sm:$0xff]
        %v1688 = vld [vmem:[#allocation10 + $0xd8] sm:$0xff]
        %v1689 = vld [vmem:[#allocation10 + $0xe0] sm:$0xff]
        %v1690 = vld [vmem:[#allocation10 + $0xe8] sm:$0xff]
        %v1691 = vld [vmem:[#allocation10 + $0xf0] sm:$0xff]
        %v1692 = vld [vmem:[#allocation10 + $0xf8] sm:$0xff]
        %v1693 = vld [vmem:[#allocation10 + $0x100] sm:$0xff]
        %v1694 = vld [vmem:[#allocation10 + $0x108] sm:$0xff]
        %v1695 = vld [vmem:[#allocation10 + $0x110] sm:$0xff]
        %v1696 = vld [vmem:[#allocation10 + $0x118] sm:$0xff]
        %v1697 = vld [vmem:[#allocation10 + $0x120] sm:$0xff]
        %v1698 = vld [vmem:[#allocation10 + $0x128] sm:$0xff]
        %v1699 = vld [vmem:[#allocation10 + $0x130] sm:$0xff]
        %v1700 = vld [vmem:[#allocation10 + $0x138] sm:$0xff]
        %v1701 = vld [vmem:[#allocation10 + $0x140] sm:$0xff]
        %v1702 = vld [vmem:[#allocation10 + $0x148] sm:$0xff]
        %v1703 = vld [vmem:[#allocation10 + $0x150] sm:$0xff]
        %v1704 = vld [vmem:[#allocation10 + $0x158] sm:$0xff]
        %v1705 = vld [vmem:[#allocation10 + $0x160] sm:$0xff]
        %v1706 = vld [vmem:[#allocation10 + $0x168] sm:$0xff]
        %v1707 = vld [vmem:[#allocation10 + $0x170] sm:$0xff]
        %v1708 = vld [vmem:[#allocation10 + $0x178] sm:$0xff]
        %v1709 = vld [vmem:[%s5] sm:$0x7]
        %v1711 = vlaneseq
        %v1712 = vshrl.u32 %v1711, 7
        %v1713 = vsub.s32 0, %v1712
        %v1714 = vrot.slane %v1709, %v1713
        %v1715 = vlaneseq
        %v1716 = vshrl.u32 %v1715, 7
        %v1717 = vsub.s32 1, %v1716
        %v1718 = vrot.slane %v1709, %v1717
        %v1719 = vlaneseq
        %v1720 = vshrl.u32 %v1719, 7
        %v1721 = vsub.s32 2, %v1720
        %v1722 = vrot.slane %v1709, %v1721
        %1726 = vmatprep.subr.mxu0 %v1662
        %1727 = vmatpush1.msra.mxu0 %v1661
        %1728 = vmatprep.subr.mxu0 %v1665
        %1729 = vmatpush1.msra.mxu0 %v1664
        %1730 = vmatprep.subr.mxu0 %v1668
        %1731 = vmatpush1.msra.mxu0 %v1667
        %1732 = vmatprep.subr.mxu0 %v1671
        %1733 = vmatpush1.msra.mxu0 %v1670
        %1734 = vmatprep.subr.mxu0 %v1674
        %1735 = vmatpush1.msra.mxu0 %v1673
        %1736 = vmatprep.subr.mxu0 %v1677
        %1737 = vmatpush1.msra.mxu0 %v1676
        %1738 = vmatprep.subr.mxu0 %v1680
        %1739 = vmatpush1.msra.mxu0 %v1679
        %1740 = vmatprep.subr.mxu0 %v1683
        %1741 = vmatpush1.msra.mxu0 %v1682
        %1742 = vmatprep.subr.mxu0 %v1686
        %1743 = vmatpush1.msra.mxu0 %v1685
        %1744 = vmatprep.subr.mxu0 %v1689
        %1745 = vmatpush1.msra.mxu0 %v1688
        %1746 = vmatprep.subr.mxu0 %v1692
        %1747 = vmatpush1.msra.mxu0 %v1691
        %1748 = vmatprep.subr.mxu0 %v1695
        %1749 = vmatpush1.msra.mxu0 %v1694
        %1750 = vmatprep.subr.mxu0 %v1698
        %1751 = vmatpush1.msra.mxu0 %v1697
        %1752 = vmatprep.subr.mxu0 %v1701
        %1753 = vmatpush1.msra.mxu0 %v1700
        %1754 = vmatprep.subr.mxu0 %v1704
        %1755 = vmatpush1.msra.mxu0 %v1703
        %1756 = vmatprep.subr.mxu0 %v1707
        %1757 = vmatpush1.msra.mxu0 %v1706
        %1758 = vmatprep.subr.mxu0 0.0
        %1759 = vmatpush1.msra.mxu0 0.0
        %1760 = vmatprep.subr.mxu0 0.0
        %1761 = vmatpush1.msra.mxu0 0.0
        %1762 = vmatprep.subr.mxu0 0.0
        %1763 = vmatpush1.msra.mxu0 0.0
        %1764 = vmatprep.subr.mxu0 0.0
        %1765 = vmatpush1.msra.mxu0 0.0
        %1766 = vmatprep.subr.mxu0 0.0
        %1767 = vmatpush1.msra.mxu0 0.0
        %1768 = vmatprep.subr.mxu0 0.0
        %1769 = vmatpush1.msra.mxu0 0.0
        %1770 = vmatprep.subr.mxu0 0.0
        %1771 = vmatpush1.msra.mxu0 0.0
        %1772 = vmatprep.subr.mxu0 0.0
        %1773 = vmatpush1.msra.mxu0 0.0
        %1774 = vmatprep.subr.mxu0 0.0
        %1775 = vmatpush1.msra.mxu0 0.0
        %1776 = vmatprep.subr.mxu0 0.0
        %1777 = vmatpush1.msra.mxu0 0.0
        %1778 = vmatprep.subr.mxu0 0.0
        %1779 = vmatpush1.msra.mxu0 0.0
        %1780 = vmatprep.subr.mxu0 0.0
        %1781 = vmatpush1.msra.mxu0 0.0
        %1782 = vmatprep.subr.mxu0 0.0
        %1783 = vmatpush1.msra.mxu0 0.0
        %1784 = vmatprep.subr.mxu0 0.0
        %1785 = vmatpush1.msra.mxu0 0.0
        %1786 = vmatprep.subr.mxu0 0.0
        %1787 = vmatpush1.msra.mxu0 0.0
        %1788 = vmatprep.subr.mxu0 0.0
        %1789 = vmatpush1.msra.mxu0 0.0
        %1790 = vmatprep.mubr.f32.mxu0 0.0
        %1791 = vmatmul.mubr.f32.gmra.mrb[0].mxu0 %v1658
        %v1792 = vpop.f32.mrb[0].mxu0
        %v1793 = vadd.f32 %v1714, %v1792
        %v1794 = vpop.f32.mrb[0].mxu0
        %v1795 = vadd.f32 %v1718, %v1794
        %1796 = vdwg.mxu0
        %1797 = vmatprep.subr.mxu0 0.0
        %1798 = vmatpush1.msra.mxu0 %v1663
        %1799 = vmatprep.subr.mxu0 0.0
        %1800 = vmatpush1.msra.mxu0 %v1666
        %1801 = vmatprep.subr.mxu0 0.0
        %1802 = vmatpush1.msra.mxu0 %v1669
        %1803 = vmatprep.subr.mxu0 0.0
        %1804 = vmatpush1.msra.mxu0 %v1672
        %1805 = vmatprep.subr.mxu0 0.0
        %1806 = vmatpush1.msra.mxu0 %v1675
        %1807 = vmatprep.subr.mxu0 0.0
        %1808 = vmatpush1.msra.mxu0 %v1678
        %1809 = vmatprep.subr.mxu0 0.0
        %1810 = vmatpush1.msra.mxu0 %v1681
        %1811 = vmatprep.subr.mxu0 0.0
        %1812 = vmatpush1.msra.mxu0 %v1684
        %1813 = vmatprep.subr.mxu0 0.0
        %1814 = vmatpush1.msra.mxu0 %v1687
        %1815 = vmatprep.subr.mxu0 0.0
        %1816 = vmatpush1.msra.mxu0 %v1690
        %1817 = vmatprep.subr.mxu0 0.0
        %1818 = vmatpush1.msra.mxu0 %v1693
        %1819 = vmatprep.subr.mxu0 0.0
        %1820 = vmatpush1.msra.mxu0 %v1696
        %1821 = vmatprep.subr.mxu0 0.0
        %1822 = vmatpush1.msra.mxu0 %v1699
        %1823 = vmatprep.subr.mxu0 0.0
        %1824 = vmatpush1.msra.mxu0 %v1702
        %1825 = vmatprep.subr.mxu0 0.0
        %1826 = vmatpush1.msra.mxu0 %v1705
        %1827 = vmatprep.subr.mxu0 0.0
        %1828 = vmatpush1.msra.mxu0 %v1708
        %1829 = vmatprep.subr.mxu0 0.0
        %1830 = vmatpush1.msra.mxu0 0.0
        %1831 = vmatprep.subr.mxu0 0.0
        %1832 = vmatpush1.msra.mxu0 0.0
        %1833 = vmatprep.subr.mxu0 0.0
        %1834 = vmatpush1.msra.mxu0 0.0
        %1835 = vmatprep.subr.mxu0 0.0
        %1836 = vmatpush1.msra.mxu0 0.0
        %1837 = vmatprep.subr.mxu0 0.0
        %1838 = vmatpush1.msra.mxu0 0.0
        %1839 = vmatprep.subr.mxu0 0.0
        %1840 = vmatpush1.msra.mxu0 0.0
        %1841 = vmatprep.subr.mxu0 0.0
        %1842 = vmatpush1.msra.mxu0 0.0
        %1843 = vmatprep.subr.mxu0 0.0
        %1844 = vmatpush1.msra.mxu0 0.0
        %1845 = vmatprep.subr.mxu0 0.0
        %1846 = vmatpush1.msra.mxu0 0.0
        %1847 = vmatprep.subr.mxu0 0.0
        %1848 = vmatpush1.msra.mxu0 0.0
        %1849 = vmatprep.subr.mxu0 0.0
        %1850 = vmatpush1.msra.mxu0 0.0
        %1851 = vmatprep.subr.mxu0 0.0
        %1852 = vmatpush1.msra.mxu0 0.0
        %1853 = vmatprep.subr.mxu0 0.0
        %1854 = vmatpush1.msra.mxu0 0.0
        %1855 = vmatprep.subr.mxu0 0.0
        %1856 = vmatpush1.msra.mxu0 0.0
        %1857 = vmatprep.subr.mxu0 0.0
        %1858 = vmatpush1.msra.mxu0 0.0
        %1859 = vmatprep.subr.mxu0 0.0
        %1860 = vmatpush1.msra.mxu0 0.0
        %1861 = vmatprep.mubr.f32.mxu0 0.0
        %1862 = vmatmul.mubr.f32.gmra.mrb[0].mxu0 %v1658
        %v1863 = vpop.f32.mrb[0].mxu0
        %v1864 = vadd.f32 %v1722, %v1863
        %v1865 = vpop.f32.mrb[0].mxu0
        %1866 = vdwg.mxu0
        %s1867 = scalar_lea.vmem [#allocation2], 96
        %v1868 = vld [vmem:[%s1867] sm:$0xff]
        %v1869 = vld [vmem:[%s1867 + $0x8] sm:$0xff]
        %v1870 = vld [vmem:[%s1867 + $0x10] sm:$0xff]
        %v1871 = vadd.f32 %v1868, %v1793
        %v1872 = vxor.u32 %v1871, 2147483648
        %v1873 = vmul.f32 %v1872, 1.442695
        %v1874 = vpow.pop %v1873
        %v1875 = vadd.f32 %v1874, 1.0
        %v1876 = vrcp.pop %v1875
        %v1877 = vmul.f32 1.0, %v1876
        %v1878 = vadd.f32 %v1869, %v1795
        %v1879 = vxor.u32 %v1878, 2147483648
        %v1880 = vmul.f32 %v1879, 1.442695
        %v1881 = vpow.pop %v1880
        %v1882 = vadd.f32 %v1881, 1.0
        %v1883 = vrcp.pop %v1882
        %v1884 = vmul.f32 1.0, %v1883
        %v1885 = vmul.f32 %v1877, %v1864
        %v1886 = vadd.f32 %v1870, %v1885
        %v1887 = vtanh.pop %v1886
        %v1888 = vsub.f32 1.0, %v1884
        %v1889 = vmul.f32 %v1888, %v1887
        %v1890 = vmul.f32 %v1884, %v1658
        %v1891 = vadd.f32 %v1889, %v1890
        %s1892 = sadd.s32 %s921, 4
        %p1893 = scmp.lt.s32.totalorder %s1892, 12
        %s1894 = scalar_select %p1893, 1, 0
        %s1895 = scvt.s32.f32 %s1894
        %v1896 = vstv %s1895
        %v1897 = vmul.f32 %v1896, %v1891
        %s1898 = ssub.f32 1.0, %s1895
        %v1899 = vstv %s1898
        %v1900 = vmul.f32 %v1899, %v1658
        %v1901 = vadd.f32 %v1897, %v1900
        %s1902 = scalar_lea.vmem %s364, 32 [#allocation12]
        %1903 = vst [vmem:[%s1902] sm:$0xff] %v1901
        %v1904 = vld [vmem:[#allocation10] sm:$0xff]
        %v1905 = vld [vmem:[#allocation10 + $0x8] sm:$0xff]
        %v1906 = vld [vmem:[#allocation10 + $0x10] sm:$0xff]
        %v1907 = vld [vmem:[#allocation10 + $0x18] sm:$0xff]
        %v1908 = vld [vmem:[#allocation10 + $0x20] sm:$0xff]
        %v1909 = vld [vmem:[#allocation10 + $0x28] sm:$0xff]
        %v1910 = vld [vmem:[#allocation10 + $0x30] sm:$0xff]
        %v1911 = vld [vmem:[#allocation10 + $0x38] sm:$0xff]
        %v1912 = vld [vmem:[#allocation10 + $0x40] sm:$0xff]
        %v1913 = vld [vmem:[#allocation10 + $0x48] sm:$0xff]
        %v1914 = vld [vmem:[#allocation10 + $0x50] sm:$0xff]
        %v1915 = vld [vmem:[#allocation10 + $0x58] sm:$0xff]
        %v1916 = vld [vmem:[#allocation10 + $0x60] sm:$0xff]
        %v1917 = vld [vmem:[#allocation10 + $0x68] sm:$0xff]
        %v1918 = vld [vmem:[#allocation10 + $0x70] sm:$0xff]
        %v1919 = vld [vmem:[#allocation10 + $0x78] sm:$0xff]
        %v1920 = vld [vmem:[#allocation10 + $0x80] sm:$0xff]
        %v1921 = vld [vmem:[#allocation10 + $0x88] sm:$0xff]
        %v1922 = vld [vmem:[#allocation10 + $0x90] sm:$0xff]
        %v1923 = vld [vmem:[#allocation10 + $0x98] sm:$0xff]
        %v1924 = vld [vmem:[#allocation10 + $0xa0] sm:$0xff]
        %v1925 = vld [vmem:[#allocation10 + $0xa8] sm:$0xff]
        %v1926 = vld [vmem:[#allocation10 + $0xb0] sm:$0xff]
        %v1927 = vld [vmem:[#allocation10 + $0xb8] sm:$0xff]
        %v1928 = vld [vmem:[#allocation10 + $0xc0] sm:$0xff]
        %v1929 = vld [vmem:[#allocation10 + $0xc8] sm:$0xff]
        %v1930 = vld [vmem:[#allocation10 + $0xd0] sm:$0xff]
        %v1931 = vld [vmem:[#allocation10 + $0xd8] sm:$0xff]
        %v1932 = vld [vmem:[#allocation10 + $0xe0] sm:$0xff]
        %v1933 = vld [vmem:[#allocation10 + $0xe8] sm:$0xff]
        %v1934 = vld [vmem:[#allocation10 + $0xf0] sm:$0xff]
        %v1935 = vld [vmem:[#allocation10 + $0xf8] sm:$0xff]
        %v1936 = vld [vmem:[#allocation10 + $0x100] sm:$0xff]
        %v1937 = vld [vmem:[#allocation10 + $0x108] sm:$0xff]
        %v1938 = vld [vmem:[#allocation10 + $0x110] sm:$0xff]
        %v1939 = vld [vmem:[#allocation10 + $0x118] sm:$0xff]
        %v1940 = vld [vmem:[#allocation10 + $0x120] sm:$0xff]
        %v1941 = vld [vmem:[#allocation10 + $0x128] sm:$0xff]
        %v1942 = vld [vmem:[#allocation10 + $0x130] sm:$0xff]
        %v1943 = vld [vmem:[#allocation10 + $0x138] sm:$0xff]
        %v1944 = vld [vmem:[#allocation10 + $0x140] sm:$0xff]
        %v1945 = vld [vmem:[#allocation10 + $0x148] sm:$0xff]
        %v1946 = vld [vmem:[#allocation10 + $0x150] sm:$0xff]
        %v1947 = vld [vmem:[#allocation10 + $0x158] sm:$0xff]
        %v1948 = vld [vmem:[#allocation10 + $0x160] sm:$0xff]
        %v1949 = vld [vmem:[#allocation10 + $0x168] sm:$0xff]
        %v1950 = vld [vmem:[#allocation10 + $0x170] sm:$0xff]
        %v1951 = vld [vmem:[#allocation10 + $0x178] sm:$0xff]
        %v1952 = vld [vmem:[%s5] sm:$0x7]
        %v1954 = vlaneseq
        %v1955 = vshrl.u32 %v1954, 7
        %v1956 = vsub.s32 0, %v1955
        %v1957 = vrot.slane %v1952, %v1956
        %v1958 = vlaneseq
        %v1959 = vshrl.u32 %v1958, 7
        %v1960 = vsub.s32 1, %v1959
        %v1961 = vrot.slane %v1952, %v1960
        %v1962 = vlaneseq
        %v1963 = vshrl.u32 %v1962, 7
        %v1964 = vsub.s32 2, %v1963
        %v1965 = vrot.slane %v1952, %v1964
        %1969 = vmatprep.subr.mxu0 %v1905
        %1970 = vmatpush1.msra.mxu0 %v1904
        %1971 = vmatprep.subr.mxu0 %v1908
        %1972 = vmatpush1.msra.mxu0 %v1907
        %1973 = vmatprep.subr.mxu0 %v1911
        %1974 = vmatpush1.msra.mxu0 %v1910
        %1975 = vmatprep.subr.mxu0 %v1914
        %1976 = vmatpush1.msra.mxu0 %v1913
        %1977 = vmatprep.subr.mxu0 %v1917
        %1978 = vmatpush1.msra.mxu0 %v1916
        %1979 = vmatprep.subr.mxu0 %v1920
        %1980 = vmatpush1.msra.mxu0 %v1919
        %1981 = vmatprep.subr.mxu0 %v1923
        %1982 = vmatpush1.msra.mxu0 %v1922
        %1983 = vmatprep.subr.mxu0 %v1926
        %1984 = vmatpush1.msra.mxu0 %v1925
        %1985 = vmatprep.subr.mxu0 %v1929
        %1986 = vmatpush1.msra.mxu0 %v1928
        %1987 = vmatprep.subr.mxu0 %v1932
        %1988 = vmatpush1.msra.mxu0 %v1931
        %1989 = vmatprep.subr.mxu0 %v1935
        %1990 = vmatpush1.msra.mxu0 %v1934
        %1991 = vmatprep.subr.mxu0 %v1938
        %1992 = vmatpush1.msra.mxu0 %v1937
        %1993 = vmatprep.subr.mxu0 %v1941
        %1994 = vmatpush1.msra.mxu0 %v1940
        %1995 = vmatprep.subr.mxu0 %v1944
        %1996 = vmatpush1.msra.mxu0 %v1943
        %1997 = vmatprep.subr.mxu0 %v1947
        %1998 = vmatpush1.msra.mxu0 %v1946
        %1999 = vmatprep.subr.mxu0 %v1950
        %2000 = vmatpush1.msra.mxu0 %v1949
        %2001 = vmatprep.subr.mxu0 0.0
        %2002 = vmatpush1.msra.mxu0 0.0
        %2003 = vmatprep.subr.mxu0 0.0
        %2004 = vmatpush1.msra.mxu0 0.0
        %2005 = vmatprep.subr.mxu0 0.0
        %2006 = vmatpush1.msra.mxu0 0.0
        %2007 = vmatprep.subr.mxu0 0.0
        %2008 = vmatpush1.msra.mxu0 0.0
        %2009 = vmatprep.subr.mxu0 0.0
        %2010 = vmatpush1.msra.mxu0 0.0
        %2011 = vmatprep.subr.mxu0 0.0
        %2012 = vmatpush1.msra.mxu0 0.0
        %2013 = vmatprep.subr.mxu0 0.0
        %2014 = vmatpush1.msra.mxu0 0.0
        %2015 = vmatprep.subr.mxu0 0.0
        %2016 = vmatpush1.msra.mxu0 0.0
        %2017 = vmatprep.subr.mxu0 0.0
        %2018 = vmatpush1.msra.mxu0 0.0
        %2019 = vmatprep.subr.mxu0 0.0
        %2020 = vmatpush1.msra.mxu0 0.0
        %2021 = vmatprep.subr.mxu0 0.0
        %2022 = vmatpush1.msra.mxu0 0.0
        %2023 = vmatprep.subr.mxu0 0.0
        %2024 = vmatpush1.msra.mxu0 0.0
        %2025 = vmatprep.subr.mxu0 0.0
        %2026 = vmatpush1.msra.mxu0 0.0
        %2027 = vmatprep.subr.mxu0 0.0
        %2028 = vmatpush1.msra.mxu0 0.0
        %2029 = vmatprep.subr.mxu0 0.0
        %2030 = vmatpush1.msra.mxu0 0.0
        %2031 = vmatprep.subr.mxu0 0.0
        %2032 = vmatpush1.msra.mxu0 0.0
        %2033 = vmatprep.mubr.f32.mxu0 0.0
        %2034 = vmatmul.mubr.f32.gmra.mrb[0].mxu0 %v1901
        %v2035 = vpop.f32.mrb[0].mxu0
        %v2036 = vadd.f32 %v1957, %v2035
        %v2037 = vpop.f32.mrb[0].mxu0
        %v2038 = vadd.f32 %v1961, %v2037
        %2039 = vdwg.mxu0
        %2040 = vmatprep.subr.mxu0 0.0
        %2041 = vmatpush1.msra.mxu0 %v1906
        %2042 = vmatprep.subr.mxu0 0.0
        %2043 = vmatpush1.msra.mxu0 %v1909
        %2044 = vmatprep.subr.mxu0 0.0
        %2045 = vmatpush1.msra.mxu0 %v1912
        %2046 = vmatprep.subr.mxu0 0.0
        %2047 = vmatpush1.msra.mxu0 %v1915
        %2048 = vmatprep.subr.mxu0 0.0
        %2049 = vmatpush1.msra.mxu0 %v1918
        %2050 = vmatprep.subr.mxu0 0.0
        %2051 = vmatpush1.msra.mxu0 %v1921
        %2052 = vmatprep.subr.mxu0 0.0
        %2053 = vmatpush1.msra.mxu0 %v1924
        %2054 = vmatprep.subr.mxu0 0.0
        %2055 = vmatpush1.msra.mxu0 %v1927
        %2056 = vmatprep.subr.mxu0 0.0
        %2057 = vmatpush1.msra.mxu0 %v1930
        %2058 = vmatprep.subr.mxu0 0.0
        %2059 = vmatpush1.msra.mxu0 %v1933
        %2060 = vmatprep.subr.mxu0 0.0
        %2061 = vmatpush1.msra.mxu0 %v1936
        %2062 = vmatprep.subr.mxu0 0.0
        %2063 = vmatpush1.msra.mxu0 %v1939
        %2064 = vmatprep.subr.mxu0 0.0
        %2065 = vmatpush1.msra.mxu0 %v1942
        %2066 = vmatprep.subr.mxu0 0.0
        %2067 = vmatpush1.msra.mxu0 %v1945
        %2068 = vmatprep.subr.mxu0 0.0
        %2069 = vmatpush1.msra.mxu0 %v1948
        %2070 = vmatprep.subr.mxu0 0.0
        %2071 = vmatpush1.msra.mxu0 %v1951
        %2072 = vmatprep.subr.mxu0 0.0
        %2073 = vmatpush1.msra.mxu0 0.0
        %2074 = vmatprep.subr.mxu0 0.0
        %2075 = vmatpush1.msra.mxu0 0.0
        %2076 = vmatprep.subr.mxu0 0.0
        %2077 = vmatpush1.msra.mxu0 0.0
        %2078 = vmatprep.subr.mxu0 0.0
        %2079 = vmatpush1.msra.mxu0 0.0
        %2080 = vmatprep.subr.mxu0 0.0
        %2081 = vmatpush1.msra.mxu0 0.0
        %2082 = vmatprep.subr.mxu0 0.0
        %2083 = vmatpush1.msra.mxu0 0.0
        %2084 = vmatprep.subr.mxu0 0.0
        %2085 = vmatpush1.msra.mxu0 0.0
        %2086 = vmatprep.subr.mxu0 0.0
        %2087 = vmatpush1.msra.mxu0 0.0
        %2088 = vmatprep.subr.mxu0 0.0
        %2089 = vmatpush1.msra.mxu0 0.0
        %2090 = vmatprep.subr.mxu0 0.0
        %2091 = vmatpush1.msra.mxu0 0.0
        %2092 = vmatprep.subr.mxu0 0.0
        %2093 = vmatpush1.msra.mxu0 0.0
        %2094 = vmatprep.subr.mxu0 0.0
        %2095 = vmatpush1.msra.mxu0 0.0
        %2096 = vmatprep.subr.mxu0 0.0
        %2097 = vmatpush1.msra.mxu0 0.0
        %2098 = vmatprep.subr.mxu0 0.0
        %2099 = vmatpush1.msra.mxu0 0.0
        %2100 = vmatprep.subr.mxu0 0.0
        %2101 = vmatpush1.msra.mxu0 0.0
        %2102 = vmatprep.subr.mxu0 0.0
        %2103 = vmatpush1.msra.mxu0 0.0
        %2104 = vmatprep.mubr.f32.mxu0 0.0
        %2105 = vmatmul.mubr.f32.gmra.mrb[0].mxu0 %v1901
        %v2106 = vpop.f32.mrb[0].mxu0
        %v2107 = vadd.f32 %v1965, %v2106
        %v2108 = vpop.f32.mrb[0].mxu0
        %2109 = vdwg.mxu0
        %s2110 = scalar_lea.vmem [#allocation2], 120
        %v2111 = vld [vmem:[%s2110] sm:$0xff]
        %v2112 = vld [vmem:[%s2110 + $0x8] sm:$0xff]
        %v2113 = vld [vmem:[%s2110 + $0x10] sm:$0xff]
        %v2114 = vadd.f32 %v2111, %v2036
        %v2115 = vxor.u32 %v2114, 2147483648
        %v2116 = vmul.f32 %v2115, 1.442695
        %v2117 = vpow.pop %v2116
        %v2118 = vadd.f32 %v2117, 1.0
        %v2119 = vrcp.pop %v2118
        %v2120 = vmul.f32 1.0, %v2119
        %v2121 = vadd.f32 %v2112, %v2038
        %v2122 = vxor.u32 %v2121, 2147483648
        %v2123 = vmul.f32 %v2122, 1.442695
        %v2124 = vpow.pop %v2123
        %v2125 = vadd.f32 %v2124, 1.0
        %v2126 = vrcp.pop %v2125
        %v2127 = vmul.f32 1.0, %v2126
        %v2128 = vmul.f32 %v2120, %v2107
        %v2129 = vadd.f32 %v2113, %v2128
        %v2130 = vtanh.pop %v2129
        %v2131 = vsub.f32 1.0, %v2127
        %v2132 = vmul.f32 %v2131, %v2130
        %v2133 = vmul.f32 %v2127, %v1901
        %v2134 = vadd.f32 %v2132, %v2133
        %s2135 = sadd.s32 %s921, 5
        %p2136 = scmp.lt.s32.totalorder %s2135, 12
        %s2137 = scalar_select %p2136, 1, 0
        %s2138 = scvt.s32.f32 %s2137
        %v2139 = vstv %s2138
        %v2140 = vmul.f32 %v2139, %v2134
        %s2141 = ssub.f32 1.0, %s2138
        %v2142 = vstv %s2141
        %v2143 = vmul.f32 %v2142, %v1901
        %v2144 = vadd.f32 %v2140, %v2143
        %s2145 = scalar_lea.vmem %s364, 40 [#allocation12]
        %2146 = vst [vmem:[%s2145] sm:$0xff] %v2144
        %v2147 = vld [vmem:[#allocation10] sm:$0xff]
        %v2148 = vld [vmem:[#allocation10 + $0x8] sm:$0xff]
        %v2149 = vld [vmem:[#allocation10 + $0x10] sm:$0xff]
        %v2150 = vld [vmem:[#allocation10 + $0x18] sm:$0xff]
        %v2151 = vld [vmem:[#allocation10 + $0x20] sm:$0xff]
        %v2152 = vld [vmem:[#allocation10 + $0x28] sm:$0xff]
        %v2153 = vld [vmem:[#allocation10 + $0x30] sm:$0xff]
        %v2154 = vld [vmem:[#allocation10 + $0x38] sm:$0xff]
        %v2155 = vld [vmem:[#allocation10 + $0x40] sm:$0xff]
        %v2156 = vld [vmem:[#allocation10 + $0x48] sm:$0xff]
        %v2157 = vld [vmem:[#allocation10 + $0x50] sm:$0xff]
        %v2158 = vld [vmem:[#allocation10 + $0x58] sm:$0xff]
        %v2159 = vld [vmem:[#allocation10 + $0x60] sm:$0xff]
        %v2160 = vld [vmem:[#allocation10 + $0x68] sm:$0xff]
        %v2161 = vld [vmem:[#allocation10 + $0x70] sm:$0xff]
        %v2162 = vld [vmem:[#allocation10 + $0x78] sm:$0xff]
        %v2163 = vld [vmem:[#allocation10 + $0x80] sm:$0xff]
        %v2164 = vld [vmem:[#allocation10 + $0x88] sm:$0xff]
        %v2165 = vld [vmem:[#allocation10 + $0x90] sm:$0xff]
        %v2166 = vld [vmem:[#allocation10 + $0x98] sm:$0xff]
        %v2167 = vld [vmem:[#allocation10 + $0xa0] sm:$0xff]
        %v2168 = vld [vmem:[#allocation10 + $0xa8] sm:$0xff]
        %v2169 = vld [vmem:[#allocation10 + $0xb0] sm:$0xff]
        %v2170 = vld [vmem:[#allocation10 + $0xb8] sm:$0xff]
        %v2171 = vld [vmem:[#allocation10 + $0xc0] sm:$0xff]
        %v2172 = vld [vmem:[#allocation10 + $0xc8] sm:$0xff]
        %v2173 = vld [vmem:[#allocation10 + $0xd0] sm:$0xff]
        %v2174 = vld [vmem:[#allocation10 + $0xd8] sm:$0xff]
        %v2175 = vld [vmem:[#allocation10 + $0xe0] sm:$0xff]
        %v2176 = vld [vmem:[#allocation10 + $0xe8] sm:$0xff]
        %v2177 = vld [vmem:[#allocation10 + $0xf0] sm:$0xff]
        %v2178 = vld [vmem:[#allocation10 + $0xf8] sm:$0xff]
        %v2179 = vld [vmem:[#allocation10 + $0x100] sm:$0xff]
        %v2180 = vld [vmem:[#allocation10 + $0x108] sm:$0xff]
        %v2181 = vld [vmem:[#allocation10 + $0x110] sm:$0xff]
        %v2182 = vld [vmem:[#allocation10 + $0x118] sm:$0xff]
        %v2183 = vld [vmem:[#allocation10 + $0x120] sm:$0xff]
        %v2184 = vld [vmem:[#allocation10 + $0x128] sm:$0xff]
        %v2185 = vld [vmem:[#allocation10 + $0x130] sm:$0xff]
        %v2186 = vld [vmem:[#allocation10 + $0x138] sm:$0xff]
        %v2187 = vld [vmem:[#allocation10 + $0x140] sm:$0xff]
        %v2188 = vld [vmem:[#allocation10 + $0x148] sm:$0xff]
        %v2189 = vld [vmem:[#allocation10 + $0x150] sm:$0xff]
        %v2190 = vld [vmem:[#allocation10 + $0x158] sm:$0xff]
        %v2191 = vld [vmem:[#allocation10 + $0x160] sm:$0xff]
        %v2192 = vld [vmem:[#allocation10 + $0x168] sm:$0xff]
        %v2193 = vld [vmem:[#allocation10 + $0x170] sm:$0xff]
        %v2194 = vld [vmem:[#allocation10 + $0x178] sm:$0xff]
        %v2195 = vld [vmem:[%s5] sm:$0x7]
        %v2197 = vlaneseq
        %v2198 = vshrl.u32 %v2197, 7
        %v2199 = vsub.s32 0, %v2198
        %v2200 = vrot.slane %v2195, %v2199
        %v2201 = vlaneseq
        %v2202 = vshrl.u32 %v2201, 7
        %v2203 = vsub.s32 1, %v2202
        %v2204 = vrot.slane %v2195, %v2203
        %v2205 = vlaneseq
        %v2206 = vshrl.u32 %v2205, 7
        %v2207 = vsub.s32 2, %v2206
        %v2208 = vrot.slane %v2195, %v2207
        %2212 = vmatprep.subr.mxu0 %v2148
        %2213 = vmatpush1.msra.mxu0 %v2147
        %2214 = vmatprep.subr.mxu0 %v2151
        %2215 = vmatpush1.msra.mxu0 %v2150
        %2216 = vmatprep.subr.mxu0 %v2154
        %2217 = vmatpush1.msra.mxu0 %v2153
        %2218 = vmatprep.subr.mxu0 %v2157
        %2219 = vmatpush1.msra.mxu0 %v2156
        %2220 = vmatprep.subr.mxu0 %v2160
        %2221 = vmatpush1.msra.mxu0 %v2159
        %2222 = vmatprep.subr.mxu0 %v2163
        %2223 = vmatpush1.msra.mxu0 %v2162
        %2224 = vmatprep.subr.mxu0 %v2166
        %2225 = vmatpush1.msra.mxu0 %v2165
        %2226 = vmatprep.subr.mxu0 %v2169
        %2227 = vmatpush1.msra.mxu0 %v2168
        %2228 = vmatprep.subr.mxu0 %v2172
        %2229 = vmatpush1.msra.mxu0 %v2171
        %2230 = vmatprep.subr.mxu0 %v2175
        %2231 = vmatpush1.msra.mxu0 %v2174
        %2232 = vmatprep.subr.mxu0 %v2178
        %2233 = vmatpush1.msra.mxu0 %v2177
        %2234 = vmatprep.subr.mxu0 %v2181
        %2235 = vmatpush1.msra.mxu0 %v2180
        %2236 = vmatprep.subr.mxu0 %v2184
        %2237 = vmatpush1.msra.mxu0 %v2183
        %2238 = vmatprep.subr.mxu0 %v2187
        %2239 = vmatpush1.msra.mxu0 %v2186
        %2240 = vmatprep.subr.mxu0 %v2190
        %2241 = vmatpush1.msra.mxu0 %v2189
        %2242 = vmatprep.subr.mxu0 %v2193
        %2243 = vmatpush1.msra.mxu0 %v2192
        %2244 = vmatprep.subr.mxu0 0.0
        %2245 = vmatpush1.msra.mxu0 0.0
        %2246 = vmatprep.subr.mxu0 0.0
        %2247 = vmatpush1.msra.mxu0 0.0
        %2248 = vmatprep.subr.mxu0 0.0
        %2249 = vmatpush1.msra.mxu0 0.0
        %2250 = vmatprep.subr.mxu0 0.0
        %2251 = vmatpush1.msra.mxu0 0.0
        %2252 = vmatprep.subr.mxu0 0.0
        %2253 = vmatpush1.msra.mxu0 0.0
        %2254 = vmatprep.subr.mxu0 0.0
        %2255 = vmatpush1.msra.mxu0 0.0
        %2256 = vmatprep.subr.mxu0 0.0
        %2257 = vmatpush1.msra.mxu0 0.0
        %2258 = vmatprep.subr.mxu0 0.0
        %2259 = vmatpush1.msra.mxu0 0.0
        %2260 = vmatprep.subr.mxu0 0.0
        %2261 = vmatpush1.msra.mxu0 0.0
        %2262 = vmatprep.subr.mxu0 0.0
        %2263 = vmatpush1.msra.mxu0 0.0
        %2264 = vmatprep.subr.mxu0 0.0
        %2265 = vmatpush1.msra.mxu0 0.0
        %2266 = vmatprep.subr.mxu0 0.0
        %2267 = vmatpush1.msra.mxu0 0.0
        %2268 = vmatprep.subr.mxu0 0.0
        %2269 = vmatpush1.msra.mxu0 0.0
        %2270 = vmatprep.subr.mxu0 0.0
        %2271 = vmatpush1.msra.mxu0 0.0
        %2272 = vmatprep.subr.mxu0 0.0
        %2273 = vmatpush1.msra.mxu0 0.0
        %2274 = vmatprep.subr.mxu0 0.0
        %2275 = vmatpush1.msra.mxu0 0.0
        %2276 = vmatprep.mubr.f32.mxu0 0.0
        %2277 = vmatmul.mubr.f32.gmra.mrb[0].mxu0 %v2144
        %v2278 = vpop.f32.mrb[0].mxu0
        %v2279 = vadd.f32 %v2200, %v2278
        %v2280 = vpop.f32.mrb[0].mxu0
        %v2281 = vadd.f32 %v2204, %v2280
        %2282 = vdwg.mxu0
        %2283 = vmatprep.subr.mxu0 0.0
        %2284 = vmatpush1.msra.mxu0 %v2149
        %2285 = vmatprep.subr.mxu0 0.0
        %2286 = vmatpush1.msra.mxu0 %v2152
        %2287 = vmatprep.subr.mxu0 0.0
        %2288 = vmatpush1.msra.mxu0 %v2155
        %2289 = vmatprep.subr.mxu0 0.0
        %2290 = vmatpush1.msra.mxu0 %v2158
        %2291 = vmatprep.subr.mxu0 0.0
        %2292 = vmatpush1.msra.mxu0 %v2161
        %2293 = vmatprep.subr.mxu0 0.0
        %2294 = vmatpush1.msra.mxu0 %v2164
        %2295 = vmatprep.subr.mxu0 0.0
        %2296 = vmatpush1.msra.mxu0 %v2167
        %2297 = vmatprep.subr.mxu0 0.0
        %2298 = vmatpush1.msra.mxu0 %v2170
        %2299 = vmatprep.subr.mxu0 0.0
        %2300 = vmatpush1.msra.mxu0 %v2173
        %2301 = vmatprep.subr.mxu0 0.0
        %2302 = vmatpush1.msra.mxu0 %v2176
        %2303 = vmatprep.subr.mxu0 0.0
        %2304 = vmatpush1.msra.mxu0 %v2179
        %2305 = vmatprep.subr.mxu0 0.0
        %2306 = vmatpush1.msra.mxu0 %v2182
        %2307 = vmatprep.subr.mxu0 0.0
        %2308 = vmatpush1.msra.mxu0 %v2185
        %2309 = vmatprep.subr.mxu0 0.0
        %2310 = vmatpush1.msra.mxu0 %v2188
        %2311 = vmatprep.subr.mxu0 0.0
        %2312 = vmatpush1.msra.mxu0 %v2191
        %2313 = vmatprep.subr.mxu0 0.0
        %2314 = vmatpush1.msra.mxu0 %v2194
        %2315 = vmatprep.subr.mxu0 0.0
        %2316 = vmatpush1.msra.mxu0 0.0
        %2317 = vmatprep.subr.mxu0 0.0
        %2318 = vmatpush1.msra.mxu0 0.0
        %2319 = vmatprep.subr.mxu0 0.0
        %2320 = vmatpush1.msra.mxu0 0.0
        %2321 = vmatprep.subr.mxu0 0.0
        %2322 = vmatpush1.msra.mxu0 0.0
        %2323 = vmatprep.subr.mxu0 0.0
        %2324 = vmatpush1.msra.mxu0 0.0
        %2325 = vmatprep.subr.mxu0 0.0
        %2326 = vmatpush1.msra.mxu0 0.0
        %2327 = vmatprep.subr.mxu0 0.0
        %2328 = vmatpush1.msra.mxu0 0.0
        %2329 = vmatprep.subr.mxu0 0.0
        %2330 = vmatpush1.msra.mxu0 0.0
        %2331 = vmatprep.subr.mxu0 0.0
        %2332 = vmatpush1.msra.mxu0 0.0
        %2333 = vmatprep.subr.mxu0 0.0
        %2334 = vmatpush1.msra.mxu0 0.0
        %2335 = vmatprep.subr.mxu0 0.0
        %2336 = vmatpush1.msra.mxu0 0.0
        %2337 = vmatprep.subr.mxu0 0.0
        %2338 = vmatpush1.msra.mxu0 0.0
        %2339 = vmatprep.subr.mxu0 0.0
        %2340 = vmatpush1.msra.mxu0 0.0
        %2341 = vmatprep.subr.mxu0 0.0
        %2342 = vmatpush1.msra.mxu0 0.0
        %2343 = vmatprep.subr.mxu0 0.0
        %2344 = vmatpush1.msra.mxu0 0.0
        %2345 = vmatprep.subr.mxu0 0.0
        %2346 = vmatpush1.msra.mxu0 0.0
        %2347 = vmatprep.mubr.f32.mxu0 0.0
        %2348 = vmatmul.mubr.f32.gmra.mrb[0].mxu0 %v2144
        %v2349 = vpop.f32.mrb[0].mxu0
        %v2350 = vadd.f32 %v2208, %v2349
        %v2351 = vpop.f32.mrb[0].mxu0
        %2352 = vdwg.mxu0
        %s2353 = scalar_lea.vmem [#allocation2], 144
        %v2354 = vld [vmem:[%s2353] sm:$0xff]
        %v2355 = vld [vmem:[%s2353 + $0x8] sm:$0xff]
        %v2356 = vld [vmem:[%s2353 + $0x10] sm:$0xff]
        %v2357 = vadd.f32 %v2354, %v2279
        %v2358 = vxor.u32 %v2357, 2147483648
        %v2359 = vmul.f32 %v2358, 1.442695
        %v2360 = vpow.pop %v2359
        %v2361 = vadd.f32 %v2360, 1.0
        %v2362 = vrcp.pop %v2361
        %v2363 = vmul.f32 1.0, %v2362
        %v2364 = vadd.f32 %v2355, %v2281
        %v2365 = vxor.u32 %v2364, 2147483648
        %v2366 = vmul.f32 %v2365, 1.442695
        %v2367 = vpow.pop %v2366
        %v2368 = vadd.f32 %v2367, 1.0
        %v2369 = vrcp.pop %v2368
        %v2370 = vmul.f32 1.0, %v2369
        %v2371 = vmul.f32 %v2363, %v2350
        %v2372 = vadd.f32 %v2356, %v2371
        %v2373 = vtanh.pop %v2372
        %v2374 = vsub.f32 1.0, %v2370
        %v2375 = vmul.f32 %v2374, %v2373
        %v2376 = vmul.f32 %v2370, %v2144
        %v2377 = vadd.f32 %v2375, %v2376
        %s2378 = sadd.s32 %s921, 6
        %p2379 = scmp.lt.s32.totalorder %s2378, 12
        %s2380 = scalar_select %p2379, 1, 0
        %s2381 = scvt.s32.f32 %s2380
        %v2382 = vstv %s2381
        %v2383 = vmul.f32 %v2382, %v2377
        %s2384 = ssub.f32 1.0, %s2381
        %v2385 = vstv %s2384
        %v2386 = vmul.f32 %v2385, %v2144
        %v2387 = vadd.f32 %v2383, %v2386
        %s2388 = scalar_lea.vmem %s364, 48 [#allocation12]
        %2389 = vst [vmem:[%s2388] sm:$0xff] %v2387
        %v2390 = vld [vmem:[#allocation10] sm:$0xff]
        %v2391 = vld [vmem:[#allocation10 + $0x8] sm:$0xff]
        %v2392 = vld [vmem:[#allocation10 + $0x10] sm:$0xff]
        %v2393 = vld [vmem:[#allocation10 + $0x18] sm:$0xff]
        %v2394 = vld [vmem:[#allocation10 + $0x20] sm:$0xff]
        %v2395 = vld [vmem:[#allocation10 + $0x28] sm:$0xff]
        %v2396 = vld [vmem:[#allocation10 + $0x30] sm:$0xff]
        %v2397 = vld [vmem:[#allocation10 + $0x38] sm:$0xff]
        %v2398 = vld [vmem:[#allocation10 + $0x40] sm:$0xff]
        %v2399 = vld [vmem:[#allocation10 + $0x48] sm:$0xff]
        %v2400 = vld [vmem:[#allocation10 + $0x50] sm:$0xff]
        %v2401 = vld [vmem:[#allocation10 + $0x58] sm:$0xff]
        %v2402 = vld [vmem:[#allocation10 + $0x60] sm:$0xff]
        %v2403 = vld [vmem:[#allocation10 + $0x68] sm:$0xff]
        %v2404 = vld [vmem:[#allocation10 + $0x70] sm:$0xff]
        %v2405 = vld [vmem:[#allocation10 + $0x78] sm:$0xff]
        %v2406 = vld [vmem:[#allocation10 + $0x80] sm:$0xff]
        %v2407 = vld [vmem:[#allocation10 + $0x88] sm:$0xff]
        %v2408 = vld [vmem:[#allocation10 + $0x90] sm:$0xff]
        %v2409 = vld [vmem:[#allocation10 + $0x98] sm:$0xff]
        %v2410 = vld [vmem:[#allocation10 + $0xa0] sm:$0xff]
        %v2411 = vld [vmem:[#allocation10 + $0xa8] sm:$0xff]
        %v2412 = vld [vmem:[#allocation10 + $0xb0] sm:$0xff]
        %v2413 = vld [vmem:[#allocation10 + $0xb8] sm:$0xff]
        %v2414 = vld [vmem:[#allocation10 + $0xc0] sm:$0xff]
        %v2415 = vld [vmem:[#allocation10 + $0xc8] sm:$0xff]
        %v2416 = vld [vmem:[#allocation10 + $0xd0] sm:$0xff]
        %v2417 = vld [vmem:[#allocation10 + $0xd8] sm:$0xff]
        %v2418 = vld [vmem:[#allocation10 + $0xe0] sm:$0xff]
        %v2419 = vld [vmem:[#allocation10 + $0xe8] sm:$0xff]
        %v2420 = vld [vmem:[#allocation10 + $0xf0] sm:$0xff]
        %v2421 = vld [vmem:[#allocation10 + $0xf8] sm:$0xff]
        %v2422 = vld [vmem:[#allocation10 + $0x100] sm:$0xff]
        %v2423 = vld [vmem:[#allocation10 + $0x108] sm:$0xff]
        %v2424 = vld [vmem:[#allocation10 + $0x110] sm:$0xff]
        %v2425 = vld [vmem:[#allocation10 + $0x118] sm:$0xff]
        %v2426 = vld [vmem:[#allocation10 + $0x120] sm:$0xff]
        %v2427 = vld [vmem:[#allocation10 + $0x128] sm:$0xff]
        %v2428 = vld [vmem:[#allocation10 + $0x130] sm:$0xff]
        %v2429 = vld [vmem:[#allocation10 + $0x138] sm:$0xff]
        %v2430 = vld [vmem:[#allocation10 + $0x140] sm:$0xff]
        %v2431 = vld [vmem:[#allocation10 + $0x148] sm:$0xff]
        %v2432 = vld [vmem:[#allocation10 + $0x150] sm:$0xff]
        %v2433 = vld [vmem:[#allocation10 + $0x158] sm:$0xff]
        %v2434 = vld [vmem:[#allocation10 + $0x160] sm:$0xff]
        %v2435 = vld [vmem:[#allocation10 + $0x168] sm:$0xff]
        %v2436 = vld [vmem:[#allocation10 + $0x170] sm:$0xff]
        %v2437 = vld [vmem:[#allocation10 + $0x178] sm:$0xff]
        %v2438 = vld [vmem:[%s5] sm:$0x7]
        %v2440 = vlaneseq
        %v2441 = vshrl.u32 %v2440, 7
        %v2442 = vsub.s32 0, %v2441
        %v2443 = vrot.slane %v2438, %v2442
        %v2444 = vlaneseq
        %v2445 = vshrl.u32 %v2444, 7
        %v2446 = vsub.s32 1, %v2445
        %v2447 = vrot.slane %v2438, %v2446
        %v2448 = vlaneseq
        %v2449 = vshrl.u32 %v2448, 7
        %v2450 = vsub.s32 2, %v2449
        %v2451 = vrot.slane %v2438, %v2450
        %2455 = vmatprep.subr.mxu0 %v2391
        %2456 = vmatpush1.msra.mxu0 %v2390
        %2457 = vmatprep.subr.mxu0 %v2394
        %2458 = vmatpush1.msra.mxu0 %v2393
        %2459 = vmatprep.subr.mxu0 %v2397
        %2460 = vmatpush1.msra.mxu0 %v2396
        %2461 = vmatprep.subr.mxu0 %v2400
        %2462 = vmatpush1.msra.mxu0 %v2399
        %2463 = vmatprep.subr.mxu0 %v2403
        %2464 = vmatpush1.msra.mxu0 %v2402
        %2465 = vmatprep.subr.mxu0 %v2406
        %2466 = vmatpush1.msra.mxu0 %v2405
        %2467 = vmatprep.subr.mxu0 %v2409
        %2468 = vmatpush1.msra.mxu0 %v2408
        %2469 = vmatprep.subr.mxu0 %v2412
        %2470 = vmatpush1.msra.mxu0 %v2411
        %2471 = vmatprep.subr.mxu0 %v2415
        %2472 = vmatpush1.msra.mxu0 %v2414
        %2473 = vmatprep.subr.mxu0 %v2418
        %2474 = vmatpush1.msra.mxu0 %v2417
        %2475 = vmatprep.subr.mxu0 %v2421
        %2476 = vmatpush1.msra.mxu0 %v2420
        %2477 = vmatprep.subr.mxu0 %v2424
        %2478 = vmatpush1.msra.mxu0 %v2423
        %2479 = vmatprep.subr.mxu0 %v2427
        %2480 = vmatpush1.msra.mxu0 %v2426
        %2481 = vmatprep.subr.mxu0 %v2430
        %2482 = vmatpush1.msra.mxu0 %v2429
        %2483 = vmatprep.subr.mxu0 %v2433
        %2484 = vmatpush1.msra.mxu0 %v2432
        %2485 = vmatprep.subr.mxu0 %v2436
        %2486 = vmatpush1.msra.mxu0 %v2435
        %2487 = vmatprep.subr.mxu0 0.0
        %2488 = vmatpush1.msra.mxu0 0.0
        %2489 = vmatprep.subr.mxu0 0.0
        %2490 = vmatpush1.msra.mxu0 0.0
        %2491 = vmatprep.subr.mxu0 0.0
        %2492 = vmatpush1.msra.mxu0 0.0
        %2493 = vmatprep.subr.mxu0 0.0
        %2494 = vmatpush1.msra.mxu0 0.0
        %2495 = vmatprep.subr.mxu0 0.0
        %2496 = vmatpush1.msra.mxu0 0.0
        %2497 = vmatprep.subr.mxu0 0.0
        %2498 = vmatpush1.msra.mxu0 0.0
        %2499 = vmatprep.subr.mxu0 0.0
        %2500 = vmatpush1.msra.mxu0 0.0
        %2501 = vmatprep.subr.mxu0 0.0
        %2502 = vmatpush1.msra.mxu0 0.0
        %2503 = vmatprep.subr.mxu0 0.0
        %2504 = vmatpush1.msra.mxu0 0.0
        %2505 = vmatprep.subr.mxu0 0.0
        %2506 = vmatpush1.msra.mxu0 0.0
        %2507 = vmatprep.subr.mxu0 0.0
        %2508 = vmatpush1.msra.mxu0 0.0
        %2509 = vmatprep.subr.mxu0 0.0
        %2510 = vmatpush1.msra.mxu0 0.0
        %2511 = vmatprep.subr.mxu0 0.0
        %2512 = vmatpush1.msra.mxu0 0.0
        %2513 = vmatprep.subr.mxu0 0.0
        %2514 = vmatpush1.msra.mxu0 0.0
        %2515 = vmatprep.subr.mxu0 0.0
        %2516 = vmatpush1.msra.mxu0 0.0
        %2517 = vmatprep.subr.mxu0 0.0
        %2518 = vmatpush1.msra.mxu0 0.0
        %2519 = vmatprep.mubr.f32.mxu0 0.0
        %2520 = vmatmul.mubr.f32.gmra.mrb[0].mxu0 %v2387
        %v2521 = vpop.f32.mrb[0].mxu0
        %v2522 = vadd.f32 %v2443, %v2521
        %v2523 = vpop.f32.mrb[0].mxu0
        %v2524 = vadd.f32 %v2447, %v2523
        %2525 = vdwg.mxu0
        %2526 = vmatprep.subr.mxu0 0.0
        %2527 = vmatpush1.msra.mxu0 %v2392
        %2528 = vmatprep.subr.mxu0 0.0
        %2529 = vmatpush1.msra.mxu0 %v2395
        %2530 = vmatprep.subr.mxu0 0.0
        %2531 = vmatpush1.msra.mxu0 %v2398
        %2532 = vmatprep.subr.mxu0 0.0
        %2533 = vmatpush1.msra.mxu0 %v2401
        %2534 = vmatprep.subr.mxu0 0.0
        %2535 = vmatpush1.msra.mxu0 %v2404
        %2536 = vmatprep.subr.mxu0 0.0
        %2537 = vmatpush1.msra.mxu0 %v2407
        %2538 = vmatprep.subr.mxu0 0.0
        %2539 = vmatpush1.msra.mxu0 %v2410
        %2540 = vmatprep.subr.mxu0 0.0
        %2541 = vmatpush1.msra.mxu0 %v2413
        %2542 = vmatprep.subr.mxu0 0.0
        %2543 = vmatpush1.msra.mxu0 %v2416
        %2544 = vmatprep.subr.mxu0 0.0
        %2545 = vmatpush1.msra.mxu0 %v2419
        %2546 = vmatprep.subr.mxu0 0.0
        %2547 = vmatpush1.msra.mxu0 %v2422
        %2548 = vmatprep.subr.mxu0 0.0
        %2549 = vmatpush1.msra.mxu0 %v2425
        %2550 = vmatprep.subr.mxu0 0.0
        %2551 = vmatpush1.msra.mxu0 %v2428
        %2552 = vmatprep.subr.mxu0 0.0
        %2553 = vmatpush1.msra.mxu0 %v2431
        %2554 = vmatprep.subr.mxu0 0.0
        %2555 = vmatpush1.msra.mxu0 %v2434
        %2556 = vmatprep.subr.mxu0 0.0
        %2557 = vmatpush1.msra.mxu0 %v2437
        %2558 = vmatprep.subr.mxu0 0.0
        %2559 = vmatpush1.msra.mxu0 0.0
        %2560 = vmatprep.subr.mxu0 0.0
        %2561 = vmatpush1.msra.mxu0 0.0
        %2562 = vmatprep.subr.mxu0 0.0
        %2563 = vmatpush1.msra.mxu0 0.0
        %2564 = vmatprep.subr.mxu0 0.0
        %2565 = vmatpush1.msra.mxu0 0.0
        %2566 = vmatprep.subr.mxu0 0.0
        %2567 = vmatpush1.msra.mxu0 0.0
        %2568 = vmatprep.subr.mxu0 0.0
        %2569 = vmatpush1.msra.mxu0 0.0
        %2570 = vmatprep.subr.mxu0 0.0
        %2571 = vmatpush1.msra.mxu0 0.0
        %2572 = vmatprep.subr.mxu0 0.0
        %2573 = vmatpush1.msra.mxu0 0.0
        %2574 = vmatprep.subr.mxu0 0.0
        %2575 = vmatpush1.msra.mxu0 0.0
        %2576 = vmatprep.subr.mxu0 0.0
        %2577 = vmatpush1.msra.mxu0 0.0
        %2578 = vmatprep.subr.mxu0 0.0
        %2579 = vmatpush1.msra.mxu0 0.0
        %2580 = vmatprep.subr.mxu0 0.0
        %2581 = vmatpush1.msra.mxu0 0.0
        %2582 = vmatprep.subr.mxu0 0.0
        %2583 = vmatpush1.msra.mxu0 0.0
        %2584 = vmatprep.subr.mxu0 0.0
        %2585 = vmatpush1.msra.mxu0 0.0
        %2586 = vmatprep.subr.mxu0 0.0
        %2587 = vmatpush1.msra.mxu0 0.0
        %2588 = vmatprep.subr.mxu0 0.0
        %2589 = vmatpush1.msra.mxu0 0.0
        %2590 = vmatprep.mubr.f32.mxu0 0.0
        %2591 = vmatmul.mubr.f32.gmra.mrb[0].mxu0 %v2387
        %v2592 = vpop.f32.mrb[0].mxu0
        %v2593 = vadd.f32 %v2451, %v2592
        %v2594 = vpop.f32.mrb[0].mxu0
        %2595 = vdwg.mxu0
        %s2596 = scalar_lea.vmem [#allocation2], 168
        %v2597 = vld [vmem:[%s2596] sm:$0xff]
        %v2598 = vld [vmem:[%s2596 + $0x8] sm:$0xff]
        %v2599 = vld [vmem:[%s2596 + $0x10] sm:$0xff]
        %v2600 = vadd.f32 %v2597, %v2522
        %v2601 = vxor.u32 %v2600, 2147483648
        %v2602 = vmul.f32 %v2601, 1.442695
        %v2603 = vpow.pop %v2602
        %v2604 = vadd.f32 %v2603, 1.0
        %v2605 = vrcp.pop %v2604
        %v2606 = vmul.f32 1.0, %v2605
        %v2607 = vadd.f32 %v2598, %v2524
        %v2608 = vxor.u32 %v2607, 2147483648
        %v2609 = vmul.f32 %v2608, 1.442695
        %v2610 = vpow.pop %v2609
        %v2611 = vadd.f32 %v2610, 1.0
        %v2612 = vrcp.pop %v2611
        %v2613 = vmul.f32 1.0, %v2612
        %v2614 = vmul.f32 %v2606, %v2593
        %v2615 = vadd.f32 %v2599, %v2614
        %v2616 = vtanh.pop %v2615
        %v2617 = vsub.f32 1.0, %v2613
        %v2618 = vmul.f32 %v2617, %v2616
        %v2619 = vmul.f32 %v2613, %v2387
        %v2620 = vadd.f32 %v2618, %v2619
        %s2621 = sadd.s32 %s921, 7
        %p2622 = scmp.lt.s32.totalorder %s2621, 12
        %s2623 = scalar_select %p2622, 1, 0
        %s2624 = scvt.s32.f32 %s2623
        %v2625 = vstv %s2624
        %v2626 = vmul.f32 %v2625, %v2620
        %s2627 = ssub.f32 1.0, %s2624
        %v2628 = vstv %s2627
        %v2629 = vmul.f32 %v2628, %v2387
        %v2630 = vadd.f32 %v2626, %v2629
        %s2631 = scalar_lea.vmem %s364, 56 [#allocation12]
        %2632 = vst [vmem:[%s2631] sm:$0xff] %v2630
        %2633 = vst [vmem:[#allocation3] sm:$0xff] %v2630
        %p2634 = scmp.eq.s32.totalorder %s33, 1
        // Predicated region
        $region65: #{tpu_custom_call.1} parent=43 // pred_check
          %p2635 = pneg %p2634
        $region66: #{tpu_custom_call.1} parent=43 // pred_check_branch
          %2637 = sbr.rel (%p2635) target = $region68
        $region67: #{tpu_custom_call.1} parent=43 // pred_region
          %v2638 = vld [vmem:[#allocation3] sm:$0xff]
          %2639 = vst [vmem:[#allocation13] sm:$0xff] %v2638
        $region68: #{tpu_custom_call.1} parent=43 // pred_fallthru
          _
        %s2640 = sand.u32 %s188, 1
        %s2641 = scalar_lea.sflag [#allocation6], %s2640
        %s2642 = sand.u32 %s188, 1
        %s2643 = smul.addr %s2642, 64
        %s2644 = scalar_lea.vmem [#allocation12], %s2643
        // Predicated region
        $region69: #{tpu_custom_call.1} parent=43 // pred_check
          %p2645 = pneg %p198
        $region70: #{tpu_custom_call.1} parent=43 // pred_check_branch
          %2647 = sbr.rel (%p2645) target = $region72
        $region71: #{tpu_custom_call.1} parent=43 // pred_region
          %s2648 = smul.u32 8, %s33
          %s2650 = ssub.s32 1024, 1024
          %2651 = vsyncadd %s2641, %s2650
          %s2652 = sadd.s32 %s32, %s2648
          %s2653 = smul.addr %s2652, 128
          %s2654 = scalar_lea.hbm %s6, %s2653
          %s2655 = sshll.u32 %s2644, 4
          %s2656 = int_to_ptr.vmem [resolvable:$true] %s2655
          %2661 = dma.vmem_to_hbm [thread:$0]  %s2656, 1024, %s2654, %s2641, 128, 128, 8
        $region72: #{tpu_custom_call.1} parent=43 // pred_fallthru
          _
        // Predicated region
        $region73: #{tpu_custom_call.1} parent=43 // pred_check
          %p2662 = pneg %p224
        $region74: #{tpu_custom_call.1} parent=43 // pred_check_branch
          %2664 = sbr.rel (%p2662) target = $region76
        $region75: #{tpu_custom_call.1} parent=43 // pred_region
          %s2666 = ssub.s32 128, 128
          %2667 = vsyncadd [#allocation14], %s2666
          %s2668 = smul.addr %s32, 128
          %s2669 = scalar_lea.hbm %s7, %s2668
          %s2671 = sshll.u32 [#allocation13], 4
          %s2672 = int_to_ptr.vmem [resolvable:$true] %s2671
          %2674 = dma.vmem_to_hbm [thread:$0]  %s2672, 128, %s2669, [#allocation14]
        $region76: #{tpu_custom_call.1} parent=43 // pred_fallthru
          _
        // Predicated region
        $region77: #{tpu_custom_call.1} parent=43 // pred_check
          %p2675 = pneg %p224
        $region78: #{tpu_custom_call.1} parent=43 // pred_check_branch
          %2677 = sbr.rel (%p2675) target = $region80
        $region79: #{tpu_custom_call.1} parent=43 // pred_region
          %2678 = dma.done [#allocation14], 128
        $region80: #{tpu_custom_call.1} parent=43 // pred_fallthru
          _
      $region44: #{tpu_custom_call.1} parent=5 // pred_fallthru
        _
      %p2679 = scmp.le.s32.totalorder 2, %s23
      // Predicated region
      $region81: #{tpu_custom_call.1} parent=5 // pred_check
        %p2680 = pneg %p2679
      $region82: #{tpu_custom_call.1} parent=5 // pred_check_branch
        %2682 = sbr.rel (%p2680) target = $region84
      $region83: #{tpu_custom_call.1} parent=5 // pred_region
        %s2683 = ssub.s32 %s23, 2
        // Predicated region
        $region85: #{tpu_custom_call.1} parent=83 // pred_check
          %p2684 = pneg %p204
        $region86: #{tpu_custom_call.1} parent=83 // pred_check_branch
          %2686 = sbr.rel (%p2684) target = $region88
        $region87: #{tpu_custom_call.1} parent=83 // pred_region
          %s2687 = sand.u32 %s189, 1
          %s2688 = scalar_lea.sflag [#allocation6], %s2687
          %s2689 = sand.u32 %s189, 1
          %s2690 = smul.addr %s2689, 64
          %s2691 = scalar_lea.vmem [#allocation12], %s2690
          %2692 = dma.done %s2688, 1024
        $region88: #{tpu_custom_call.1} parent=83 // pred_fallthru
          _
      $region84: #{tpu_custom_call.1} parent=5 // pred_fallthru
        _
    $region6: #{tpu_custom_call.1} parent=1 // loop_footer
      %s27 = sadd.s32 1, %s23
    $region7: #{tpu_custom_call.1} parent=1 // loop_footer_branch
      %22 = sbr.rel target = $region3
    $region8: #{tpu_custom_call.1} parent=1 // loop_exit
      _
    %2693 = vsyncpa [#allocation5], 1
    %s2694 = scalar_lea.sflag [#allocation5], 1
    %2695 = vsyncpa %s2694, 1
    %2696 = vsyncpa [#allocation8], 1
    %2697 = vsyncpa [#allocation11], 1
    %2698 = vsyncpa [#allocation6], 1
    %s2699 = scalar_lea.sflag [#allocation6], 1
    %2700 = vsyncpa %s2699, 1
    %2701 = vsyncpa [#allocation14], 1

</llo_original>
